<compile_context>
chip_gen: v7x
topology: tpu7x:2x2x1
jax: 0.10.0
libtpu: 0.0.40
codegen_flags: <defaults>
</compile_context>

<pallas_src>
import jax
import jax.numpy as jnp
from jax.experimental import pallas as pl
from jax.experimental.pallas import tpu as pltpu

_ACC_VREG_BYTES = 64 * 1024  # keep register accumulator only below this


def _round_up(n, m):
    return ((n + m - 1) // m) * m


def _vmem_capacity_bytes():
    """Physical VMEM capacity for this generation (fallback: 64 MiB = v7x)."""
    try:
        info = pltpu.get_tpu_info()
        cap = getattr(info, "vmem_capacity_bytes", None)
        if cap:
            return int(cap)
    except Exception:
        pass
    return 64 * 1024 * 1024


def _bilinear_matrix(out_size, in_size):
    """PyTorch F.interpolate(mode='bilinear', align_corners=False) weights as a
    dense [out_size, in_size] interpolation matrix (half-pixel centers,
    source index clamped at 0)."""
    scale = in_size / out_size
    o = jnp.arange(out_size, dtype=jnp.float32)
    src = jnp.maximum((o + 0.5) * scale - 0.5, 0.0)
    i0 = jnp.minimum(jnp.floor(src).astype(jnp.int32), in_size - 1)
    i1 = jnp.minimum(i0 + 1, in_size - 1)
    frac = src - i0.astype(jnp.float32)
    return (jax.nn.one_hot(i0, in_size, dtype=jnp.float32) * (1.0 - frac)[:, None]
            + jax.nn.one_hot(i1, in_size, dtype=jnp.float32) * frac[:, None])


def _select_tiles(B, H, footprint_fn, budget):
    """Pick (TB, TH): largest tiles fitting the VMEM budget, preferring >= 2
    grid steps (megacore) and then the fewest steps."""
    th_cands = sorted({H} | {d for d in range(8, H, 8) if H % d == 0},
                      reverse=True)
    tb_cands = sorted({d for d in range(1, B + 1) if B % d == 0}, reverse=True)
    feasible = []
    for tb in tb_cands:
        for th in th_cands:
            fp = footprint_fn(tb, th)
            if fp <= budget:
                steps = (B // tb) * (H // th)
                feasible.append((steps, -(tb * th), tb, th, fp))
    if not feasible:  # degenerate: even the smallest tile overshoots budget
        tb, th = 1, min(th_cands)
        return tb, th, footprint_fn(tb, th)
    multi = [f for f in feasible if f[0] >= 2]
    pool = multi if multi else feasible
    pool.sort(key=lambda f: (f[0], f[1]))
    _, _, tb, th, fp = pool[0]
    return tb, th, fp


def _make_kernel(map_num, tb, th, n_row_tiles, weights, inv_wsum, magnitude,
                 do_relu, compute_dtype, use_scratch):
    def kernel(*refs):
        map_refs = refs[:map_num]
        ah_refs = refs[map_num:2 * map_num]
        awt_refs = refs[2 * map_num:3 * map_num]
        cm_ref = refs[3 * map_num]
        ww_ref = refs[3 * map_num + 1]
        acc_ref = refs[3 * map_num + 2] if use_scratch else None

        if n_row_tiles > 1:
            row0 = pl.multiple_of(pl.program_id(1) * th, 8)

        for b in range(tb):                         # static unroll over batch block
            acc = None
            for i in range(map_num):                # static unroll over maps
                x = map_refs[i][b, :, :].astype(compute_dtype)      # (hp_i, wp_i)
                if n_row_tiles > 1:
                    ah = ah_refs[i][pl.ds(row0, th), :]             # (TH, hp_i)
                else:
                    ah = ah_refs[i][...]
                awt = awt_refs[i][...]                              # (wp_i, W)
                t = jnp.dot(ah, x, preferred_element_type=jnp.float32)
                r = jnp.dot(t.astype(compute_dtype), awt,
                            preferred_element_type=jnp.float32)     # (TH, W) f32
                if magnitude:
                    r = r * r
                wr = jnp.float32(weights[i]) * r
                if use_scratch:
                    if i == 0:
                        acc_ref[...] = wr
                    else:
                        acc_ref[...] += wr
                else:
                    acc = wr if i == 0 else acc + wr
                out_i = jnp.maximum(r, 0.0) if do_relu else r
                ww_ref[b, i, :, :] = out_i.astype(ww_ref.dtype)
            cm = (acc_ref[...] if use_scratch else acc) * jnp.float32(inv_wsum)
            if do_relu:
                cm = jnp.maximum(cm, 0.0)
            cm_ref[b, :, :] = cm.astype(cm_ref.dtype)

    return kernel


def combine_saliency_maps(smaps, output_size, weights=None, magnitude=False,
                          do_relu=False):
    """smaps: list of [B, h_i, w_i] arrays -> (cm [B,H,W], ww [B,N,H,W])."""
    assert isinstance(smaps, (list, tuple)) and len(smaps) > 0
    map_num = len(smaps)
    if weights is None:
        weights = [1.0] * map_num
    elif len(weights) == 1:
        weights = [float(weights[0])] * map_num
    assert len(weights) == map_num
    weights = [float(w) for w in weights]
    weight_sum = float(sum(weights))

    H, W = int(output_size[0]), int(output_size[1])
    B = int(smaps[0].shape[0])
    dtype = smaps[0].dtype
    in_itemsize = jnp.dtype(dtype).itemsize
    compute_dtype = jnp.bfloat16 if dtype == jnp.bfloat16 else jnp.float32
    a_itemsize = jnp.dtype(compute_dtype).itemsize

    # Precompute interpolation matrices; pad h_i / w_i to multiples of 8 with
    # zeros (exact: zero rows/cols contribute nothing to the matmuls).
    padded_maps, ahs, awts, padded_hw = [], [], [], []
    for m in smaps:
        h_i, w_i = int(m.shape[1]), int(m.shape[2])
        hp, wp = _round_up(h_i, 8), _round_up(w_i, 8)
        ah = _bilinear_matrix(H, h_i)            # (H, h_i)
        awt = _bilinear_matrix(W, w_i).T         # (w_i, W)
        if hp != h_i or wp != w_i:
            m = jnp.pad(m, ((0, 0), (0, hp - h_i), (0, wp - w_i)))
            ah = jnp.pad(ah, ((0, 0), (0, hp - h_i)))
            awt = jnp.pad(awt, ((0, wp - w_i), (0, 0)))
        padded_maps.append(m)
        ahs.append(ah.astype(compute_dtype))
        awts.append(awt.astype(compute_dtype))
        padded_hw.append((hp, wp))

    # --- VMEM-budget-based tile selection ---
    vmem_cap = _vmem_capacity_bytes()
    budget = max(vmem_cap // 2, 8 << 20)
    resident_bytes = 2 * sum(H * hp * a_itemsize + wp * W * a_itemsize
                             for hp, wp in padded_hw)

    def footprint(tb, th):
        maps_b = 2 * tb * sum(hp * wp for hp, wp in padded_hw) * in_itemsize
        out_b = 2 * tb * (map_num + 1) * th * W * in_itemsize   # double-buffered
        acc_b = th * W * 4 if th * W * 4 > _ACC_VREG_BYTES else 0
        return maps_b + out_b + acc_b + resident_bytes

    tb, th, fp = _select_tiles(B, H, footprint, budget)
    n_b_tiles = B // tb
    n_row_tiles = H // th
    use_scratch = th * W * 4 > _ACC_VREG_BYTES
    vmem_limit = int(min(vmem_cap, max(fp + (8 << 20), 32 << 20)))

    # --- specs ---
    in_specs = []
    # Map inputs: (TB, hp, wp) block per batch block, invariant along row axis.
    for (hp, wp) in padded_hw:
        in_specs.append(pl.BlockSpec((tb, hp, wp), lambda b, t: (b, 0, 0)))
    # A_h matrices: whole, block-index invariant (resident); sliced in-kernel.
    for (hp, wp) in padded_hw:
        in_specs.append(pl.BlockSpec((H, hp), lambda b, t: (0, 0)))
    # A_w^T matrices: whole, block-index invariant (resident).
    for (hp, wp) in padded_hw:
        in_specs.append(pl.BlockSpec((wp, W), lambda b, t: (0, 0)))

    out_specs = (
        pl.BlockSpec((tb, th, W), lambda b, t: (b, t, 0)),
        pl.BlockSpec((tb, map_num, th, W), lambda b, t: (b, 0, t, 0)),
    )
    out_shape = (
        jax.ShapeDtypeStruct((B, H, W), dtype),
        jax.ShapeDtypeStruct((B, map_num, H, W), dtype),
    )
    scratch_shapes = [pltpu.VMEM((th, W), jnp.float32)] if use_scratch else []

    # Advisory cost estimate for XLA's scheduler.
    flops = 0
    bytes_accessed = B * (map_num + 1) * H * W * in_itemsize
    for (hp, wp) in padded_hw:
        flops += 2 * B * (H * hp * wp + H * W * wp)
        bytes_accessed += (B * hp * wp * in_itemsize
                           + (H * hp + W * wp) * a_itemsize)
    cost = pl.CostEstimate(flops=flops, transcendentals=0,
                           bytes_accessed=bytes_accessed)

    kernel = _make_kernel(map_num, tb, th, n_row_tiles, weights,
                          1.0 / weight_sum, bool(magnitude), bool(do_relu),
                          compute_dtype, use_scratch)

    cm, ww = pl.pallas_call(
        kernel,
        out_shape=out_shape,
        grid=(n_b_tiles, n_row_tiles),
        in_specs=in_specs,
        out_specs=out_specs,
        scratch_shapes=scratch_shapes,
        compiler_params=pltpu.CompilerParams(
            dimension_semantics=("parallel", "parallel"),
            vmem_limit_bytes=vmem_limit),
        cost_estimate=cost,
    )(*padded_maps, *ahs, *awts)

    return cm, ww


# ----------------------- pure-JAX reference (gather form) -------------------

def _ref_resize_bilinear(x, out_h, out_w):
    """Plain-JAX bilinear resize matching PyTorch align_corners=False,
    written with gathers (independent of the matrix formulation above)."""
    _, h, w = x.shape

    def coords(out_size, in_size):
        scale = in_size / out_size
        o = jnp.arange(out_size, dtype=jnp.float32)
        src = jnp.maximum((o + 0.5) * scale - 0.5, 0.0)
        i0 = jnp.minimum(jnp.floor(src).astype(jnp.int32), in_size - 1)
        i1 = jnp.minimum(i0 + 1, in_size - 1)
        return i0, i1, src - i0.astype(jnp.float32)

    r0, r1, fr = coords(out_h, h)
    c0, c1, fc = coords(out_w, w)
    x00 = x[:, r0][:, :, c0]
    x01 = x[:, r0][:, :, c1]
    x10 = x[:, r1][:, :, c0]
    x11 = x[:, r1][:, :, c1]
    top = x00 * (1.0 - fc)[None, None, :] + x01 * fc[None, None, :]
    bot = x10 * (1.0 - fc)[None, None, :] + x11 * fc[None, None, :]
    return top * (1.0 - fr)[None, :, None] + bot * fr[None, :, None]


def _reference(smaps, output_size, weights, magnitude, do_relu):
    H, W = output_size
    weight_sum = float(sum(weights))
    cm = jnp.zeros((smaps[0].shape[0], H, W), jnp.float32)
    ww = []
    for i, m in enumerate(smaps):
        r = _ref_resize_bilinear(m.astype(jnp.float32), H, W)
        if magnitude:
            r = r * r
        ww.append(r)
        cm = cm + r * float(weights[i])
    cm = cm / weight_sum
    ww = jnp.stack(ww, axis=1)
    if do_relu:
        cm = jnp.maximum(cm, 0.0)
        ww = jnp.maximum(ww, 0.0)
    return cm.astype(smaps[0].dtype), ww.astype(smaps[0].dtype)


if __name__ == "__main__":
    key = jax.random.PRNGKey(0)

    # ---- Config 1: small outputs (32x32), 5 maps ----
    B = 2
    output_size = [32, 32]
    map_sizes = [(7, 7), (8, 8), (14, 14), (16, 16), (28, 28)]
    weights = [1.0, 2.0, 3.0, 4.0, 5.0]

    smaps = []
    for (h, w) in map_sizes:
        key, sub = jax.random.split(key)
        smaps.append(jax.random.normal(sub, (B, h, w), dtype=jnp.float32))

    cm, ww = combine_saliency_maps(smaps, output_size, weights=weights)
    jax.block_until_ready((cm, ww))
    cm_ref, ww_ref = _reference(smaps, output_size, weights, False, False)
    assert cm.shape == (B, output_size[0], output_size[1])
    assert ww.shape == (B, len(map_sizes), output_size[0], output_size[1])
    assert jnp.allclose(cm, cm_ref, atol=1e-5, rtol=1e-5)
    assert jnp.allclose(ww, ww_ref, atol=1e-5, rtol=1e-5)

    # magnitude=True, do_relu=True branch.
    cm2, ww2 = combine_saliency_maps(smaps, output_size, weights=weights,
                                     magnitude=True, do_relu=True)
    jax.block_until_ready((cm2, ww2))
    cm2_ref, ww2_ref = _reference(smaps, output_size, weights, True, True)
    assert jnp.allclose(cm2, cm2_ref, atol=1e-5, rtol=1e-5)
    assert jnp.allclose(ww2, ww2_ref, atol=1e-5, rtol=1e-5)

    # ---- Config 2: module-default 224x224 output (exercises VMEM-scratch
    # accumulator, resident-A_h dynamic row slicing and batch blocking) ----
    output_size2 = [224, 224]
    map_sizes2 = [(7, 7), (14, 14), (28, 28)]
    weights2 = [1.0, 2.0, 3.0]
    smaps2 = []
    for (h, w) in map_sizes2:
        key, sub = jax.random.split(key)
        smaps2.append(jax.random.normal(sub, (B, h, w), dtype=jnp.float32))

    cm3, ww3 = combine_saliency_maps(smaps2, output_size2, weights=weights2)
    jax.block_until_ready((cm3, ww3))
    cm3_ref, ww3_ref = _reference(smaps2, output_size2, weights2, False, False)
    assert cm3.shape == (B, 224, 224)
    assert ww3.shape == (B, len(map_sizes2), 224, 224)
    assert jnp.allclose(cm3, cm3_ref, atol=1e-4, rtol=1e-4)
    assert jnp.allclose(ww3, ww3_ref, atol=1e-4, rtol=1e-4)

    print("KERNEL_OK")
</pallas_src>

<mosaic_0001>
module attributes {stable_mosaic.version = 11 : i64} {
  func.func @kernel(%arg0: i32, %arg1: i32, %arg2: memref<2x8x8xf32, #tpu.memory_space<vmem>>, %arg3: memref<2x8x8xf32, #tpu.memory_space<vmem>>, %arg4: memref<2x16x16xf32, #tpu.memory_space<vmem>>, %arg5: memref<2x16x16xf32, #tpu.memory_space<vmem>>, %arg6: memref<2x32x32xf32, #tpu.memory_space<vmem>>, %arg7: memref<32x8xf32, #tpu.memory_space<vmem>>, %arg8: memref<32x8xf32, #tpu.memory_space<vmem>>, %arg9: memref<32x16xf32, #tpu.memory_space<vmem>>, %arg10: memref<32x16xf32, #tpu.memory_space<vmem>>, %arg11: memref<32x32xf32, #tpu.memory_space<vmem>>, %arg12: memref<8x32xf32, #tpu.memory_space<vmem>>, %arg13: memref<8x32xf32, #tpu.memory_space<vmem>>, %arg14: memref<16x32xf32, #tpu.memory_space<vmem>>, %arg15: memref<16x32xf32, #tpu.memory_space<vmem>>, %arg16: memref<32x32xf32, #tpu.memory_space<vmem>>, %arg17: memref<2x16x32xf32, #tpu.memory_space<vmem>>, %arg18: memref<2x5x16x32xf32, #tpu.memory_space<vmem>>) attributes {dimension_semantics = [#tpu.dimension_semantics<parallel>, #tpu.dimension_semantics<parallel>], iteration_bounds = array<i64: 1, 2>, scalar_prefetch = 0 : i64, scratch_operands = 0 : i64, tpu.core_type = #tpu.core_type<tc>, window_params = [{transform_indices = @transform_0, window_bounds = array<i64: 2, 8, 8>}, {transform_indices = @transform_1, window_bounds = array<i64: 2, 8, 8>}, {transform_indices = @transform_2, window_bounds = array<i64: 2, 16, 16>}, {transform_indices = @transform_3, window_bounds = array<i64: 2, 16, 16>}, {transform_indices = @transform_4, window_bounds = array<i64: 2, 32, 32>}, {pipeline_mode = #tpu.pipeline_mode<synchronous>, transform_indices = @transform_5, window_bounds = array<i64: 32, 8>}, {pipeline_mode = #tpu.pipeline_mode<synchronous>, transform_indices = @transform_6, window_bounds = array<i64: 32, 8>}, {pipeline_mode = #tpu.pipeline_mode<synchronous>, transform_indices = @transform_7, window_bounds = array<i64: 32, 16>}, {pipeline_mode = #tpu.pipeline_mode<synchronous>, transform_indices = @transform_8, window_bounds = array<i64: 32, 16>}, {pipeline_mode = #tpu.pipeline_mode<synchronous>, transform_indices = @transform_9, window_bounds = array<i64: 32, 32>}, {pipeline_mode = #tpu.pipeline_mode<synchronous>, transform_indices = @transform_10, window_bounds = array<i64: 8, 32>}, {pipeline_mode = #tpu.pipeline_mode<synchronous>, transform_indices = @transform_11, window_bounds = array<i64: 8, 32>}, {pipeline_mode = #tpu.pipeline_mode<synchronous>, transform_indices = @transform_12, window_bounds = array<i64: 16, 32>}, {pipeline_mode = #tpu.pipeline_mode<synchronous>, transform_indices = @transform_13, window_bounds = array<i64: 16, 32>}, {pipeline_mode = #tpu.pipeline_mode<synchronous>, transform_indices = @transform_14, window_bounds = array<i64: 32, 32>}, {transform_indices = @transform_15, window_bounds = array<i64: 2, 16, 32>}, {transform_indices = @transform_16, window_bounds = array<i64: 2, 5, 16, 32>}]} {
    %c16_i32 = arith.constant 16 : i32
    %0 = arith.muli %arg1, %c16_i32 : i32
    %1 = tpu.assume_multiple %0, 8 : i32
    %c0 = arith.constant 0 : index
    %c0_0 = arith.constant 0 : index
    %c0_1 = arith.constant 0 : index
    %2 = vector.load %arg2[%c0, %c0_0, %c0_1] : memref<2x8x8xf32, #tpu.memory_space<vmem>>, vector<1x8x8xf32>
    %3 = vector.shape_cast %2 : vector<1x8x8xf32> to vector<8x8xf32>
    %4 = arith.index_cast %1 : i32 to index
    %c0_2 = arith.constant 0 : index
    %5 = vector.load %arg7[%4, %c0_2] : memref<32x8xf32, #tpu.memory_space<vmem>>, vector<16x8xf32>
    %c0_3 = arith.constant 0 : index
    %c0_4 = arith.constant 0 : index
    %6 = vector.load %arg12[%c0_3, %c0_4] : memref<8x32xf32, #tpu.memory_space<vmem>>, vector<8x32xf32>
    %cst = arith.constant dense<0.000000e+00> : vector<16x8xf32>
    %7 = tpu.matmul %5, %3, %cst {dimension_numbers = #tpu.dot_dimension_numbers<[1], [0], [0], [1], [0, 0, 1, 1], [], []>} : vector<16x8xf32>, vector<8x8xf32>, vector<16x8xf32> -> vector<16x8xf32>
    %cst_5 = arith.constant dense<0.000000e+00> : vector<16x32xf32>
    %8 = tpu.matmul %7, %6, %cst_5 {dimension_numbers = #tpu.dot_dimension_numbers<[1], [0], [0], [1], [0, 0, 1, 1], [], []>} : vector<16x8xf32>, vector<8x32xf32>, vector<16x32xf32> -> vector<16x32xf32>
    %cst_6 = arith.constant 1.000000e+00 : f32
    %9 = vector.broadcast %cst_6 : f32 to vector<16x32xf32>
    %10 = arith.mulf %9, %8 : vector<16x32xf32>
    %c0_7 = arith.constant 0 : index
    %c0_8 = arith.constant 0 : index
    %c0_9 = arith.constant 0 : index
    %c0_10 = arith.constant 0 : index
    %11 = vector.load %arg18[%c0_7, %c0_8, %c0_9, %c0_10] : memref<2x5x16x32xf32, #tpu.memory_space<vmem>>, vector<1x1x16x32xf32>
    %12 = vector.shape_cast %11 : vector<1x1x16x32xf32> to vector<16x32xf32>
    %13 = vector.shape_cast %8 : vector<16x32xf32> to vector<1x1x16x32xf32>
    tpu.vector_store %arg18[%c0_7, %c0_8, %c0_9, %c0_10], %13 {strides = array<i32>} : memref<2x5x16x32xf32, #tpu.memory_space<vmem>>, vector<1x1x16x32xf32>,
    %c0_11 = arith.constant 0 : index
    %c0_12 = arith.constant 0 : index
    %c0_13 = arith.constant 0 : index
    %14 = vector.load %arg3[%c0_11, %c0_12, %c0_13] : memref<2x8x8xf32, #tpu.memory_space<vmem>>, vector<1x8x8xf32>
    %15 = vector.shape_cast %14 : vector<1x8x8xf32> to vector<8x8xf32>
    %16 = arith.index_cast %1 : i32 to index
    %c0_14 = arith.constant 0 : index
    %17 = vector.load %arg8[%16, %c0_14] : memref<32x8xf32, #tpu.memory_space<vmem>>, vector<16x8xf32>
    %c0_15 = arith.constant 0 : index
    %c0_16 = arith.constant 0 : index
    %18 = vector.load %arg13[%c0_15, %c0_16] : memref<8x32xf32, #tpu.memory_space<vmem>>, vector<8x32xf32>
    %cst_17 = arith.constant dense<0.000000e+00> : vector<16x8xf32>
    %19 = tpu.matmul %17, %15, %cst_17 {dimension_numbers = #tpu.dot_dimension_numbers<[1], [0], [0], [1], [0, 0, 1, 1], [], []>} : vector<16x8xf32>, vector<8x8xf32>, vector<16x8xf32> -> vector<16x8xf32>
    %cst_18 = arith.constant dense<0.000000e+00> : vector<16x32xf32>
    %20 = tpu.matmul %19, %18, %cst_18 {dimension_numbers = #tpu.dot_dimension_numbers<[1], [0], [0], [1], [0, 0, 1, 1], [], []>} : vector<16x8xf32>, vector<8x32xf32>, vector<16x32xf32> -> vector<16x32xf32>
    %cst_19 = arith.constant 2.000000e+00 : f32
    %21 = vector.broadcast %cst_19 : f32 to vector<16x32xf32>
    %22 = arith.mulf %21, %20 : vector<16x32xf32>
    %23 = arith.addf %10, %22 : vector<16x32xf32>
    %c0_20 = arith.constant 0 : index
    %c1 = arith.constant 1 : index
    %c0_21 = arith.constant 0 : index
    %c0_22 = arith.constant 0 : index
    %24 = vector.load %arg18[%c0_20, %c1, %c0_21, %c0_22] : memref<2x5x16x32xf32, #tpu.memory_space<vmem>>, vector<1x1x16x32xf32>
    %25 = vector.shape_cast %24 : vector<1x1x16x32xf32> to vector<16x32xf32>
    %26 = vector.shape_cast %20 : vector<16x32xf32> to vector<1x1x16x32xf32>
    tpu.vector_store %arg18[%c0_20, %c1, %c0_21, %c0_22], %26 {strides = array<i32>} : memref<2x5x16x32xf32, #tpu.memory_space<vmem>>, vector<1x1x16x32xf32>,
    %c0_23 = arith.constant 0 : index
    %c0_24 = arith.constant 0 : index
    %c0_25 = arith.constant 0 : index
    %27 = vector.load %arg4[%c0_23, %c0_24, %c0_25] : memref<2x16x16xf32, #tpu.memory_space<vmem>>, vector<1x16x16xf32>
    %28 = vector.shape_cast %27 : vector<1x16x16xf32> to vector<16x16xf32>
    %29 = arith.index_cast %1 : i32 to index
    %c0_26 = arith.constant 0 : index
    %30 = vector.load %arg9[%29, %c0_26] : memref<32x16xf32, #tpu.memory_space<vmem>>, vector<16x16xf32>
    %c0_27 = arith.constant 0 : index
    %c0_28 = arith.constant 0 : index
    %31 = vector.load %arg14[%c0_27, %c0_28] : memref<16x32xf32, #tpu.memory_space<vmem>>, vector<16x32xf32>
    %cst_29 = arith.constant dense<0.000000e+00> : vector<16x16xf32>
    %32 = tpu.matmul %30, %28, %cst_29 {dimension_numbers = #tpu.dot_dimension_numbers<[1], [0], [0], [1], [0, 0, 1, 1], [], []>} : vector<16x16xf32>, vector<16x16xf32>, vector<16x16xf32> -> vector<16x16xf32>
    %cst_30 = arith.constant dense<0.000000e+00> : vector<16x32xf32>
    %33 = tpu.matmul %32, %31, %cst_30 {dimension_numbers = #tpu.dot_dimension_numbers<[1], [0], [0], [1], [0, 0, 1, 1], [], []>} : vector<16x16xf32>, vector<16x32xf32>, vector<16x32xf32> -> vector<16x32xf32>
    %cst_31 = arith.constant 3.000000e+00 : f32
    %34 = vector.broadcast %cst_31 : f32 to vector<16x32xf32>
    %35 = arith.mulf %34, %33 : vector<16x32xf32>
    %36 = arith.addf %23, %35 : vector<16x32xf32>
    %c0_32 = arith.constant 0 : index
    %c2 = arith.constant 2 : index
    %c0_33 = arith.constant 0 : index
    %c0_34 = arith.constant 0 : index
    %37 = vector.load %arg18[%c0_32, %c2, %c0_33, %c0_34] : memref<2x5x16x32xf32, #tpu.memory_space<vmem>>, vector<1x1x16x32xf32>
    %38 = vector.shape_cast %37 : vector<1x1x16x32xf32> to vector<16x32xf32>
    %39 = vector.shape_cast %33 : vector<16x32xf32> to vector<1x1x16x32xf32>
    tpu.vector_store %arg18[%c0_32, %c2, %c0_33, %c0_34], %39 {strides = array<i32>} : memref<2x5x16x32xf32, #tpu.memory_space<vmem>>, vector<1x1x16x32xf32>,
    %c0_35 = arith.constant 0 : index
    %c0_36 = arith.constant 0 : index
    %c0_37 = arith.constant 0 : index
    %40 = vector.load %arg5[%c0_35, %c0_36, %c0_37] : memref<2x16x16xf32, #tpu.memory_space<vmem>>, vector<1x16x16xf32>
    %41 = vector.shape_cast %40 : vector<1x16x16xf32> to vector<16x16xf32>
    %42 = arith.index_cast %1 : i32 to index
    %c0_38 = arith.constant 0 : index
    %43 = vector.load %arg10[%42, %c0_38] : memref<32x16xf32, #tpu.memory_space<vmem>>, vector<16x16xf32>
    %c0_39 = arith.constant 0 : index
    %c0_40 = arith.constant 0 : index
    %44 = vector.load %arg15[%c0_39, %c0_40] : memref<16x32xf32, #tpu.memory_space<vmem>>, vector<16x32xf32>
    %cst_41 = arith.constant dense<0.000000e+00> : vector<16x16xf32>
    %45 = tpu.matmul %43, %41, %cst_41 {dimension_numbers = #tpu.dot_dimension_numbers<[1], [0], [0], [1], [0, 0, 1, 1], [], []>} : vector<16x16xf32>, vector<16x16xf32>, vector<16x16xf32> -> vector<16x16xf32>
    %cst_42 = arith.constant dense<0.000000e+00> : vector<16x32xf32>
    %46 = tpu.matmul %45, %44, %cst_42 {dimension_numbers = #tpu.dot_dimension_numbers<[1], [0], [0], [1], [0, 0, 1, 1], [], []>} : vector<16x16xf32>, vector<16x32xf32>, vector<16x32xf32> -> vector<16x32xf32>
    %cst_43 = arith.constant 4.000000e+00 : f32
    %47 = vector.broadcast %cst_43 : f32 to vector<16x32xf32>
    %48 = arith.mulf %47, %46 : vector<16x32xf32>
    %49 = arith.addf %36, %48 : vector<16x32xf32>
    %c0_44 = arith.constant 0 : index
    %c3 = arith.constant 3 : index
    %c0_45 = arith.constant 0 : index
    %c0_46 = arith.constant 0 : index
    %50 = vector.load %arg18[%c0_44, %c3, %c0_45, %c0_46] : memref<2x5x16x32xf32, #tpu.memory_space<vmem>>, vector<1x1x16x32xf32>
    %51 = vector.shape_cast %50 : vector<1x1x16x32xf32> to vector<16x32xf32>
    %52 = vector.shape_cast %46 : vector<16x32xf32> to vector<1x1x16x32xf32>
    tpu.vector_store %arg18[%c0_44, %c3, %c0_45, %c0_46], %52 {strides = array<i32>} : memref<2x5x16x32xf32, #tpu.memory_space<vmem>>, vector<1x1x16x32xf32>,
    %c0_47 = arith.constant 0 : index
    %c0_48 = arith.constant 0 : index
    %c0_49 = arith.constant 0 : index
    %53 = vector.load %arg6[%c0_47, %c0_48, %c0_49] : memref<2x32x32xf32, #tpu.memory_space<vmem>>, vector<1x32x32xf32>
    %54 = vector.shape_cast %53 : vector<1x32x32xf32> to vector<32x32xf32>
    %55 = arith.index_cast %1 : i32 to index
    %c0_50 = arith.constant 0 : index
    %56 = vector.load %arg11[%55, %c0_50] : memref<32x32xf32, #tpu.memory_space<vmem>>, vector<16x32xf32>
    %c0_51 = arith.constant 0 : index
    %c0_52 = arith.constant 0 : index
    %57 = vector.load %arg16[%c0_51, %c0_52] : memref<32x32xf32, #tpu.memory_space<vmem>>, vector<32x32xf32>
    %cst_53 = arith.constant dense<0.000000e+00> : vector<16x32xf32>
    %58 = tpu.matmul %56, %54, %cst_53 {dimension_numbers = #tpu.dot_dimension_numbers<[1], [0], [0], [1], [0, 0, 1, 1], [], []>} : vector<16x32xf32>, vector<32x32xf32>, vector<16x32xf32> -> vector<16x32xf32>
    %cst_54 = arith.constant dense<0.000000e+00> : vector<16x32xf32>
    %59 = tpu.matmul %58, %57, %cst_54 {dimension_numbers = #tpu.dot_dimension_numbers<[1], [0], [0], [1], [0, 0, 1, 1], [], []>} : vector<16x32xf32>, vector<32x32xf32>, vector<16x32xf32> -> vector<16x32xf32>
    %cst_55 = arith.constant 5.000000e+00 : f32
    %60 = vector.broadcast %cst_55 : f32 to vector<16x32xf32>
    %61 = arith.mulf %60, %59 : vector<16x32xf32>
    %62 = arith.addf %49, %61 : vector<16x32xf32>
    %c0_56 = arith.constant 0 : index
    %c4 = arith.constant 4 : index
    %c0_57 = arith.constant 0 : index
    %c0_58 = arith.constant 0 : index
    %63 = vector.load %arg18[%c0_56, %c4, %c0_57, %c0_58] : memref<2x5x16x32xf32, #tpu.memory_space<vmem>>, vector<1x1x16x32xf32>
    %64 = vector.shape_cast %63 : vector<1x1x16x32xf32> to vector<16x32xf32>
    %65 = vector.shape_cast %59 : vector<16x32xf32> to vector<1x1x16x32xf32>
    tpu.vector_store %arg18[%c0_56, %c4, %c0_57, %c0_58], %65 {strides = array<i32>} : memref<2x5x16x32xf32, #tpu.memory_space<vmem>>, vector<1x1x16x32xf32>,
    %cst_59 = arith.constant 0.0666666701 : f32
    %66 = vector.broadcast %cst_59 : f32 to vector<16x32xf32>
    %67 = arith.mulf %62, %66 : vector<16x32xf32>
    %c0_60 = arith.constant 0 : index
    %c0_61 = arith.constant 0 : index
    %c0_62 = arith.constant 0 : index
    %68 = vector.load %arg17[%c0_60, %c0_61, %c0_62] : memref<2x16x32xf32, #tpu.memory_space<vmem>>, vector<1x16x32xf32>
    %69 = vector.shape_cast %68 : vector<1x16x32xf32> to vector<16x32xf32>
    %70 = vector.shape_cast %67 : vector<16x32xf32> to vector<1x16x32xf32>
    tpu.vector_store %arg17[%c0_60, %c0_61, %c0_62], %70 {strides = array<i32>} : memref<2x16x32xf32, #tpu.memory_space<vmem>>, vector<1x16x32xf32>,
    %c1_63 = arith.constant 1 : index
    %c0_64 = arith.constant 0 : index
    %c0_65 = arith.constant 0 : index
    %71 = vector.load %arg2[%c1_63, %c0_64, %c0_65] : memref<2x8x8xf32, #tpu.memory_space<vmem>>, vector<1x8x8xf32>
    %72 = vector.shape_cast %71 : vector<1x8x8xf32> to vector<8x8xf32>
    %73 = arith.index_cast %1 : i32 to index
    %c0_66 = arith.constant 0 : index
    %74 = vector.load %arg7[%73, %c0_66] : memref<32x8xf32, #tpu.memory_space<vmem>>, vector<16x8xf32>
    %c0_67 = arith.constant 0 : index
    %c0_68 = arith.constant 0 : index
    %75 = vector.load %arg12[%c0_67, %c0_68] : memref<8x32xf32, #tpu.memory_space<vmem>>, vector<8x32xf32>
    %cst_69 = arith.constant dense<0.000000e+00> : vector<16x8xf32>
    %76 = tpu.matmul %74, %72, %cst_69 {dimension_numbers = #tpu.dot_dimension_numbers<[1], [0], [0], [1], [0, 0, 1, 1], [], []>} : vector<16x8xf32>, vector<8x8xf32>, vector<16x8xf32> -> vector<16x8xf32>
    %cst_70 = arith.constant dense<0.000000e+00> : vector<16x32xf32>
    %77 = tpu.matmul %76, %75, %cst_70 {dimension_numbers = #tpu.dot_dimension_numbers<[1], [0], [0], [1], [0, 0, 1, 1], [], []>} : vector<16x8xf32>, vector<8x32xf32>, vector<16x32xf32> -> vector<16x32xf32>
    %cst_71 = arith.constant 1.000000e+00 : f32
    %78 = vector.broadcast %cst_71 : f32 to vector<16x32xf32>
    %79 = arith.mulf %78, %77 : vector<16x32xf32>
    %c1_72 = arith.constant 1 : index
    %c0_73 = arith.constant 0 : index
    %c0_74 = arith.constant 0 : index
    %c0_75 = arith.constant 0 : index
    %80 = vector.load %arg18[%c1_72, %c0_73, %c0_74, %c0_75] : memref<2x5x16x32xf32, #tpu.memory_space<vmem>>, vector<1x1x16x32xf32>
    %81 = vector.shape_cast %80 : vector<1x1x16x32xf32> to vector<16x32xf32>
    %82 = vector.shape_cast %77 : vector<16x32xf32> to vector<1x1x16x32xf32>
    tpu.vector_store %arg18[%c1_72, %c0_73, %c0_74, %c0_75], %82 {strides = array<i32>} : memref<2x5x16x32xf32, #tpu.memory_space<vmem>>, vector<1x1x16x32xf32>,
    %c1_76 = arith.constant 1 : index
    %c0_77 = arith.constant 0 : index
    %c0_78 = arith.constant 0 : index
    %83 = vector.load %arg3[%c1_76, %c0_77, %c0_78] : memref<2x8x8xf32, #tpu.memory_space<vmem>>, vector<1x8x8xf32>
    %84 = vector.shape_cast %83 : vector<1x8x8xf32> to vector<8x8xf32>
    %85 = arith.index_cast %1 : i32 to index
    %c0_79 = arith.constant 0 : index
    %86 = vector.load %arg8[%85, %c0_79] : memref<32x8xf32, #tpu.memory_space<vmem>>, vector<16x8xf32>
    %c0_80 = arith.constant 0 : index
    %c0_81 = arith.constant 0 : index
    %87 = vector.load %arg13[%c0_80, %c0_81] : memref<8x32xf32, #tpu.memory_space<vmem>>, vector<8x32xf32>
    %cst_82 = arith.constant dense<0.000000e+00> : vector<16x8xf32>
    %88 = tpu.matmul %86, %84, %cst_82 {dimension_numbers = #tpu.dot_dimension_numbers<[1], [0], [0], [1], [0, 0, 1, 1], [], []>} : vector<16x8xf32>, vector<8x8xf32>, vector<16x8xf32> -> vector<16x8xf32>
    %cst_83 = arith.constant dense<0.000000e+00> : vector<16x32xf32>
    %89 = tpu.matmul %88, %87, %cst_83 {dimension_numbers = #tpu.dot_dimension_numbers<[1], [0], [0], [1], [0, 0, 1, 1], [], []>} : vector<16x8xf32>, vector<8x32xf32>, vector<16x32xf32> -> vector<16x32xf32>
    %cst_84 = arith.constant 2.000000e+00 : f32
    %90 = vector.broadcast %cst_84 : f32 to vector<16x32xf32>
    %91 = arith.mulf %90, %89 : vector<16x32xf32>
    %92 = arith.addf %79, %91 : vector<16x32xf32>
    %c1_85 = arith.constant 1 : index
    %c1_86 = arith.constant 1 : index
    %c0_87 = arith.constant 0 : index
    %c0_88 = arith.constant 0 : index
    %93 = vector.load %arg18[%c1_85, %c1_86, %c0_87, %c0_88] : memref<2x5x16x32xf32, #tpu.memory_space<vmem>>, vector<1x1x16x32xf32>
    %94 = vector.shape_cast %93 : vector<1x1x16x32xf32> to vector<16x32xf32>
    %95 = vector.shape_cast %89 : vector<16x32xf32> to vector<1x1x16x32xf32>
    tpu.vector_store %arg18[%c1_85, %c1_86, %c0_87, %c0_88], %95 {strides = array<i32>} : memref<2x5x16x32xf32, #tpu.memory_space<vmem>>, vector<1x1x16x32xf32>,
    %c1_89 = arith.constant 1 : index
    %c0_90 = arith.constant 0 : index
    %c0_91 = arith.constant 0 : index
    %96 = vector.load %arg4[%c1_89, %c0_90, %c0_91] : memref<2x16x16xf32, #tpu.memory_space<vmem>>, vector<1x16x16xf32>
    %97 = vector.shape_cast %96 : vector<1x16x16xf32> to vector<16x16xf32>
    %98 = arith.index_cast %1 : i32 to index
    %c0_92 = arith.constant 0 : index
    %99 = vector.load %arg9[%98, %c0_92] : memref<32x16xf32, #tpu.memory_space<vmem>>, vector<16x16xf32>
    %c0_93 = arith.constant 0 : index
    %c0_94 = arith.constant 0 : index
    %100 = vector.load %arg14[%c0_93, %c0_94] : memref<16x32xf32, #tpu.memory_space<vmem>>, vector<16x32xf32>
    %cst_95 = arith.constant dense<0.000000e+00> : vector<16x16xf32>
    %101 = tpu.matmul %99, %97, %cst_95 {dimension_numbers = #tpu.dot_dimension_numbers<[1], [0], [0], [1], [0, 0, 1, 1], [], []>} : vector<16x16xf32>, vector<16x16xf32>, vector<16x16xf32> -> vector<16x16xf32>
    %cst_96 = arith.constant dense<0.000000e+00> : vector<16x32xf32>
    %102 = tpu.matmul %101, %100, %cst_96 {dimension_numbers = #tpu.dot_dimension_numbers<[1], [0], [0], [1], [0, 0, 1, 1], [], []>} : vector<16x16xf32>, vector<16x32xf32>, vector<16x32xf32> -> vector<16x32xf32>
    %cst_97 = arith.constant 3.000000e+00 : f32
    %103 = vector.broadcast %cst_97 : f32 to vector<16x32xf32>
    %104 = arith.mulf %103, %102 : vector<16x32xf32>
    %105 = arith.addf %92, %104 : vector<16x32xf32>
    %c1_98 = arith.constant 1 : index
    %c2_99 = arith.constant 2 : index
    %c0_100 = arith.constant 0 : index
    %c0_101 = arith.constant 0 : index
    %106 = vector.load %arg18[%c1_98, %c2_99, %c0_100, %c0_101] : memref<2x5x16x32xf32, #tpu.memory_space<vmem>>, vector<1x1x16x32xf32>
    %107 = vector.shape_cast %106 : vector<1x1x16x32xf32> to vector<16x32xf32>
    %108 = vector.shape_cast %102 : vector<16x32xf32> to vector<1x1x16x32xf32>
    tpu.vector_store %arg18[%c1_98, %c2_99, %c0_100, %c0_101], %108 {strides = array<i32>} : memref<2x5x16x32xf32, #tpu.memory_space<vmem>>, vector<1x1x16x32xf32>,
    %c1_102 = arith.constant 1 : index
    %c0_103 = arith.constant 0 : index
    %c0_104 = arith.constant 0 : index
    %109 = vector.load %arg5[%c1_102, %c0_103, %c0_104] : memref<2x16x16xf32, #tpu.memory_space<vmem>>, vector<1x16x16xf32>
    %110 = vector.shape_cast %109 : vector<1x16x16xf32> to vector<16x16xf32>
    %111 = arith.index_cast %1 : i32 to index
    %c0_105 = arith.constant 0 : index
    %112 = vector.load %arg10[%111, %c0_105] : memref<32x16xf32, #tpu.memory_space<vmem>>, vector<16x16xf32>
    %c0_106 = arith.constant 0 : index
    %c0_107 = arith.constant 0 : index
    %113 = vector.load %arg15[%c0_106, %c0_107] : memref<16x32xf32, #tpu.memory_space<vmem>>, vector<16x32xf32>
    %cst_108 = arith.constant dense<0.000000e+00> : vector<16x16xf32>
    %114 = tpu.matmul %112, %110, %cst_108 {dimension_numbers = #tpu.dot_dimension_numbers<[1], [0], [0], [1], [0, 0, 1, 1], [], []>} : vector<16x16xf32>, vector<16x16xf32>, vector<16x16xf32> -> vector<16x16xf32>
    %cst_109 = arith.constant dense<0.000000e+00> : vector<16x32xf32>
    %115 = tpu.matmul %114, %113, %cst_109 {dimension_numbers = #tpu.dot_dimension_numbers<[1], [0], [0], [1], [0, 0, 1, 1], [], []>} : vector<16x16xf32>, vector<16x32xf32>, vector<16x32xf32> -> vector<16x32xf32>
    %cst_110 = arith.constant 4.000000e+00 : f32
    %116 = vector.broadcast %cst_110 : f32 to vector<16x32xf32>
    %117 = arith.mulf %116, %115 : vector<16x32xf32>
    %118 = arith.addf %105, %117 : vector<16x32xf32>
    %c1_111 = arith.constant 1 : index
    %c3_112 = arith.constant 3 : index
    %c0_113 = arith.constant 0 : index
    %c0_114 = arith.constant 0 : index
    %119 = vector.load %arg18[%c1_111, %c3_112, %c0_113, %c0_114] : memref<2x5x16x32xf32, #tpu.memory_space<vmem>>, vector<1x1x16x32xf32>
    %120 = vector.shape_cast %119 : vector<1x1x16x32xf32> to vector<16x32xf32>
    %121 = vector.shape_cast %115 : vector<16x32xf32> to vector<1x1x16x32xf32>
    tpu.vector_store %arg18[%c1_111, %c3_112, %c0_113, %c0_114], %121 {strides = array<i32>} : memref<2x5x16x32xf32, #tpu.memory_space<vmem>>, vector<1x1x16x32xf32>,
    %c1_115 = arith.constant 1 : index
    %c0_116 = arith.constant 0 : index
    %c0_117 = arith.constant 0 : index
    %122 = vector.load %arg6[%c1_115, %c0_116, %c0_117] : memref<2x32x32xf32, #tpu.memory_space<vmem>>, vector<1x32x32xf32>
    %123 = vector.shape_cast %122 : vector<1x32x32xf32> to vector<32x32xf32>
    %124 = arith.index_cast %1 : i32 to index
    %c0_118 = arith.constant 0 : index
    %125 = vector.load %arg11[%124, %c0_118] : memref<32x32xf32, #tpu.memory_space<vmem>>, vector<16x32xf32>
    %c0_119 = arith.constant 0 : index
    %c0_120 = arith.constant 0 : index
    %126 = vector.load %arg16[%c0_119, %c0_120] : memref<32x32xf32, #tpu.memory_space<vmem>>, vector<32x32xf32>
    %cst_121 = arith.constant dense<0.000000e+00> : vector<16x32xf32>
    %127 = tpu.matmul %125, %123, %cst_121 {dimension_numbers = #tpu.dot_dimension_numbers<[1], [0], [0], [1], [0, 0, 1, 1], [], []>} : vector<16x32xf32>, vector<32x32xf32>, vector<16x32xf32> -> vector<16x32xf32>
    %cst_122 = arith.constant dense<0.000000e+00> : vector<16x32xf32>
    %128 = tpu.matmul %127, %126, %cst_122 {dimension_numbers = #tpu.dot_dimension_numbers<[1], [0], [0], [1], [0, 0, 1, 1], [], []>} : vector<16x32xf32>, vector<32x32xf32>, vector<16x32xf32> -> vector<16x32xf32>
    %cst_123 = arith.constant 5.000000e+00 : f32
    %129 = vector.broadcast %cst_123 : f32 to vector<16x32xf32>
    %130 = arith.mulf %129, %128 : vector<16x32xf32>
    %131 = arith.addf %118, %130 : vector<16x32xf32>
    %c1_124 = arith.constant 1 : index
    %c4_125 = arith.constant 4 : index
    %c0_126 = arith.constant 0 : index
    %c0_127 = arith.constant 0 : index
    %132 = vector.load %arg18[%c1_124, %c4_125, %c0_126, %c0_127] : memref<2x5x16x32xf32, #tpu.memory_space<vmem>>, vector<1x1x16x32xf32>
    %133 = vector.shape_cast %132 : vector<1x1x16x32xf32> to vector<16x32xf32>
    %134 = vector.shape_cast %128 : vector<16x32xf32> to vector<1x1x16x32xf32>
    tpu.vector_store %arg18[%c1_124, %c4_125, %c0_126, %c0_127], %134 {strides = array<i32>} : memref<2x5x16x32xf32, #tpu.memory_space<vmem>>, vector<1x1x16x32xf32>,
    %cst_128 = arith.constant 0.0666666701 : f32
    %135 = vector.broadcast %cst_128 : f32 to vector<16x32xf32>
    %136 = arith.mulf %131, %135 : vector<16x32xf32>
    %c1_129 = arith.constant 1 : index
    %c0_130 = arith.constant 0 : index
    %c0_131 = arith.constant 0 : index
    %137 = vector.load %arg17[%c1_129, %c0_130, %c0_131] : memref<2x16x32xf32, #tpu.memory_space<vmem>>, vector<1x16x32xf32>
    %138 = vector.shape_cast %137 : vector<1x16x32xf32> to vector<16x32xf32>
    %139 = vector.shape_cast %136 : vector<16x32xf32> to vector<1x16x32xf32>
    tpu.vector_store %arg17[%c1_129, %c0_130, %c0_131], %139 {strides = array<i32>} : memref<2x16x32xf32, #tpu.memory_space<vmem>>, vector<1x16x32xf32>,
    return
  }
  func.func @transform_0(%arg0: i32, %arg1: i32) -> (i32, i32, i32) {
    %c0_i32 = arith.constant 0 : i32
    %c0_i32_0 = arith.constant 0 : i32
    %c0_i32_1 = arith.constant 0 : i32
    return %arg0, %c0_i32, %c0_i32_0 : i32, i32, i32
  }
  func.func @transform_1(%arg0: i32, %arg1: i32) -> (i32, i32, i32) {
    %c0_i32 = arith.constant 0 : i32
    %c0_i32_0 = arith.constant 0 : i32
    %c0_i32_1 = arith.constant 0 : i32
    return %arg0, %c0_i32, %c0_i32_0 : i32, i32, i32
  }
  func.func @transform_2(%arg0: i32, %arg1: i32) -> (i32, i32, i32) {
    %c0_i32 = arith.constant 0 : i32
    %c0_i32_0 = arith.constant 0 : i32
    %c0_i32_1 = arith.constant 0 : i32
    return %arg0, %c0_i32, %c0_i32_0 : i32, i32, i32
  }
  func.func @transform_3(%arg0: i32, %arg1: i32) -> (i32, i32, i32) {
    %c0_i32 = arith.constant 0 : i32
    %c0_i32_0 = arith.constant 0 : i32
    %c0_i32_1 = arith.constant 0 : i32
    return %arg0, %c0_i32, %c0_i32_0 : i32, i32, i32
  }
  func.func @transform_4(%arg0: i32, %arg1: i32) -> (i32, i32, i32) {
    %c0_i32 = arith.constant 0 : i32
    %c0_i32_0 = arith.constant 0 : i32
    %c0_i32_1 = arith.constant 0 : i32
    return %arg0, %c0_i32, %c0_i32_0 : i32, i32, i32
  }
  func.func @transform_5(%arg0: i32, %arg1: i32) -> (i32, i32) {
    %c0_i32 = arith.constant 0 : i32
    %c0_i32_0 = arith.constant 0 : i32
    %c0_i32_1 = arith.constant 0 : i32
    return %c0_i32, %c0_i32_0 : i32, i32
  }
  func.func @transform_6(%arg0: i32, %arg1: i32) -> (i32, i32) {
    %c0_i32 = arith.constant 0 : i32
    %c0_i32_0 = arith.constant 0 : i32
    %c0_i32_1 = arith.constant 0 : i32
    return %c0_i32, %c0_i32_0 : i32, i32
  }
  func.func @transform_7(%arg0: i32, %arg1: i32) -> (i32, i32) {
    %c0_i32 = arith.constant 0 : i32
    %c0_i32_0 = arith.constant 0 : i32
    %c0_i32_1 = arith.constant 0 : i32
    return %c0_i32, %c0_i32_0 : i32, i32
  }
  func.func @transform_8(%arg0: i32, %arg1: i32) -> (i32, i32) {
    %c0_i32 = arith.constant 0 : i32
    %c0_i32_0 = arith.constant 0 : i32
    %c0_i32_1 = arith.constant 0 : i32
    return %c0_i32, %c0_i32_0 : i32, i32
  }
  func.func @transform_9(%arg0: i32, %arg1: i32) -> (i32, i32) {
    %c0_i32 = arith.constant 0 : i32
    %c0_i32_0 = arith.constant 0 : i32
    %c0_i32_1 = arith.constant 0 : i32
    return %c0_i32, %c0_i32_0 : i32, i32
  }
  func.func @transform_10(%arg0: i32, %arg1: i32) -> (i32, i32) {
    %c0_i32 = arith.constant 0 : i32
    %c0_i32_0 = arith.constant 0 : i32
    %c0_i32_1 = arith.constant 0 : i32
    return %c0_i32, %c0_i32_0 : i32, i32
  }
  func.func @transform_11(%arg0: i32, %arg1: i32) -> (i32, i32) {
    %c0_i32 = arith.constant 0 : i32
    %c0_i32_0 = arith.constant 0 : i32
    %c0_i32_1 = arith.constant 0 : i32
    return %c0_i32, %c0_i32_0 : i32, i32
  }
  func.func @transform_12(%arg0: i32, %arg1: i32) -> (i32, i32) {
    %c0_i32 = arith.constant 0 : i32
    %c0_i32_0 = arith.constant 0 : i32
    %c0_i32_1 = arith.constant 0 : i32
    return %c0_i32, %c0_i32_0 : i32, i32
  }
  func.func @transform_13(%arg0: i32, %arg1: i32) -> (i32, i32) {
    %c0_i32 = arith.constant 0 : i32
    %c0_i32_0 = arith.constant 0 : i32
    %c0_i32_1 = arith.constant 0 : i32
    return %c0_i32, %c0_i32_0 : i32, i32
  }
  func.func @transform_14(%arg0: i32, %arg1: i32) -> (i32, i32) {
    %c0_i32 = arith.constant 0 : i32
    %c0_i32_0 = arith.constant 0 : i32
    %c0_i32_1 = arith.constant 0 : i32
    return %c0_i32, %c0_i32_0 : i32, i32
  }
  func.func @transform_15(%arg0: i32, %arg1: i32) -> (i32, i32, i32) {
    %c0_i32 = arith.constant 0 : i32
    %c0_i32_0 = arith.constant 0 : i32
    return %arg0, %arg1, %c0_i32 : i32, i32, i32
  }
  func.func @transform_16(%arg0: i32, %arg1: i32) -> (i32, i32, i32, i32) {
    %c0_i32 = arith.constant 0 : i32
    %c0_i32_0 = arith.constant 0 : i32
    %c0_i32_1 = arith.constant 0 : i32
    return %arg0, %c0_i32, %arg1, %c0_i32_0 : i32, i32, i32, i32
  }
}

</mosaic_0001>

<llo_original>
// kernel: tpu_custom_call.1
$region0: #{tpu_custom_call.1}
  #allocation0 [shape = 'u32[]', space=smem, size = 0x4, offset = 0x4, fixed_abs, tag = 'smem constant byte address 0x4 - core index']
  #allocation1 [shape = 'u32[144,128]{1,0:T(1,128)}', space=vmem, size = 0x12000, scoped, tag = 'internal scratch']
  #allocation13 [shape = 's32[]', space=sflag, size = 0x4, offset = 0, fixed_abs, tag = 'sflag constant byte address 0x0 - dummy sync flag']
  #allocation15 [shape = 's32[]', space=sflag, size = 0x4, offset = 0, fixed_abs, tag = 'sflag constant byte address 0x0 - dummy sync flag']
  %s0 = inlined_call_operand.hbm [shape: f32[2,8,8], index: 0, kind: input, shape index: {}]
  %s1 = inlined_call_operand.hbm [shape: f32[2,8,8], index: 1, kind: input, shape index: {}]
  %s2 = inlined_call_operand.vmem [shape: f32[2,16,16], index: 2, kind: input, shape index: {}]
  %s3 = inlined_call_operand.vmem [shape: f32[2,16,16], index: 3, kind: input, shape index: {}]
  %s4 = inlined_call_operand.vmem [shape: f32[2,32,32], index: 4, kind: input, shape index: {}]
  %s5 = inlined_call_operand.vmem [shape: f32[32,8], index: 5, kind: input, shape index: {}]
  %s6 = inlined_call_operand.vmem [shape: f32[32,8], index: 6, kind: input, shape index: {}]
  %s7 = inlined_call_operand.vmem [shape: f32[32,16], index: 7, kind: input, shape index: {}]
  %s8 = inlined_call_operand.vmem [shape: f32[32,16], index: 8, kind: input, shape index: {}]
  %s9 = inlined_call_operand.vmem [shape: f32[32,32], index: 9, kind: input, shape index: {}]
  %s10 = inlined_call_operand.hbm [shape: f32[8,32], index: 10, kind: input, shape index: {}]
  %s11 = inlined_call_operand.hbm [shape: f32[8,32], index: 11, kind: input, shape index: {}]
  %s12 = inlined_call_operand.vmem [shape: f32[16,32], index: 12, kind: input, shape index: {}]
  %s13 = inlined_call_operand.vmem [shape: f32[16,32], index: 13, kind: input, shape index: {}]
  %s14 = inlined_call_operand.vmem [shape: f32[32,32], index: 14, kind: input, shape index: {}]
  %s15 = inlined_call_operand.hbm [shape: f32[2,32,32], index: 15, kind: output, shape index: {0}]
  %s16 = inlined_call_operand.hbm [shape: f32[2,5,32,32], index: 16, kind: output, shape index: {1}]
  %17 = xla_tuple %s15, %s16
  %s18 = sld [smem:[#allocation0]]
  $region117: #{tpu_custom_call.1} parent=0
    _
  %s20 = ssub.s32 1, %s18
  %s21 = scalar_select 0, %s20, %s18
  $region1: #{tpu_custom_call.1} parent=0
    #allocation2 [shape = 'u8[8192]{0}', space=vmem, size = 0x2000, scoped, tag = 'input window, operand 0, single buffered']
    #allocation3 [shape = 's32[2]{0}', space=sflag, size = 0x8, scoped, tag = 'scoped memory for tpu_custom_call.1']
    #allocation4 [shape = 's32[2]{0}', space=sflag, size = 0x8, scoped, tag = 'scoped memory for tpu_custom_call.1']
    #allocation5 [shape = 'u8[8192]{0}', space=vmem, size = 0x2000, scoped, tag = 'input window, operand 1, single buffered']
    #allocation6 [shape = 's32[1]{0}', space=sflag, size = 0x4, scoped, tag = 'scoped memory for tpu_custom_call.1']
    #allocation7 [shape = 'u8[4096]{0}', space=vmem, size = 0x1000, scoped, tag = 'input window, operand 10, single buffered']
    #allocation8 [shape = 'u8[4096]{0}', space=vmem, size = 0x1000, scoped, tag = 'input window, operand 11, single buffered']
    #allocation9 [shape = 's32[1]{0}', space=sflag, size = 0x4, scoped, tag = 'scoped memory for tpu_custom_call.1']
    #allocation10 [shape = 'u8[32768]{0}', space=vmem, size = 0x8000, scoped, tag = 'output window, operand 0']
    #allocation11 [shape = 'u8[163840]{0}', space=vmem, size = 0x28000, scoped, tag = 'output window, operand 1']
    #allocation12 [shape = 's32[2]{0}', space=sflag, size = 0x8, scoped, tag = 'scoped memory for tpu_custom_call.1']
    %22 = vsyncpa [#allocation3], 0
    %23 = vsyncpa [#allocation6], 0
    %24 = vsyncpa [#allocation9], 0
    %25 = vsyncpa [#allocation4], 0
    %s26 = scalar_lea.sflag [#allocation4], 1
    %27 = vsyncpa %s26, 0
    %28 = vsyncpa [#allocation12], 0
    %s29 = scalar_lea.sflag [#allocation12], 1
    %30 = vsyncpa %s29, 0
    loop: start=0, step=1, limit=4
    $region2: #{tpu_custom_call.1} parent=1 // loop_pre_header
      _
    $region3: #{tpu_custom_call.1} parent=1 // loop_header
      %s32 = sphi 0, %s36
      %p33 = scmp.ge.s32.totalorder %s32, 4
      %s39 = sphi 0, %s51
      %s40 = sphi 0, %s47
      %s41 = sphi 0, %s39
      %s42 = sphi 0, %s40
      %s43 = sphi 0, %s41
      %s44 = sphi 0, %s42
      %s54 = sphi 0, %s56
      %s57 = sphi 0, %s54
      %s58 = sphi 0, %s57
      %s74 = sphi 0, %s58
      %s80 = sphi 0, %s82
      %s83 = sphi 0, %s80
      %s84 = sphi 0, %s83
      %s100 = sphi 0, %s84
      %s106 = sphi 0, %s108
      %s109 = sphi 0, %s106
      %s110 = sphi 0, %s109
      %s126 = sphi 0, %s110
      %s132 = sphi 0, %s134
      %s135 = sphi 0, %s132
      %s136 = sphi 0, %s135
      %s152 = sphi 0, %s136
      %s158 = sphi 0, %s160
      %s161 = sphi 0, %s158
      %s162 = sphi 0, %s161
      %s178 = sphi 0, %s162
      %s182 = sphi 0, %s182
      %s184 = sphi 0, %s182
      %s185 = sphi 0, %s184
      %s199 = sphi 0, %s185
      %s203 = sphi 0, %s203
      %s205 = sphi 0, %s203
      %s206 = sphi 0, %s205
      %s220 = sphi 0, %s206
      %s224 = sphi 0, %s224
      %s226 = sphi 0, %s224
      %s227 = sphi 0, %s226
      %s241 = sphi 0, %s227
      %s245 = sphi 0, %s245
      %s247 = sphi 0, %s245
      %s248 = sphi 0, %s247
      %s262 = sphi 0, %s248
      %s266 = sphi 0, %s266
      %s268 = sphi 0, %s266
      %s269 = sphi 0, %s268
      %s283 = sphi 0, %s269
      %s287 = sphi 0, %s287
      %s289 = sphi 0, %s287
      %s290 = sphi 0, %s289
      %s304 = sphi 0, %s290
      %s308 = sphi 0, %s308
      %s310 = sphi 0, %s308
      %s311 = sphi 0, %s310
      %s325 = sphi 0, %s311
      %s329 = sphi 0, %s329
      %s331 = sphi 0, %s329
      %s332 = sphi 0, %s331
      %s346 = sphi 0, %s332
      %s350 = sphi 0, %s350
      %s352 = sphi 0, %s350
      %s353 = sphi 0, %s352
      %s367 = sphi 0, %s353
      %s371 = sphi 0, %s371
      %s373 = sphi 0, %s371
      %s374 = sphi 0, %s373
      %s388 = sphi 0, %s374
      %s396 = sphi 0, %s398
      %s399 = sphi 0, %s396
      %s400 = sphi 0, %s399
      %s416 = sphi 0, %s400
      %s424 = sphi 0, %s426
      %s427 = sphi 0, %s424
      %s428 = sphi 0, %s427
      %s444 = sphi 0, %s428
    $region4: #{tpu_custom_call.1} parent=1 // loop_header_branch
      %35 = sbr.rel (%p33) target = $region8
    $region5: #{tpu_custom_call.1} parent=1 // loop_body
      %s37 = ssub.s32 %s32, 1
      %s38 = ssub.s32 %s32, 2
      %s45 = sadd.s32 1, %s40
      %p46 = scmp.ge.s32.totalorder %s45, 2
      %s47 = scalar_select %p46, 0, %s45
      %s48 = sadd.s32 1, %s39
      %s49 = scalar_select %p46, %s48, %s39
      %p50 = scmp.ge.s32.totalorder %s49, 1
      %s51 = scalar_select %p50, 0, %s49
      %s52 = ssub.s32 %s39, %s51
      %p53 = scmp.eq.s32.totalorder %s52, 0
      %s55 = sadd.s32 %s54, 1
      %s56 = scalar_select %p53, %s54, %s55
      %p59 = pneg %p53
      %p60 = scmp.eq.s32.totalorder %s32, 1
      %p61 = por %p59, %p60
      %p62 = scmp.ne.s32.totalorder %s54, %s57
      %p63 = scmp.eq.s32.totalorder %s32, 0
      %p64 = por %p62, %p63
      %p65 = scmp.ne.s32.totalorder %s54, %s57
      %p66 = scmp.eq.s32.totalorder %s37, 1
      %p67 = por %p65, %p66
      %p68 = scmp.ne.s32.totalorder %s57, %s58
      %p69 = scmp.eq.s32.totalorder %s37, 0
      %p70 = por %p68, %p69
      %p71 = scmp.ne.s32.totalorder %s57, %s58
      %p72 = scmp.eq.s32.totalorder %s38, 1
      %p73 = por %p71, %p72
      %p75 = scmp.ne.s32.totalorder %s58, %s74
      %p76 = scmp.eq.s32.totalorder %s38, 0
      %p77 = por %p75, %p76
      %s78 = ssub.s32 %s39, %s51
      %p79 = scmp.eq.s32.totalorder %s78, 0
      %s81 = sadd.s32 %s80, 1
      %s82 = scalar_select %p79, %s80, %s81
      %p85 = pneg %p79
      %p86 = scmp.eq.s32.totalorder %s32, 1
      %p87 = por %p85, %p86
      %p88 = scmp.ne.s32.totalorder %s80, %s83
      %p89 = scmp.eq.s32.totalorder %s32, 0
      %p90 = por %p88, %p89
      %p91 = scmp.ne.s32.totalorder %s80, %s83
      %p92 = scmp.eq.s32.totalorder %s37, 1
      %p93 = por %p91, %p92
      %p94 = scmp.ne.s32.totalorder %s83, %s84
      %p95 = scmp.eq.s32.totalorder %s37, 0
      %p96 = por %p94, %p95
      %p97 = scmp.ne.s32.totalorder %s83, %s84
      %p98 = scmp.eq.s32.totalorder %s38, 1
      %p99 = por %p97, %p98
      %p101 = scmp.ne.s32.totalorder %s84, %s100
      %p102 = scmp.eq.s32.totalorder %s38, 0
      %p103 = por %p101, %p102
      %s104 = ssub.s32 %s39, %s51
      %p105 = scmp.eq.s32.totalorder %s104, 0
      %s107 = sadd.s32 %s106, 1
      %s108 = scalar_select %p105, %s106, %s107
      %p111 = pneg %p105
      %p112 = scmp.eq.s32.totalorder %s32, 1
      %p113 = por %p111, %p112
      %p114 = scmp.ne.s32.totalorder %s106, %s109
      %p115 = scmp.eq.s32.totalorder %s32, 0
      %p116 = por %p114, %p115
      %p117 = scmp.ne.s32.totalorder %s106, %s109
      %p118 = scmp.eq.s32.totalorder %s37, 1
      %p119 = por %p117, %p118
      %p120 = scmp.ne.s32.totalorder %s109, %s110
      %p121 = scmp.eq.s32.totalorder %s37, 0
      %p122 = por %p120, %p121
      %p123 = scmp.ne.s32.totalorder %s109, %s110
      %p124 = scmp.eq.s32.totalorder %s38, 1
      %p125 = por %p123, %p124
      %p127 = scmp.ne.s32.totalorder %s110, %s126
      %p128 = scmp.eq.s32.totalorder %s38, 0
      %p129 = por %p127, %p128
      %s130 = ssub.s32 %s39, %s51
      %p131 = scmp.eq.s32.totalorder %s130, 0
      %s133 = sadd.s32 %s132, 1
      %s134 = scalar_select %p131, %s132, %s133
      %p137 = pneg %p131
      %p138 = scmp.eq.s32.totalorder %s32, 1
      %p139 = por %p137, %p138
      %p140 = scmp.ne.s32.totalorder %s132, %s135
      %p141 = scmp.eq.s32.totalorder %s32, 0
      %p142 = por %p140, %p141
      %p143 = scmp.ne.s32.totalorder %s132, %s135
      %p144 = scmp.eq.s32.totalorder %s37, 1
      %p145 = por %p143, %p144
      %p146 = scmp.ne.s32.totalorder %s135, %s136
      %p147 = scmp.eq.s32.totalorder %s37, 0
      %p148 = por %p146, %p147
      %p149 = scmp.ne.s32.totalorder %s135, %s136
      %p150 = scmp.eq.s32.totalorder %s38, 1
      %p151 = por %p149, %p150
      %p153 = scmp.ne.s32.totalorder %s136, %s152
      %p154 = scmp.eq.s32.totalorder %s38, 0
      %p155 = por %p153, %p154
      %s156 = ssub.s32 %s39, %s51
      %p157 = scmp.eq.s32.totalorder %s156, 0
      %s159 = sadd.s32 %s158, 1
      %s160 = scalar_select %p157, %s158, %s159
      %p163 = pneg %p157
      %p164 = scmp.eq.s32.totalorder %s32, 1
      %p165 = por %p163, %p164
      %p166 = scmp.ne.s32.totalorder %s158, %s161
      %p167 = scmp.eq.s32.totalorder %s32, 0
      %p168 = por %p166, %p167
      %p169 = scmp.ne.s32.totalorder %s158, %s161
      %p170 = scmp.eq.s32.totalorder %s37, 1
      %p171 = por %p169, %p170
      %p172 = scmp.ne.s32.totalorder %s161, %s162
      %p173 = scmp.eq.s32.totalorder %s37, 0
      %p174 = por %p172, %p173
      %p175 = scmp.ne.s32.totalorder %s161, %s162
      %p176 = scmp.eq.s32.totalorder %s38, 1
      %p177 = por %p175, %p176
      %p179 = scmp.ne.s32.totalorder %s162, %s178
      %p180 = scmp.eq.s32.totalorder %s38, 0
      %p181 = por %p179, %p180
      %s183 = sadd.s32 %s182, 1
      %p186 = scmp.eq.s32.totalorder %s32, 1
      %p187 = scmp.ne.s32.totalorder %s182, %s184
      %p188 = scmp.eq.s32.totalorder %s32, 0
      %p189 = por %p187, %p188
      %p190 = scmp.ne.s32.totalorder %s182, %s184
      %p191 = scmp.eq.s32.totalorder %s37, 1
      %p192 = por %p190, %p191
      %p193 = scmp.ne.s32.totalorder %s184, %s185
      %p194 = scmp.eq.s32.totalorder %s37, 0
      %p195 = por %p193, %p194
      %p196 = scmp.ne.s32.totalorder %s184, %s185
      %p197 = scmp.eq.s32.totalorder %s38, 1
      %p198 = por %p196, %p197
      %p200 = scmp.ne.s32.totalorder %s185, %s199
      %p201 = scmp.eq.s32.totalorder %s38, 0
      %p202 = por %p200, %p201
      %s204 = sadd.s32 %s203, 1
      %p207 = scmp.eq.s32.totalorder %s32, 1
      %p208 = scmp.ne.s32.totalorder %s203, %s205
      %p209 = scmp.eq.s32.totalorder %s32, 0
      %p210 = por %p208, %p209
      %p211 = scmp.ne.s32.totalorder %s203, %s205
      %p212 = scmp.eq.s32.totalorder %s37, 1
      %p213 = por %p211, %p212
      %p214 = scmp.ne.s32.totalorder %s205, %s206
      %p215 = scmp.eq.s32.totalorder %s37, 0
      %p216 = por %p214, %p215
      %p217 = scmp.ne.s32.totalorder %s205, %s206
      %p218 = scmp.eq.s32.totalorder %s38, 1
      %p219 = por %p217, %p218
      %p221 = scmp.ne.s32.totalorder %s206, %s220
      %p222 = scmp.eq.s32.totalorder %s38, 0
      %p223 = por %p221, %p222
      %s225 = sadd.s32 %s224, 1
      %p228 = scmp.eq.s32.totalorder %s32, 1
      %p229 = scmp.ne.s32.totalorder %s224, %s226
      %p230 = scmp.eq.s32.totalorder %s32, 0
      %p231 = por %p229, %p230
      %p232 = scmp.ne.s32.totalorder %s224, %s226
      %p233 = scmp.eq.s32.totalorder %s37, 1
      %p234 = por %p232, %p233
      %p235 = scmp.ne.s32.totalorder %s226, %s227
      %p236 = scmp.eq.s32.totalorder %s37, 0
      %p237 = por %p235, %p236
      %p238 = scmp.ne.s32.totalorder %s226, %s227
      %p239 = scmp.eq.s32.totalorder %s38, 1
      %p240 = por %p238, %p239
      %p242 = scmp.ne.s32.totalorder %s227, %s241
      %p243 = scmp.eq.s32.totalorder %s38, 0
      %p244 = por %p242, %p243
      %s246 = sadd.s32 %s245, 1
      %p249 = scmp.eq.s32.totalorder %s32, 1
      %p250 = scmp.ne.s32.totalorder %s245, %s247
      %p251 = scmp.eq.s32.totalorder %s32, 0
      %p252 = por %p250, %p251
      %p253 = scmp.ne.s32.totalorder %s245, %s247
      %p254 = scmp.eq.s32.totalorder %s37, 1
      %p255 = por %p253, %p254
      %p256 = scmp.ne.s32.totalorder %s247, %s248
      %p257 = scmp.eq.s32.totalorder %s37, 0
      %p258 = por %p256, %p257
      %p259 = scmp.ne.s32.totalorder %s247, %s248
      %p260 = scmp.eq.s32.totalorder %s38, 1
      %p261 = por %p259, %p260
      %p263 = scmp.ne.s32.totalorder %s248, %s262
      %p264 = scmp.eq.s32.totalorder %s38, 0
      %p265 = por %p263, %p264
      %s267 = sadd.s32 %s266, 1
      %p270 = scmp.eq.s32.totalorder %s32, 1
      %p271 = scmp.ne.s32.totalorder %s266, %s268
      %p272 = scmp.eq.s32.totalorder %s32, 0
      %p273 = por %p271, %p272
      %p274 = scmp.ne.s32.totalorder %s266, %s268
      %p275 = scmp.eq.s32.totalorder %s37, 1
      %p276 = por %p274, %p275
      %p277 = scmp.ne.s32.totalorder %s268, %s269
      %p278 = scmp.eq.s32.totalorder %s37, 0
      %p279 = por %p277, %p278
      %p280 = scmp.ne.s32.totalorder %s268, %s269
      %p281 = scmp.eq.s32.totalorder %s38, 1
      %p282 = por %p280, %p281
      %p284 = scmp.ne.s32.totalorder %s269, %s283
      %p285 = scmp.eq.s32.totalorder %s38, 0
      %p286 = por %p284, %p285
      %s288 = sadd.s32 %s287, 1
      %p291 = scmp.eq.s32.totalorder %s32, 1
      %p292 = scmp.ne.s32.totalorder %s287, %s289
      %p293 = scmp.eq.s32.totalorder %s32, 0
      %p294 = por %p292, %p293
      %p295 = scmp.ne.s32.totalorder %s287, %s289
      %p296 = scmp.eq.s32.totalorder %s37, 1
      %p297 = por %p295, %p296
      %p298 = scmp.ne.s32.totalorder %s289, %s290
      %p299 = scmp.eq.s32.totalorder %s37, 0
      %p300 = por %p298, %p299
      %p301 = scmp.ne.s32.totalorder %s289, %s290
      %p302 = scmp.eq.s32.totalorder %s38, 1
      %p303 = por %p301, %p302
      %p305 = scmp.ne.s32.totalorder %s290, %s304
      %p306 = scmp.eq.s32.totalorder %s38, 0
      %p307 = por %p305, %p306
      %s309 = sadd.s32 %s308, 1
      %p312 = scmp.eq.s32.totalorder %s32, 1
      %p313 = scmp.ne.s32.totalorder %s308, %s310
      %p314 = scmp.eq.s32.totalorder %s32, 0
      %p315 = por %p313, %p314
      %p316 = scmp.ne.s32.totalorder %s308, %s310
      %p317 = scmp.eq.s32.totalorder %s37, 1
      %p318 = por %p316, %p317
      %p319 = scmp.ne.s32.totalorder %s310, %s311
      %p320 = scmp.eq.s32.totalorder %s37, 0
      %p321 = por %p319, %p320
      %p322 = scmp.ne.s32.totalorder %s310, %s311
      %p323 = scmp.eq.s32.totalorder %s38, 1
      %p324 = por %p322, %p323
      %p326 = scmp.ne.s32.totalorder %s311, %s325
      %p327 = scmp.eq.s32.totalorder %s38, 0
      %p328 = por %p326, %p327
      %s330 = sadd.s32 %s329, 1
      %p333 = scmp.eq.s32.totalorder %s32, 1
      %p334 = scmp.ne.s32.totalorder %s329, %s331
      %p335 = scmp.eq.s32.totalorder %s32, 0
      %p336 = por %p334, %p335
      %p337 = scmp.ne.s32.totalorder %s329, %s331
      %p338 = scmp.eq.s32.totalorder %s37, 1
      %p339 = por %p337, %p338
      %p340 = scmp.ne.s32.totalorder %s331, %s332
      %p341 = scmp.eq.s32.totalorder %s37, 0
      %p342 = por %p340, %p341
      %p343 = scmp.ne.s32.totalorder %s331, %s332
      %p344 = scmp.eq.s32.totalorder %s38, 1
      %p345 = por %p343, %p344
      %p347 = scmp.ne.s32.totalorder %s332, %s346
      %p348 = scmp.eq.s32.totalorder %s38, 0
      %p349 = por %p347, %p348
      %s351 = sadd.s32 %s350, 1
      %p354 = scmp.eq.s32.totalorder %s32, 1
      %p355 = scmp.ne.s32.totalorder %s350, %s352
      %p356 = scmp.eq.s32.totalorder %s32, 0
      %p357 = por %p355, %p356
      %p358 = scmp.ne.s32.totalorder %s350, %s352
      %p359 = scmp.eq.s32.totalorder %s37, 1
      %p360 = por %p358, %p359
      %p361 = scmp.ne.s32.totalorder %s352, %s353
      %p362 = scmp.eq.s32.totalorder %s37, 0
      %p363 = por %p361, %p362
      %p364 = scmp.ne.s32.totalorder %s352, %s353
      %p365 = scmp.eq.s32.totalorder %s38, 1
      %p366 = por %p364, %p365
      %p368 = scmp.ne.s32.totalorder %s353, %s367
      %p369 = scmp.eq.s32.totalorder %s38, 0
      %p370 = por %p368, %p369
      %s372 = sadd.s32 %s371, 1
      %p375 = scmp.eq.s32.totalorder %s32, 1
      %p376 = scmp.ne.s32.totalorder %s371, %s373
      %p377 = scmp.eq.s32.totalorder %s32, 0
      %p378 = por %p376, %p377
      %p379 = scmp.ne.s32.totalorder %s371, %s373
      %p380 = scmp.eq.s32.totalorder %s37, 1
      %p381 = por %p379, %p380
      %p382 = scmp.ne.s32.totalorder %s373, %s374
      %p383 = scmp.eq.s32.totalorder %s37, 0
      %p384 = por %p382, %p383
      %p385 = scmp.ne.s32.totalorder %s373, %s374
      %p386 = scmp.eq.s32.totalorder %s38, 1
      %p387 = por %p385, %p386
      %p389 = scmp.ne.s32.totalorder %s374, %s388
      %p390 = scmp.eq.s32.totalorder %s38, 0
      %p391 = por %p389, %p390
      %s392 = ssub.s32 %s39, %s51
      %s393 = ssub.s32 %s40, %s47
      %s394 = sor.u32 %s392, %s393
      %p395 = scmp.eq.s32.totalorder %s394, 0
      %s397 = sadd.s32 %s396, 1
      %s398 = scalar_select %p395, %s396, %s397
      %p401 = pneg %p395
      %p402 = scmp.eq.s32.totalorder %s32, 1
      %p403 = por %p401, %p402
      %p404 = scmp.ne.s32.totalorder %s396, %s399
      %p405 = scmp.eq.s32.totalorder %s32, 0
      %p406 = por %p404, %p405
      %p407 = scmp.ne.s32.totalorder %s396, %s399
      %p408 = scmp.eq.s32.totalorder %s37, 1
      %p409 = por %p407, %p408
      %p410 = scmp.ne.s32.totalorder %s399, %s400
      %p411 = scmp.eq.s32.totalorder %s37, 0
      %p412 = por %p410, %p411
      %p413 = scmp.ne.s32.totalorder %s399, %s400
      %p414 = scmp.eq.s32.totalorder %s38, 1
      %p415 = por %p413, %p414
      %p417 = scmp.ne.s32.totalorder %s400, %s416
      %p418 = scmp.eq.s32.totalorder %s38, 0
      %p419 = por %p417, %p418
      %s420 = ssub.s32 %s39, %s51
      %s421 = ssub.s32 %s40, %s47
      %s422 = sor.u32 %s420, %s421
      %p423 = scmp.eq.s32.totalorder %s422, 0
      %s425 = sadd.s32 %s424, 1
      %s426 = scalar_select %p423, %s424, %s425
      %p429 = pneg %p423
      %p430 = scmp.eq.s32.totalorder %s32, 1
      %p431 = por %p429, %p430
      %p432 = scmp.ne.s32.totalorder %s424, %s427
      %p433 = scmp.eq.s32.totalorder %s32, 0
      %p434 = por %p432, %p433
      %p435 = scmp.ne.s32.totalorder %s424, %s427
      %p436 = scmp.eq.s32.totalorder %s37, 1
      %p437 = por %p435, %p436
      %p438 = scmp.ne.s32.totalorder %s427, %s428
      %p439 = scmp.eq.s32.totalorder %s37, 0
      %p440 = por %p438, %p439
      %p441 = scmp.ne.s32.totalorder %s427, %s428
      %p442 = scmp.eq.s32.totalorder %s38, 1
      %p443 = por %p441, %p442
      %p445 = scmp.ne.s32.totalorder %s428, %s444
      %p446 = scmp.eq.s32.totalorder %s38, 0
      %p447 = por %p445, %p446
      %p448 = scmp.le.s32.totalorder 1, %s32
      %p449 = scmp.lt.s32.totalorder %s32, 3
      %p450 = pnand %p448, %p449
      %p451 = pneg %p450
      // Predicated region
      $region9: #{tpu_custom_call.1} parent=5 // pred_check
        _
      $region10: #{tpu_custom_call.1} parent=5 // pred_check_branch
        %453 = sbr.rel (%p450) target = $region12
      $region11: #{tpu_custom_call.1} parent=5 // pred_region
        %s454 = ssub.s32 %s32, 1
        // Predicated region
        $region13: #{tpu_custom_call.1} parent=11 // pred_check
          %p455 = pneg %p70
        $region14: #{tpu_custom_call.1} parent=11 // pred_check_branch
          %457 = sbr.rel (%p455) target = $region16
        $region15: #{tpu_custom_call.1} parent=11 // pred_region
          %s458 = smul.u32 2, %s41
          %s460 = ssub.s32 256, 256
          %461 = vsyncadd [#allocation3], %s460
          %s462 = smul.addr %s458, 128
          %s463 = scalar_lea.hbm %s0, %s462
          %s464 = sshll.u32 [#allocation2], 4
          %s465 = int_to_ptr.vmem [resolvable:$true] %s464
          %470 = dma.hbm_to_vmem [thread:$0]  %s463, 256, %s465, [#allocation3], 128, 128, 8
        $region16: #{tpu_custom_call.1} parent=11 // pred_fallthru
          _
        // Predicated region
        $region17: #{tpu_custom_call.1} parent=11 // pred_check
          %p471 = pneg %p96
        $region18: #{tpu_custom_call.1} parent=11 // pred_check_branch
          %473 = sbr.rel (%p471) target = $region20
        $region19: #{tpu_custom_call.1} parent=11 // pred_region
          %s474 = smul.u32 2, %s41
          %s476 = ssub.s32 256, 256
          %477 = vsyncadd [#allocation6], %s476
          %s478 = smul.addr %s474, 128
          %s479 = scalar_lea.hbm %s1, %s478
          %s480 = sshll.u32 [#allocation5], 4
          %s481 = int_to_ptr.vmem [resolvable:$true] %s480
          %486 = dma.hbm_to_vmem [thread:$0]  %s479, 256, %s481, [#allocation6], 128, 128, 8
        $region20: #{tpu_custom_call.1} parent=11 // pred_fallthru
          _
        // Predicated region
        $region21: #{tpu_custom_call.1} parent=11 // pred_check
          %p487 = pneg %p122
        $region22: #{tpu_custom_call.1} parent=11 // pred_check_branch
          %489 = sbr.rel (%p487) target = $region24
        $region23: #{tpu_custom_call.1} parent=11 // pred_region
          %s490 = smul.u32 2, %s41
          %p491 = scmp.lt.s32.totalorder %s490, 1
          %s492 = scalar_select %p491, %s490, 1
          %s493 = smul.addr %s492, 2
          %s494 = smul.addr %s493, 8
          %s495 = scalar_lea.vmem %s2, %s494
          %s496 = smul.u32 2, %s41
        $region24: #{tpu_custom_call.1} parent=11 // pred_fallthru
          _
        // Predicated region
        $region25: #{tpu_custom_call.1} parent=11 // pred_check
          %p497 = pneg %p148
        $region26: #{tpu_custom_call.1} parent=11 // pred_check_branch
          %499 = sbr.rel (%p497) target = $region28
        $region27: #{tpu_custom_call.1} parent=11 // pred_region
          %s500 = smul.u32 2, %s41
          %p501 = scmp.lt.s32.totalorder %s500, 1
          %s502 = scalar_select %p501, %s500, 1
          %s503 = smul.addr %s502, 2
          %s504 = smul.addr %s503, 8
          %s505 = scalar_lea.vmem %s3, %s504
          %s506 = smul.u32 2, %s41
        $region28: #{tpu_custom_call.1} parent=11 // pred_fallthru
          _
        // Predicated region
        $region29: #{tpu_custom_call.1} parent=11 // pred_check
          %p507 = pneg %p174
        $region30: #{tpu_custom_call.1} parent=11 // pred_check_branch
          %509 = sbr.rel (%p507) target = $region32
        $region31: #{tpu_custom_call.1} parent=11 // pred_region
          %s510 = smul.u32 2, %s41
          %p511 = scmp.lt.s32.totalorder %s510, 1
          %s512 = scalar_select %p511, %s510, 1
          %s513 = smul.addr %s512, 4
          %s514 = smul.addr %s513, 8
          %s515 = scalar_lea.vmem %s4, %s514
          %s516 = smul.u32 2, %s41
        $region32: #{tpu_custom_call.1} parent=11 // pred_fallthru
          _
        // Predicated region
        $region33: #{tpu_custom_call.1} parent=11 // pred_check
          %p517 = pneg %p195
        $region34: #{tpu_custom_call.1} parent=11 // pred_check_branch
          %519 = sbr.rel (%p517) target = $region36
        $region35: #{tpu_custom_call.1} parent=11 // pred_region
          _
        $region36: #{tpu_custom_call.1} parent=11 // pred_fallthru
          _
        // Predicated region
        $region37: #{tpu_custom_call.1} parent=11 // pred_check
          %p520 = pneg %p216
        $region38: #{tpu_custom_call.1} parent=11 // pred_check_branch
          %522 = sbr.rel (%p520) target = $region40
        $region39: #{tpu_custom_call.1} parent=11 // pred_region
          _
        $region40: #{tpu_custom_call.1} parent=11 // pred_fallthru
          _
        // Predicated region
        $region41: #{tpu_custom_call.1} parent=11 // pred_check
          %p523 = pneg %p237
        $region42: #{tpu_custom_call.1} parent=11 // pred_check_branch
          %525 = sbr.rel (%p523) target = $region44
        $region43: #{tpu_custom_call.1} parent=11 // pred_region
          _
        $region44: #{tpu_custom_call.1} parent=11 // pred_fallthru
          _
        // Predicated region
        $region45: #{tpu_custom_call.1} parent=11 // pred_check
          %p526 = pneg %p258
        $region46: #{tpu_custom_call.1} parent=11 // pred_check_branch
          %528 = sbr.rel (%p526) target = $region48
        $region47: #{tpu_custom_call.1} parent=11 // pred_region
          _
        $region48: #{tpu_custom_call.1} parent=11 // pred_fallthru
          _
        // Predicated region
        $region49: #{tpu_custom_call.1} parent=11 // pred_check
          %p529 = pneg %p279
        $region50: #{tpu_custom_call.1} parent=11 // pred_check_branch
          %531 = sbr.rel (%p529) target = $region52
        $region51: #{tpu_custom_call.1} parent=11 // pred_region
          _
        $region52: #{tpu_custom_call.1} parent=11 // pred_fallthru
          _
        // Predicated region
        $region53: #{tpu_custom_call.1} parent=11 // pred_check
          %p532 = pneg %p300
        $region54: #{tpu_custom_call.1} parent=11 // pred_check_branch
          %534 = sbr.rel (%p532) target = $region56
        $region55: #{tpu_custom_call.1} parent=11 // pred_region
          %s536 = ssub.s32 128, 128
          %537 = vsyncadd [#allocation6], %s536
          %s539 = sshll.u32 [#allocation7], 4
          %s540 = int_to_ptr.vmem [resolvable:$true] %s539
          %542 = dma.hbm_to_vmem [thread:$0]  %s10, 128, %s540, [#allocation6]
        $region56: #{tpu_custom_call.1} parent=11 // pred_fallthru
          _
        // Predicated region
        $region57: #{tpu_custom_call.1} parent=11 // pred_check
          %p543 = pneg %p321
        $region58: #{tpu_custom_call.1} parent=11 // pred_check_branch
          %545 = sbr.rel (%p543) target = $region60
        $region59: #{tpu_custom_call.1} parent=11 // pred_region
          %s547 = ssub.s32 128, 128
          %548 = vsyncadd [#allocation9], %s547
          %s550 = sshll.u32 [#allocation8], 4
          %s551 = int_to_ptr.vmem [resolvable:$true] %s550
          %553 = dma.hbm_to_vmem [thread:$0]  %s11, 128, %s551, [#allocation9]
        $region60: #{tpu_custom_call.1} parent=11 // pred_fallthru
          _
        // Predicated region
        $region61: #{tpu_custom_call.1} parent=11 // pred_check
          %p554 = pneg %p342
        $region62: #{tpu_custom_call.1} parent=11 // pred_check_branch
          %556 = sbr.rel (%p554) target = $region64
        $region63: #{tpu_custom_call.1} parent=11 // pred_region
          _
        $region64: #{tpu_custom_call.1} parent=11 // pred_fallthru
          _
        // Predicated region
        $region65: #{tpu_custom_call.1} parent=11 // pred_check
          %p557 = pneg %p363
        $region66: #{tpu_custom_call.1} parent=11 // pred_check_branch
          %559 = sbr.rel (%p557) target = $region68
        $region67: #{tpu_custom_call.1} parent=11 // pred_region
          _
        $region68: #{tpu_custom_call.1} parent=11 // pred_fallthru
          _
        // Predicated region
        $region69: #{tpu_custom_call.1} parent=11 // pred_check
          %p560 = pneg %p384
        $region70: #{tpu_custom_call.1} parent=11 // pred_check_branch
          %562 = sbr.rel (%p560) target = $region72
        $region71: #{tpu_custom_call.1} parent=11 // pred_region
          _
        $region72: #{tpu_custom_call.1} parent=11 // pred_fallthru
          _
      $region12: #{tpu_custom_call.1} parent=5 // pred_fallthru
        _
      %p563 = scmp.lt.s32.totalorder %s32, 2
      // Predicated region
      $region73: #{tpu_custom_call.1} parent=5 // pred_check
        %p564 = pneg %p563
      $region74: #{tpu_custom_call.1} parent=5 // pred_check_branch
        %566 = sbr.rel (%p564) target = $region76
      $region75: #{tpu_custom_call.1} parent=5 // pred_region
        _
      $region76: #{tpu_custom_call.1} parent=5 // pred_fallthru
        _
      %p567 = scmp.le.s32.totalorder 1, %s32
      %p568 = scmp.lt.s32.totalorder %s32, 3
      %p569 = pnand %p567, %p568
      %p570 = pneg %p569
      // Predicated region
      $region77: #{tpu_custom_call.1} parent=5 // pred_check
        _
      $region78: #{tpu_custom_call.1} parent=5 // pred_check_branch
        %572 = sbr.rel (%p569) target = $region80
      $region79: #{tpu_custom_call.1} parent=5 // pred_region
        %s573 = ssub.s32 %s32, 1
        // Predicated region
        $region81: #{tpu_custom_call.1} parent=79 // pred_check
          %p574 = pneg %p70
        $region82: #{tpu_custom_call.1} parent=79 // pred_check_branch
          %576 = sbr.rel (%p574) target = $region84
        $region83: #{tpu_custom_call.1} parent=79 // pred_region
          %577 = dma.done [#allocation3], 256
        $region84: #{tpu_custom_call.1} parent=79 // pred_fallthru
          _
        // Predicated region
        $region85: #{tpu_custom_call.1} parent=79 // pred_check
          %p578 = pneg %p96
        $region86: #{tpu_custom_call.1} parent=79 // pred_check_branch
          %580 = sbr.rel (%p578) target = $region88
        $region87: #{tpu_custom_call.1} parent=79 // pred_region
          %581 = dma.done [#allocation6], 256
        $region88: #{tpu_custom_call.1} parent=79 // pred_fallthru
          _
        // Predicated region
        $region89: #{tpu_custom_call.1} parent=79 // pred_check
          %p582 = pneg %p300
        $region90: #{tpu_custom_call.1} parent=79 // pred_check_branch
          %584 = sbr.rel (%p582) target = $region92
        $region91: #{tpu_custom_call.1} parent=79 // pred_region
          %585 = dma.done [#allocation6], 128
        $region92: #{tpu_custom_call.1} parent=79 // pred_fallthru
          _
        // Predicated region
        $region93: #{tpu_custom_call.1} parent=79 // pred_check
          %p586 = pneg %p321
        $region94: #{tpu_custom_call.1} parent=79 // pred_check_branch
          %588 = sbr.rel (%p586) target = $region96
        $region95: #{tpu_custom_call.1} parent=79 // pred_region
          %589 = dma.done [#allocation9], 128
        $region96: #{tpu_custom_call.1} parent=79 // pred_fallthru
          _
        %p590 = pneg %p70
        %p591 = pneg %p67
        %p592 = pneg %p96
        %p593 = pneg %p93
        %s594 = smul.u32 2, %s41
        %p595 = scmp.lt.s32.totalorder %s594, 1
        %s596 = scalar_select %p595, %s594, 1
        %s597 = smul.addr %s596, 2
        %s598 = smul.addr %s597, 8
        %s599 = scalar_lea.vmem %s2, %s598
        %p600 = pneg %p122
        %p601 = pneg %p119
        %s602 = smul.u32 2, %s41
        %p603 = scmp.lt.s32.totalorder %s602, 1
        %s604 = scalar_select %p603, %s602, 1
        %s605 = smul.addr %s604, 2
        %s606 = smul.addr %s605, 8
        %s607 = scalar_lea.vmem %s3, %s606
        %p608 = pneg %p148
        %p609 = pneg %p145
        %s610 = smul.u32 2, %s41
        %p611 = scmp.lt.s32.totalorder %s610, 1
        %s612 = scalar_select %p611, %s610, 1
        %s613 = smul.addr %s612, 4
        %s614 = smul.addr %s613, 8
        %s615 = scalar_lea.vmem %s4, %s614
        %p616 = pneg %p174
        %p617 = pneg %p171
        %p618 = pneg %p195
        %p619 = pneg %p192
        %p620 = pneg %p216
        %p621 = pneg %p213
        %p622 = pneg %p237
        %p623 = pneg %p234
        %p624 = pneg %p258
        %p625 = pneg %p255
        %p626 = pneg %p279
        %p627 = pneg %p276
        %p628 = pneg %p300
        %p629 = pneg %p297
        %p630 = pneg %p321
        %p631 = pneg %p318
        %p632 = pneg %p342
        %p633 = pneg %p339
        %p634 = pneg %p363
        %p635 = pneg %p360
        %p636 = pneg %p384
        %p637 = pneg %p381
        %p638 = pneg %p412
        %p639 = pneg %p409
        %s640 = sand.u32 %s399, 1
        %s641 = scalar_lea.sflag [#allocation4], %s640
        %s642 = sand.u32 %s399, 1
        %s643 = smul.addr %s642, 32
        %s644 = scalar_lea.vmem [#allocation10], %s643
        %p645 = pneg %p440
        %p646 = pneg %p437
        %s647 = sand.u32 %s427, 1
        %s648 = scalar_lea.sflag [#allocation12], %s647
        %s649 = sand.u32 %s427, 1
        %s650 = smul.addr %s649, 160
        %s651 = scalar_lea.vmem [#allocation11], %s650
        %s652 = smul.u32 2, %s41
        %s653 = smul.u32 2, %s41
        %s654 = smul.u32 2, %s41
        %p655 = scmp.lt.s32.totalorder %s654, 1
        %s656 = scalar_select %p655, %s654, 1
        %s657 = smul.addr %s656, 2
        %s658 = smul.addr %s657, 8
        %s659 = scalar_lea.vmem %s2, %s658
        %s660 = smul.u32 2, %s41
        %s661 = smul.u32 2, %s41
        %p662 = scmp.lt.s32.totalorder %s661, 1
        %s663 = scalar_select %p662, %s661, 1
        %s664 = smul.addr %s663, 2
        %s665 = smul.addr %s664, 8
        %s666 = scalar_lea.vmem %s3, %s665
        %s667 = smul.u32 2, %s41
        %s668 = smul.u32 2, %s41
        %p669 = scmp.lt.s32.totalorder %s668, 1
        %s670 = scalar_select %p669, %s668, 1
        %s671 = smul.addr %s670, 4
        %s672 = smul.addr %s671, 8
        %s673 = scalar_lea.vmem %s4, %s672
        %s674 = smul.u32 2, %s41
        %s675 = smul.u32 2, %s41
        %s676 = smul.u32 2, %s42
        %s677 = smul.u32 2, %s41
        %s678 = smul.u32 2, %s42
        %s679 = smul.u32 %s42, 16
        %v680 = vld [vmem:[#allocation2] sm:$0xff]
        %s681 = scalar_lea.vmem %s5, %s679
        %v682 = vld [vmem:[%s681] sm:$0xff]
        %v683 = vld [vmem:[%s681 + $0x8] sm:$0xff]
        %v684 = vld [vmem:[#allocation7] sm:$0xff]
        %vm685 = vcmask 64512
        %v687 = vsel %vm685, %v682, 0
        %v690 = vsel %vm685, %v683, 0
        %692 = vmatprep.subr.mxu0 0.0
        %693 = vmatpush1.msra.mxu0 %v680
        %694 = vmatprep.subr.mxu0 0.0
        %695 = vmatpush1.msra.mxu0 0.0
        %696 = vmatprep.subr.mxu0 0.0
        %697 = vmatpush1.msra.mxu0 0.0
        %698 = vmatprep.subr.mxu0 0.0
        %699 = vmatpush1.msra.mxu0 0.0
        %700 = vmatprep.subr.mxu0 0.0
        %701 = vmatpush1.msra.mxu0 0.0
        %702 = vmatprep.subr.mxu0 0.0
        %703 = vmatpush1.msra.mxu0 0.0
        %704 = vmatprep.subr.mxu0 0.0
        %705 = vmatpush1.msra.mxu0 0.0
        %706 = vmatprep.subr.mxu0 0.0
        %707 = vmatpush1.msra.mxu0 0.0
        %708 = vmatprep.subr.mxu0 0.0
        %709 = vmatpush1.msra.mxu0 0.0
        %710 = vmatprep.subr.mxu0 0.0
        %711 = vmatpush1.msra.mxu0 0.0
        %712 = vmatprep.subr.mxu0 0.0
        %713 = vmatpush1.msra.mxu0 0.0
        %714 = vmatprep.subr.mxu0 0.0
        %715 = vmatpush1.msra.mxu0 0.0
        %716 = vmatprep.subr.mxu0 0.0
        %717 = vmatpush1.msra.mxu0 0.0
        %718 = vmatprep.subr.mxu0 0.0
        %719 = vmatpush1.msra.mxu0 0.0
        %720 = vmatprep.subr.mxu0 0.0
        %721 = vmatpush1.msra.mxu0 0.0
        %722 = vmatprep.subr.mxu0 0.0
        %723 = vmatpush1.msra.mxu0 0.0
        %724 = vmatprep.subr.mxu0 0.0
        %725 = vmatpush1.msra.mxu0 0.0
        %726 = vmatprep.subr.mxu0 0.0
        %727 = vmatpush1.msra.mxu0 0.0
        %728 = vmatprep.subr.mxu0 0.0
        %729 = vmatpush1.msra.mxu0 0.0
        %730 = vmatprep.subr.mxu0 0.0
        %731 = vmatpush1.msra.mxu0 0.0
        %732 = vmatprep.subr.mxu0 0.0
        %733 = vmatpush1.msra.mxu0 0.0
        %734 = vmatprep.subr.mxu0 0.0
        %735 = vmatpush1.msra.mxu0 0.0
        %736 = vmatprep.subr.mxu0 0.0
        %737 = vmatpush1.msra.mxu0 0.0
        %738 = vmatprep.subr.mxu0 0.0
        %739 = vmatpush1.msra.mxu0 0.0
        %740 = vmatprep.subr.mxu0 0.0
        %741 = vmatpush1.msra.mxu0 0.0
        %742 = vmatprep.subr.mxu0 0.0
        %743 = vmatpush1.msra.mxu0 0.0
        %744 = vmatprep.subr.mxu0 0.0
        %745 = vmatpush1.msra.mxu0 0.0
        %746 = vmatprep.subr.mxu0 0.0
        %747 = vmatpush1.msra.mxu0 0.0
        %748 = vmatprep.subr.mxu0 0.0
        %749 = vmatpush1.msra.mxu0 0.0
        %750 = vmatprep.subr.mxu0 0.0
        %751 = vmatpush1.msra.mxu0 0.0
        %752 = vmatprep.subr.mxu0 0.0
        %753 = vmatpush1.msra.mxu0 0.0
        %754 = vmatprep.subr.mxu0 0.0
        %755 = vmatpush1.msra.mxu0 0.0
        %756 = vmatprep.mubr.f32.mxu0 0.0
        %757 = vmatmul.mubr.f32.gmra.mrb[0].mxu0 %v687
        %v758 = vpop.f32.mrb[0].mxu0
        %v759 = vadd.f32 0.0, %v758
        %v760 = vpop.f32.mrb[0].mxu0
        %761 = vmatprep.mubr.f32.mxu0 0.0
        %762 = vmatmul.mubr.f32.gmra.mrb[0].mxu0 %v690
        %v763 = vpop.f32.mrb[0].mxu0
        %v764 = vadd.f32 0.0, %v763
        %v765 = vpop.f32.mrb[0].mxu0
        %766 = vdwg.mxu0
        %v768 = vsel %vm685, %v759, 0
        %v771 = vsel %vm685, %v764, 0
        %773 = vmatprep.subr.mxu0 0.0
        %774 = vmatpush1.msra.mxu0 %v684
        %775 = vmatprep.subr.mxu0 0.0
        %776 = vmatpush1.msra.mxu0 0.0
        %777 = vmatprep.subr.mxu0 0.0
        %778 = vmatpush1.msra.mxu0 0.0
        %779 = vmatprep.subr.mxu0 0.0
        %780 = vmatpush1.msra.mxu0 0.0
        %781 = vmatprep.subr.mxu0 0.0
        %782 = vmatpush1.msra.mxu0 0.0
        %783 = vmatprep.subr.mxu0 0.0
        %784 = vmatpush1.msra.mxu0 0.0
        %785 = vmatprep.subr.mxu0 0.0
        %786 = vmatpush1.msra.mxu0 0.0
        %787 = vmatprep.subr.mxu0 0.0
        %788 = vmatpush1.msra.mxu0 0.0
        %789 = vmatprep.subr.mxu0 0.0
        %790 = vmatpush1.msra.mxu0 0.0
        %791 = vmatprep.subr.mxu0 0.0
        %792 = vmatpush1.msra.mxu0 0.0
        %793 = vmatprep.subr.mxu0 0.0
        %794 = vmatpush1.msra.mxu0 0.0
        %795 = vmatprep.subr.mxu0 0.0
        %796 = vmatpush1.msra.mxu0 0.0
        %797 = vmatprep.subr.mxu0 0.0
        %798 = vmatpush1.msra.mxu0 0.0
        %799 = vmatprep.subr.mxu0 0.0
        %800 = vmatpush1.msra.mxu0 0.0
        %801 = vmatprep.subr.mxu0 0.0
        %802 = vmatpush1.msra.mxu0 0.0
        %803 = vmatprep.subr.mxu0 0.0
        %804 = vmatpush1.msra.mxu0 0.0
        %805 = vmatprep.subr.mxu0 0.0
        %806 = vmatpush1.msra.mxu0 0.0
        %807 = vmatprep.subr.mxu0 0.0
        %808 = vmatpush1.msra.mxu0 0.0
        %809 = vmatprep.subr.mxu0 0.0
        %810 = vmatpush1.msra.mxu0 0.0
        %811 = vmatprep.subr.mxu0 0.0
        %812 = vmatpush1.msra.mxu0 0.0
        %813 = vmatprep.subr.mxu0 0.0
        %814 = vmatpush1.msra.mxu0 0.0
        %815 = vmatprep.subr.mxu0 0.0
        %816 = vmatpush1.msra.mxu0 0.0
        %817 = vmatprep.subr.mxu0 0.0
        %818 = vmatpush1.msra.mxu0 0.0
        %819 = vmatprep.subr.mxu0 0.0
        %820 = vmatpush1.msra.mxu0 0.0
        %821 = vmatprep.subr.mxu0 0.0
        %822 = vmatpush1.msra.mxu0 0.0
        %823 = vmatprep.subr.mxu0 0.0
        %824 = vmatpush1.msra.mxu0 0.0
        %825 = vmatprep.subr.mxu0 0.0
        %826 = vmatpush1.msra.mxu0 0.0
        %827 = vmatprep.subr.mxu0 0.0
        %828 = vmatpush1.msra.mxu0 0.0
        %829 = vmatprep.subr.mxu0 0.0
        %830 = vmatpush1.msra.mxu0 0.0
        %831 = vmatprep.subr.mxu0 0.0
        %832 = vmatpush1.msra.mxu0 0.0
        %833 = vmatprep.subr.mxu0 0.0
        %834 = vmatpush1.msra.mxu0 0.0
        %835 = vmatprep.subr.mxu0 0.0
        %836 = vmatpush1.msra.mxu0 0.0
        %837 = vmatprep.mubr.f32.mxu0 0.0
        %838 = vmatmul.mubr.f32.gmra.mrb[0].mxu0 %v768
        %v839 = vpop.f32.mrb[0].mxu0
        %v840 = vadd.f32 0.0, %v839
        %v841 = vpop.f32.mrb[0].mxu0
        %842 = vmatprep.mubr.f32.mxu0 0.0
        %843 = vmatmul.mubr.f32.gmra.mrb[0].mxu0 %v771
        %v844 = vpop.f32.mrb[0].mxu0
        %v845 = vadd.f32 0.0, %v844
        %v846 = vpop.f32.mrb[0].mxu0
        %847 = vdwg.mxu0
        %vm848 = vcmask 261120
        %849 = vst.msk [vmem:[%s651] sm:$0xff] %vm848, %v840
        %850 = vst.msk [vmem:[%s651 + $0x8] sm:$0xff] %vm848, %v845
        %v851 = vld [vmem:[#allocation5] sm:$0xff]
        %s852 = scalar_lea.vmem %s6, %s679
        %v853 = vld [vmem:[%s852] sm:$0xff]
        %v854 = vld [vmem:[%s852 + $0x8] sm:$0xff]
        %v855 = vld [vmem:[#allocation8] sm:$0xff]
        %v857 = vsel %vm685, %v853, 0
        %v860 = vsel %vm685, %v854, 0
        %862 = vmatprep.subr.mxu0 0.0
        %863 = vmatpush1.msra.mxu0 %v851
        %864 = vmatprep.subr.mxu0 0.0
        %865 = vmatpush1.msra.mxu0 0.0
        %866 = vmatprep.subr.mxu0 0.0
        %867 = vmatpush1.msra.mxu0 0.0
        %868 = vmatprep.subr.mxu0 0.0
        %869 = vmatpush1.msra.mxu0 0.0
        %870 = vmatprep.subr.mxu0 0.0
        %871 = vmatpush1.msra.mxu0 0.0
        %872 = vmatprep.subr.mxu0 0.0
        %873 = vmatpush1.msra.mxu0 0.0
        %874 = vmatprep.subr.mxu0 0.0
        %875 = vmatpush1.msra.mxu0 0.0
        %876 = vmatprep.subr.mxu0 0.0
        %877 = vmatpush1.msra.mxu0 0.0
        %878 = vmatprep.subr.mxu0 0.0
        %879 = vmatpush1.msra.mxu0 0.0
        %880 = vmatprep.subr.mxu0 0.0
        %881 = vmatpush1.msra.mxu0 0.0
        %882 = vmatprep.subr.mxu0 0.0
        %883 = vmatpush1.msra.mxu0 0.0
        %884 = vmatprep.subr.mxu0 0.0
        %885 = vmatpush1.msra.mxu0 0.0
        %886 = vmatprep.subr.mxu0 0.0
        %887 = vmatpush1.msra.mxu0 0.0
        %888 = vmatprep.subr.mxu0 0.0
        %889 = vmatpush1.msra.mxu0 0.0
        %890 = vmatprep.subr.mxu0 0.0
        %891 = vmatpush1.msra.mxu0 0.0
        %892 = vmatprep.subr.mxu0 0.0
        %893 = vmatpush1.msra.mxu0 0.0
        %894 = vmatprep.subr.mxu0 0.0
        %895 = vmatpush1.msra.mxu0 0.0
        %896 = vmatprep.subr.mxu0 0.0
        %897 = vmatpush1.msra.mxu0 0.0
        %898 = vmatprep.subr.mxu0 0.0
        %899 = vmatpush1.msra.mxu0 0.0
        %900 = vmatprep.subr.mxu0 0.0
        %901 = vmatpush1.msra.mxu0 0.0
        %902 = vmatprep.subr.mxu0 0.0
        %903 = vmatpush1.msra.mxu0 0.0
        %904 = vmatprep.subr.mxu0 0.0
        %905 = vmatpush1.msra.mxu0 0.0
        %906 = vmatprep.subr.mxu0 0.0
        %907 = vmatpush1.msra.mxu0 0.0
        %908 = vmatprep.subr.mxu0 0.0
        %909 = vmatpush1.msra.mxu0 0.0
        %910 = vmatprep.subr.mxu0 0.0
        %911 = vmatpush1.msra.mxu0 0.0
        %912 = vmatprep.subr.mxu0 0.0
        %913 = vmatpush1.msra.mxu0 0.0
        %914 = vmatprep.subr.mxu0 0.0
        %915 = vmatpush1.msra.mxu0 0.0
        %916 = vmatprep.subr.mxu0 0.0
        %917 = vmatpush1.msra.mxu0 0.0
        %918 = vmatprep.subr.mxu0 0.0
        %919 = vmatpush1.msra.mxu0 0.0
        %920 = vmatprep.subr.mxu0 0.0
        %921 = vmatpush1.msra.mxu0 0.0
        %922 = vmatprep.subr.mxu0 0.0
        %923 = vmatpush1.msra.mxu0 0.0
        %924 = vmatprep.subr.mxu0 0.0
        %925 = vmatpush1.msra.mxu0 0.0
        %926 = vmatprep.mubr.f32.mxu0 0.0
        %927 = vmatmul.mubr.f32.gmra.mrb[0].mxu0 %v857
        %v928 = vpop.f32.mrb[0].mxu0
        %v929 = vadd.f32 0.0, %v928
        %v930 = vpop.f32.mrb[0].mxu0
        %931 = vmatprep.mubr.f32.mxu0 0.0
        %932 = vmatmul.mubr.f32.gmra.mrb[0].mxu0 %v860
        %v933 = vpop.f32.mrb[0].mxu0
        %v934 = vadd.f32 0.0, %v933
        %v935 = vpop.f32.mrb[0].mxu0
        %936 = vdwg.mxu0
        %v938 = vsel %vm685, %v929, 0
        %v941 = vsel %vm685, %v934, 0
        %943 = vmatprep.subr.mxu0 0.0
        %944 = vmatpush1.msra.mxu0 %v855
        %945 = vmatprep.subr.mxu0 0.0
        %946 = vmatpush1.msra.mxu0 0.0
        %947 = vmatprep.subr.mxu0 0.0
        %948 = vmatpush1.msra.mxu0 0.0
        %949 = vmatprep.subr.mxu0 0.0
        %950 = vmatpush1.msra.mxu0 0.0
        %951 = vmatprep.subr.mxu0 0.0
        %952 = vmatpush1.msra.mxu0 0.0
        %953 = vmatprep.subr.mxu0 0.0
        %954 = vmatpush1.msra.mxu0 0.0
        %955 = vmatprep.subr.mxu0 0.0
        %956 = vmatpush1.msra.mxu0 0.0
        %957 = vmatprep.subr.mxu0 0.0
        %958 = vmatpush1.msra.mxu0 0.0
        %959 = vmatprep.subr.mxu0 0.0
        %960 = vmatpush1.msra.mxu0 0.0
        %961 = vmatprep.subr.mxu0 0.0
        %962 = vmatpush1.msra.mxu0 0.0
        %963 = vmatprep.subr.mxu0 0.0
        %964 = vmatpush1.msra.mxu0 0.0
        %965 = vmatprep.subr.mxu0 0.0
        %966 = vmatpush1.msra.mxu0 0.0
        %967 = vmatprep.subr.mxu0 0.0
        %968 = vmatpush1.msra.mxu0 0.0
        %969 = vmatprep.subr.mxu0 0.0
        %970 = vmatpush1.msra.mxu0 0.0
        %971 = vmatprep.subr.mxu0 0.0
        %972 = vmatpush1.msra.mxu0 0.0
        %973 = vmatprep.subr.mxu0 0.0
        %974 = vmatpush1.msra.mxu0 0.0
        %975 = vmatprep.subr.mxu0 0.0
        %976 = vmatpush1.msra.mxu0 0.0
        %977 = vmatprep.subr.mxu0 0.0
        %978 = vmatpush1.msra.mxu0 0.0
        %979 = vmatprep.subr.mxu0 0.0
        %980 = vmatpush1.msra.mxu0 0.0
        %981 = vmatprep.subr.mxu0 0.0
        %982 = vmatpush1.msra.mxu0 0.0
        %983 = vmatprep.subr.mxu0 0.0
        %984 = vmatpush1.msra.mxu0 0.0
        %985 = vmatprep.subr.mxu0 0.0
        %986 = vmatpush1.msra.mxu0 0.0
        %987 = vmatprep.subr.mxu0 0.0
        %988 = vmatpush1.msra.mxu0 0.0
        %989 = vmatprep.subr.mxu0 0.0
        %990 = vmatpush1.msra.mxu0 0.0
        %991 = vmatprep.subr.mxu0 0.0
        %992 = vmatpush1.msra.mxu0 0.0
        %993 = vmatprep.subr.mxu0 0.0
        %994 = vmatpush1.msra.mxu0 0.0
        %995 = vmatprep.subr.mxu0 0.0
        %996 = vmatpush1.msra.mxu0 0.0
        %997 = vmatprep.subr.mxu0 0.0
        %998 = vmatpush1.msra.mxu0 0.0
        %999 = vmatprep.subr.mxu0 0.0
        %1000 = vmatpush1.msra.mxu0 0.0
        %1001 = vmatprep.subr.mxu0 0.0
        %1002 = vmatpush1.msra.mxu0 0.0
        %1003 = vmatprep.subr.mxu0 0.0
        %1004 = vmatpush1.msra.mxu0 0.0
        %1005 = vmatprep.subr.mxu0 0.0
        %1006 = vmatpush1.msra.mxu0 0.0
        %1007 = vmatprep.mubr.f32.mxu0 0.0
        %1008 = vmatmul.mubr.f32.gmra.mrb[0].mxu0 %v938
        %v1009 = vpop.f32.mrb[0].mxu0
        %v1010 = vadd.f32 0.0, %v1009
        %v1011 = vpop.f32.mrb[0].mxu0
        %1012 = vmatprep.mubr.f32.mxu0 0.0
        %1013 = vmatmul.mubr.f32.gmra.mrb[0].mxu0 %v941
        %v1014 = vpop.f32.mrb[0].mxu0
        %v1015 = vadd.f32 0.0, %v1014
        %v1016 = vpop.f32.mrb[0].mxu0
        %1017 = vdwg.mxu0
        %v1018 = vmul.f32 %v1010, 2.0
        %v1019 = vmul.f32 %v1015, 2.0
        %v1020 = vadd.f32 %v840, %v1018
        %v1021 = vadd.f32 %v845, %v1019
        %s1022 = scalar_lea.vmem %s651, 16 [#allocation11]
        %1023 = vst.msk [vmem:[%s1022] sm:$0xff] %vm848, %v1010
        %1024 = vst.msk [vmem:[%s1022 + $0x8] sm:$0xff] %vm848, %v1015
        %v1025 = vld [vmem:[%s659] sm:$0xff]
        %v1026 = vld [vmem:[%s659 + $0x8] sm:$0xff]
        %s1027 = scalar_lea.vmem %s7, %s679
        %v1028 = vld [vmem:[%s1027] sm:$0xff]
        %v1029 = vld [vmem:[%s1027 + $0x8] sm:$0xff]
        %v1030 = vld [vmem:[%s12] sm:$0xff]
        %v1031 = vld [vmem:[%s12 + $0x8] sm:$0xff]
        %vm1032 = vcmask 130048
        %v1034 = vsel %vm1032, %v1028, 0
        %v1037 = vsel %vm1032, %v1029, 0
        %1039 = vmatprep.subr.mxu0 0.0
        %1040 = vmatpush1.msra.mxu0 %v1025
        %1041 = vmatprep.subr.mxu0 0.0
        %1042 = vmatpush1.msra.mxu0 %v1026
        %1043 = vmatprep.subr.mxu0 0.0
        %1044 = vmatpush1.msra.mxu0 0.0
        %1045 = vmatprep.subr.mxu0 0.0
        %1046 = vmatpush1.msra.mxu0 0.0
        %1047 = vmatprep.subr.mxu0 0.0
        %1048 = vmatpush1.msra.mxu0 0.0
        %1049 = vmatprep.subr.mxu0 0.0
        %1050 = vmatpush1.msra.mxu0 0.0
        %1051 = vmatprep.subr.mxu0 0.0
        %1052 = vmatpush1.msra.mxu0 0.0
        %1053 = vmatprep.subr.mxu0 0.0
        %1054 = vmatpush1.msra.mxu0 0.0
        %1055 = vmatprep.subr.mxu0 0.0
        %1056 = vmatpush1.msra.mxu0 0.0
        %1057 = vmatprep.subr.mxu0 0.0
        %1058 = vmatpush1.msra.mxu0 0.0
        %1059 = vmatprep.subr.mxu0 0.0
        %1060 = vmatpush1.msra.mxu0 0.0
        %1061 = vmatprep.subr.mxu0 0.0
        %1062 = vmatpush1.msra.mxu0 0.0
        %1063 = vmatprep.subr.mxu0 0.0
        %1064 = vmatpush1.msra.mxu0 0.0
        %1065 = vmatprep.subr.mxu0 0.0
        %1066 = vmatpush1.msra.mxu0 0.0
        %1067 = vmatprep.subr.mxu0 0.0
        %1068 = vmatpush1.msra.mxu0 0.0
        %1069 = vmatprep.subr.mxu0 0.0
        %1070 = vmatpush1.msra.mxu0 0.0
        %1071 = vmatprep.subr.mxu0 0.0
        %1072 = vmatpush1.msra.mxu0 0.0
        %1073 = vmatprep.subr.mxu0 0.0
        %1074 = vmatpush1.msra.mxu0 0.0
        %1075 = vmatprep.subr.mxu0 0.0
        %1076 = vmatpush1.msra.mxu0 0.0
        %1077 = vmatprep.subr.mxu0 0.0
        %1078 = vmatpush1.msra.mxu0 0.0
        %1079 = vmatprep.subr.mxu0 0.0
        %1080 = vmatpush1.msra.mxu0 0.0
        %1081 = vmatprep.subr.mxu0 0.0
        %1082 = vmatpush1.msra.mxu0 0.0
        %1083 = vmatprep.subr.mxu0 0.0
        %1084 = vmatpush1.msra.mxu0 0.0
        %1085 = vmatprep.subr.mxu0 0.0
        %1086 = vmatpush1.msra.mxu0 0.0
        %1087 = vmatprep.subr.mxu0 0.0
        %1088 = vmatpush1.msra.mxu0 0.0
        %1089 = vmatprep.subr.mxu0 0.0
        %1090 = vmatpush1.msra.mxu0 0.0
        %1091 = vmatprep.subr.mxu0 0.0
        %1092 = vmatpush1.msra.mxu0 0.0
        %1093 = vmatprep.subr.mxu0 0.0
        %1094 = vmatpush1.msra.mxu0 0.0
        %1095 = vmatprep.subr.mxu0 0.0
        %1096 = vmatpush1.msra.mxu0 0.0
        %1097 = vmatprep.subr.mxu0 0.0
        %1098 = vmatpush1.msra.mxu0 0.0
        %1099 = vmatprep.subr.mxu0 0.0
        %1100 = vmatpush1.msra.mxu0 0.0
        %1101 = vmatprep.subr.mxu0 0.0
        %1102 = vmatpush1.msra.mxu0 0.0
        %1103 = vmatprep.mubr.f32.mxu0 0.0
        %1104 = vmatmul.mubr.f32.gmra.mrb[0].mxu0 %v1034
        %v1105 = vpop.f32.mrb[0].mxu0
        %v1106 = vadd.f32 0.0, %v1105
        %v1107 = vpop.f32.mrb[0].mxu0
        %1108 = vmatprep.mubr.f32.mxu0 0.0
        %1109 = vmatmul.mubr.f32.gmra.mrb[0].mxu0 %v1037
        %v1110 = vpop.f32.mrb[0].mxu0
        %v1111 = vadd.f32 0.0, %v1110
        %v1112 = vpop.f32.mrb[0].mxu0
        %1113 = vdwg.mxu0
        %v1115 = vsel %vm1032, %v1106, 0
        %v1118 = vsel %vm1032, %v1111, 0
        %1120 = vmatprep.subr.mxu0 0.0
        %1121 = vmatpush1.msra.mxu0 %v1030
        %1122 = vmatprep.subr.mxu0 0.0
        %1123 = vmatpush1.msra.mxu0 %v1031
        %1124 = vmatprep.subr.mxu0 0.0
        %1125 = vmatpush1.msra.mxu0 0.0
        %1126 = vmatprep.subr.mxu0 0.0
        %1127 = vmatpush1.msra.mxu0 0.0
        %1128 = vmatprep.subr.mxu0 0.0
        %1129 = vmatpush1.msra.mxu0 0.0
        %1130 = vmatprep.subr.mxu0 0.0
        %1131 = vmatpush1.msra.mxu0 0.0
        %1132 = vmatprep.subr.mxu0 0.0
        %1133 = vmatpush1.msra.mxu0 0.0
        %1134 = vmatprep.subr.mxu0 0.0
        %1135 = vmatpush1.msra.mxu0 0.0
        %1136 = vmatprep.subr.mxu0 0.0
        %1137 = vmatpush1.msra.mxu0 0.0
        %1138 = vmatprep.subr.mxu0 0.0
        %1139 = vmatpush1.msra.mxu0 0.0
        %1140 = vmatprep.subr.mxu0 0.0
        %1141 = vmatpush1.msra.mxu0 0.0
        %1142 = vmatprep.subr.mxu0 0.0
        %1143 = vmatpush1.msra.mxu0 0.0
        %1144 = vmatprep.subr.mxu0 0.0
        %1145 = vmatpush1.msra.mxu0 0.0
        %1146 = vmatprep.subr.mxu0 0.0
        %1147 = vmatpush1.msra.mxu0 0.0
        %1148 = vmatprep.subr.mxu0 0.0
        %1149 = vmatpush1.msra.mxu0 0.0
        %1150 = vmatprep.subr.mxu0 0.0
        %1151 = vmatpush1.msra.mxu0 0.0
        %1152 = vmatprep.subr.mxu0 0.0
        %1153 = vmatpush1.msra.mxu0 0.0
        %1154 = vmatprep.subr.mxu0 0.0
        %1155 = vmatpush1.msra.mxu0 0.0
        %1156 = vmatprep.subr.mxu0 0.0
        %1157 = vmatpush1.msra.mxu0 0.0
        %1158 = vmatprep.subr.mxu0 0.0
        %1159 = vmatpush1.msra.mxu0 0.0
        %1160 = vmatprep.subr.mxu0 0.0
        %1161 = vmatpush1.msra.mxu0 0.0
        %1162 = vmatprep.subr.mxu0 0.0
        %1163 = vmatpush1.msra.mxu0 0.0
        %1164 = vmatprep.subr.mxu0 0.0
        %1165 = vmatpush1.msra.mxu0 0.0
        %1166 = vmatprep.subr.mxu0 0.0
        %1167 = vmatpush1.msra.mxu0 0.0
        %1168 = vmatprep.subr.mxu0 0.0
        %1169 = vmatpush1.msra.mxu0 0.0
        %1170 = vmatprep.subr.mxu0 0.0
        %1171 = vmatpush1.msra.mxu0 0.0
        %1172 = vmatprep.subr.mxu0 0.0
        %1173 = vmatpush1.msra.mxu0 0.0
        %1174 = vmatprep.subr.mxu0 0.0
        %1175 = vmatpush1.msra.mxu0 0.0
        %1176 = vmatprep.subr.mxu0 0.0
        %1177 = vmatpush1.msra.mxu0 0.0
        %1178 = vmatprep.subr.mxu0 0.0
        %1179 = vmatpush1.msra.mxu0 0.0
        %1180 = vmatprep.subr.mxu0 0.0
        %1181 = vmatpush1.msra.mxu0 0.0
        %1182 = vmatprep.subr.mxu0 0.0
        %1183 = vmatpush1.msra.mxu0 0.0
        %1184 = vmatprep.mubr.f32.mxu0 0.0
        %1185 = vmatmul.mubr.f32.gmra.mrb[0].mxu0 %v1115
        %v1186 = vpop.f32.mrb[0].mxu0
        %v1187 = vadd.f32 0.0, %v1186
        %v1188 = vpop.f32.mrb[0].mxu0
        %1189 = vmatprep.mubr.f32.mxu0 0.0
        %1190 = vmatmul.mubr.f32.gmra.mrb[0].mxu0 %v1118
        %v1191 = vpop.f32.mrb[0].mxu0
        %v1192 = vadd.f32 0.0, %v1191
        %v1193 = vpop.f32.mrb[0].mxu0
        %1194 = vdwg.mxu0
        %v1195 = vmul.f32 %v1187, 3.0
        %v1196 = vmul.f32 %v1192, 3.0
        %v1197 = vadd.f32 %v1020, %v1195
        %v1198 = vadd.f32 %v1021, %v1196
        %s1199 = scalar_lea.vmem %s651, 32 [#allocation11]
        %1200 = vst.msk [vmem:[%s1199] sm:$0xff] %vm848, %v1187
        %1201 = vst.msk [vmem:[%s1199 + $0x8] sm:$0xff] %vm848, %v1192
        %v1202 = vld [vmem:[%s666] sm:$0xff]
        %v1203 = vld [vmem:[%s666 + $0x8] sm:$0xff]
        %s1204 = scalar_lea.vmem %s8, %s679
        %v1205 = vld [vmem:[%s1204] sm:$0xff]
        %v1206 = vld [vmem:[%s1204 + $0x8] sm:$0xff]
        %v1207 = vld [vmem:[%s13] sm:$0xff]
        %v1208 = vld [vmem:[%s13 + $0x8] sm:$0xff]
        %v1210 = vsel %vm1032, %v1205, 0
        %v1213 = vsel %vm1032, %v1206, 0
        %1215 = vmatprep.subr.mxu0 0.0
        %1216 = vmatpush1.msra.mxu0 %v1202
        %1217 = vmatprep.subr.mxu0 0.0
        %1218 = vmatpush1.msra.mxu0 %v1203
        %1219 = vmatprep.subr.mxu0 0.0
        %1220 = vmatpush1.msra.mxu0 0.0
        %1221 = vmatprep.subr.mxu0 0.0
        %1222 = vmatpush1.msra.mxu0 0.0
        %1223 = vmatprep.subr.mxu0 0.0
        %1224 = vmatpush1.msra.mxu0 0.0
        %1225 = vmatprep.subr.mxu0 0.0
        %1226 = vmatpush1.msra.mxu0 0.0
        %1227 = vmatprep.subr.mxu0 0.0
        %1228 = vmatpush1.msra.mxu0 0.0
        %1229 = vmatprep.subr.mxu0 0.0
        %1230 = vmatpush1.msra.mxu0 0.0
        %1231 = vmatprep.subr.mxu0 0.0
        %1232 = vmatpush1.msra.mxu0 0.0
        %1233 = vmatprep.subr.mxu0 0.0
        %1234 = vmatpush1.msra.mxu0 0.0
        %1235 = vmatprep.subr.mxu0 0.0
        %1236 = vmatpush1.msra.mxu0 0.0
        %1237 = vmatprep.subr.mxu0 0.0
        %1238 = vmatpush1.msra.mxu0 0.0
        %1239 = vmatprep.subr.mxu0 0.0
        %1240 = vmatpush1.msra.mxu0 0.0
        %1241 = vmatprep.subr.mxu0 0.0
        %1242 = vmatpush1.msra.mxu0 0.0
        %1243 = vmatprep.subr.mxu0 0.0
        %1244 = vmatpush1.msra.mxu0 0.0
        %1245 = vmatprep.subr.mxu0 0.0
        %1246 = vmatpush1.msra.mxu0 0.0
        %1247 = vmatprep.subr.mxu0 0.0
        %1248 = vmatpush1.msra.mxu0 0.0
        %1249 = vmatprep.subr.mxu0 0.0
        %1250 = vmatpush1.msra.mxu0 0.0
        %1251 = vmatprep.subr.mxu0 0.0
        %1252 = vmatpush1.msra.mxu0 0.0
        %1253 = vmatprep.subr.mxu0 0.0
        %1254 = vmatpush1.msra.mxu0 0.0
        %1255 = vmatprep.subr.mxu0 0.0
        %1256 = vmatpush1.msra.mxu0 0.0
        %1257 = vmatprep.subr.mxu0 0.0
        %1258 = vmatpush1.msra.mxu0 0.0
        %1259 = vmatprep.subr.mxu0 0.0
        %1260 = vmatpush1.msra.mxu0 0.0
        %1261 = vmatprep.subr.mxu0 0.0
        %1262 = vmatpush1.msra.mxu0 0.0
        %1263 = vmatprep.subr.mxu0 0.0
        %1264 = vmatpush1.msra.mxu0 0.0
        %1265 = vmatprep.subr.mxu0 0.0
        %1266 = vmatpush1.msra.mxu0 0.0
        %1267 = vmatprep.subr.mxu0 0.0
        %1268 = vmatpush1.msra.mxu0 0.0
        %1269 = vmatprep.subr.mxu0 0.0
        %1270 = vmatpush1.msra.mxu0 0.0
        %1271 = vmatprep.subr.mxu0 0.0
        %1272 = vmatpush1.msra.mxu0 0.0
        %1273 = vmatprep.subr.mxu0 0.0
        %1274 = vmatpush1.msra.mxu0 0.0
        %1275 = vmatprep.subr.mxu0 0.0
        %1276 = vmatpush1.msra.mxu0 0.0
        %1277 = vmatprep.subr.mxu0 0.0
        %1278 = vmatpush1.msra.mxu0 0.0
        %1279 = vmatprep.mubr.f32.mxu0 0.0
        %1280 = vmatmul.mubr.f32.gmra.mrb[0].mxu0 %v1210
        %v1281 = vpop.f32.mrb[0].mxu0
        %v1282 = vadd.f32 0.0, %v1281
        %v1283 = vpop.f32.mrb[0].mxu0
        %1284 = vmatprep.mubr.f32.mxu0 0.0
        %1285 = vmatmul.mubr.f32.gmra.mrb[0].mxu0 %v1213
        %v1286 = vpop.f32.mrb[0].mxu0
        %v1287 = vadd.f32 0.0, %v1286
        %v1288 = vpop.f32.mrb[0].mxu0
        %1289 = vdwg.mxu0
        %v1291 = vsel %vm1032, %v1282, 0
        %v1294 = vsel %vm1032, %v1287, 0
        %1296 = vmatprep.subr.mxu0 0.0
        %1297 = vmatpush1.msra.mxu0 %v1207
        %1298 = vmatprep.subr.mxu0 0.0
        %1299 = vmatpush1.msra.mxu0 %v1208
        %1300 = vmatprep.subr.mxu0 0.0
        %1301 = vmatpush1.msra.mxu0 0.0
        %1302 = vmatprep.subr.mxu0 0.0
        %1303 = vmatpush1.msra.mxu0 0.0
        %1304 = vmatprep.subr.mxu0 0.0
        %1305 = vmatpush1.msra.mxu0 0.0
        %1306 = vmatprep.subr.mxu0 0.0
        %1307 = vmatpush1.msra.mxu0 0.0
        %1308 = vmatprep.subr.mxu0 0.0
        %1309 = vmatpush1.msra.mxu0 0.0
        %1310 = vmatprep.subr.mxu0 0.0
        %1311 = vmatpush1.msra.mxu0 0.0
        %1312 = vmatprep.subr.mxu0 0.0
        %1313 = vmatpush1.msra.mxu0 0.0
        %1314 = vmatprep.subr.mxu0 0.0
        %1315 = vmatpush1.msra.mxu0 0.0
        %1316 = vmatprep.subr.mxu0 0.0
        %1317 = vmatpush1.msra.mxu0 0.0
        %1318 = vmatprep.subr.mxu0 0.0
        %1319 = vmatpush1.msra.mxu0 0.0
        %1320 = vmatprep.subr.mxu0 0.0
        %1321 = vmatpush1.msra.mxu0 0.0
        %1322 = vmatprep.subr.mxu0 0.0
        %1323 = vmatpush1.msra.mxu0 0.0
        %1324 = vmatprep.subr.mxu0 0.0
        %1325 = vmatpush1.msra.mxu0 0.0
        %1326 = vmatprep.subr.mxu0 0.0
        %1327 = vmatpush1.msra.mxu0 0.0
        %1328 = vmatprep.subr.mxu0 0.0
        %1329 = vmatpush1.msra.mxu0 0.0
        %1330 = vmatprep.subr.mxu0 0.0
        %1331 = vmatpush1.msra.mxu0 0.0
        %1332 = vmatprep.subr.mxu0 0.0
        %1333 = vmatpush1.msra.mxu0 0.0
        %1334 = vmatprep.subr.mxu0 0.0
        %1335 = vmatpush1.msra.mxu0 0.0
        %1336 = vmatprep.subr.mxu0 0.0
        %1337 = vmatpush1.msra.mxu0 0.0
        %1338 = vmatprep.subr.mxu0 0.0
        %1339 = vmatpush1.msra.mxu0 0.0
        %1340 = vmatprep.subr.mxu0 0.0
        %1341 = vmatpush1.msra.mxu0 0.0
        %1342 = vmatprep.subr.mxu0 0.0
        %1343 = vmatpush1.msra.mxu0 0.0
        %1344 = vmatprep.subr.mxu0 0.0
        %1345 = vmatpush1.msra.mxu0 0.0
        %1346 = vmatprep.subr.mxu0 0.0
        %1347 = vmatpush1.msra.mxu0 0.0
        %1348 = vmatprep.subr.mxu0 0.0
        %1349 = vmatpush1.msra.mxu0 0.0
        %1350 = vmatprep.subr.mxu0 0.0
        %1351 = vmatpush1.msra.mxu0 0.0
        %1352 = vmatprep.subr.mxu0 0.0
        %1353 = vmatpush1.msra.mxu0 0.0
        %1354 = vmatprep.subr.mxu0 0.0
        %1355 = vmatpush1.msra.mxu0 0.0
        %1356 = vmatprep.subr.mxu0 0.0
        %1357 = vmatpush1.msra.mxu0 0.0
        %1358 = vmatprep.subr.mxu0 0.0
        %1359 = vmatpush1.msra.mxu0 0.0
        %1360 = vmatprep.mubr.f32.mxu0 0.0
        %1361 = vmatmul.mubr.f32.gmra.mrb[0].mxu0 %v1291
        %v1362 = vpop.f32.mrb[0].mxu0
        %v1363 = vadd.f32 0.0, %v1362
        %v1364 = vpop.f32.mrb[0].mxu0
        %1365 = vmatprep.mubr.f32.mxu0 0.0
        %1366 = vmatmul.mubr.f32.gmra.mrb[0].mxu0 %v1294
        %v1367 = vpop.f32.mrb[0].mxu0
        %v1368 = vadd.f32 0.0, %v1367
        %v1369 = vpop.f32.mrb[0].mxu0
        %1370 = vdwg.mxu0
        %v1371 = vmul.f32 %v1363, 4.0
        %v1372 = vmul.f32 %v1368, 4.0
        %v1373 = vadd.f32 %v1197, %v1371
        %v1374 = vadd.f32 %v1198, %v1372
        %s1375 = scalar_lea.vmem %s651, 48 [#allocation11]
        %1376 = vst.msk [vmem:[%s1375] sm:$0xff] %vm848, %v1363
        %1377 = vst.msk [vmem:[%s1375 + $0x8] sm:$0xff] %vm848, %v1368
        %v1378 = vld [vmem:[%s673] sm:$0xff]
        %v1379 = vld [vmem:[%s673 + $0x8] sm:$0xff]
        %v1380 = vld [vmem:[%s673 + $0x10] sm:$0xff]
        %v1381 = vld [vmem:[%s673 + $0x18] sm:$0xff]
        %s1382 = scalar_lea.vmem %s9, %s679
        %v1383 = vld [vmem:[%s1382] sm:$0xff]
        %v1384 = vld [vmem:[%s1382 + $0x8] sm:$0xff]
        %v1385 = vld [vmem:[%s14] sm:$0xff]
        %v1386 = vld [vmem:[%s14 + $0x8] sm:$0xff]
        %v1387 = vld [vmem:[%s14 + $0x10] sm:$0xff]
        %v1388 = vld [vmem:[%s14 + $0x18] sm:$0xff]
        %v1390 = vsel %vm848, %v1383, 0
        %v1393 = vsel %vm848, %v1384, 0
        %1395 = vmatprep.subr.mxu0 0.0
        %1396 = vmatpush1.msra.mxu0 %v1378
        %1397 = vmatprep.subr.mxu0 0.0
        %1398 = vmatpush1.msra.mxu0 %v1379
        %1399 = vmatprep.subr.mxu0 0.0
        %1400 = vmatpush1.msra.mxu0 %v1380
        %1401 = vmatprep.subr.mxu0 0.0
        %1402 = vmatpush1.msra.mxu0 %v1381
        %1403 = vmatprep.subr.mxu0 0.0
        %1404 = vmatpush1.msra.mxu0 0.0
        %1405 = vmatprep.subr.mxu0 0.0
        %1406 = vmatpush1.msra.mxu0 0.0
        %1407 = vmatprep.subr.mxu0 0.0
        %1408 = vmatpush1.msra.mxu0 0.0
        %1409 = vmatprep.subr.mxu0 0.0
        %1410 = vmatpush1.msra.mxu0 0.0
        %1411 = vmatprep.subr.mxu0 0.0
        %1412 = vmatpush1.msra.mxu0 0.0
        %1413 = vmatprep.subr.mxu0 0.0
        %1414 = vmatpush1.msra.mxu0 0.0
        %1415 = vmatprep.subr.mxu0 0.0
        %1416 = vmatpush1.msra.mxu0 0.0
        %1417 = vmatprep.subr.mxu0 0.0
        %1418 = vmatpush1.msra.mxu0 0.0
        %1419 = vmatprep.subr.mxu0 0.0
        %1420 = vmatpush1.msra.mxu0 0.0
        %1421 = vmatprep.subr.mxu0 0.0
        %1422 = vmatpush1.msra.mxu0 0.0
        %1423 = vmatprep.subr.mxu0 0.0
        %1424 = vmatpush1.msra.mxu0 0.0
        %1425 = vmatprep.subr.mxu0 0.0
        %1426 = vmatpush1.msra.mxu0 0.0
        %1427 = vmatprep.subr.mxu0 0.0
        %1428 = vmatpush1.msra.mxu0 0.0
        %1429 = vmatprep.subr.mxu0 0.0
        %1430 = vmatpush1.msra.mxu0 0.0
        %1431 = vmatprep.subr.mxu0 0.0
        %1432 = vmatpush1.msra.mxu0 0.0
        %1433 = vmatprep.subr.mxu0 0.0
        %1434 = vmatpush1.msra.mxu0 0.0
        %1435 = vmatprep.subr.mxu0 0.0
        %1436 = vmatpush1.msra.mxu0 0.0
        %1437 = vmatprep.subr.mxu0 0.0
        %1438 = vmatpush1.msra.mxu0 0.0
        %1439 = vmatprep.subr.mxu0 0.0
        %1440 = vmatpush1.msra.mxu0 0.0
        %1441 = vmatprep.subr.mxu0 0.0
        %1442 = vmatpush1.msra.mxu0 0.0
        %1443 = vmatprep.subr.mxu0 0.0
        %1444 = vmatpush1.msra.mxu0 0.0
        %1445 = vmatprep.subr.mxu0 0.0
        %1446 = vmatpush1.msra.mxu0 0.0
        %1447 = vmatprep.subr.mxu0 0.0
        %1448 = vmatpush1.msra.mxu0 0.0
        %1449 = vmatprep.subr.mxu0 0.0
        %1450 = vmatpush1.msra.mxu0 0.0
        %1451 = vmatprep.subr.mxu0 0.0
        %1452 = vmatpush1.msra.mxu0 0.0
        %1453 = vmatprep.subr.mxu0 0.0
        %1454 = vmatpush1.msra.mxu0 0.0
        %1455 = vmatprep.subr.mxu0 0.0
        %1456 = vmatpush1.msra.mxu0 0.0
        %1457 = vmatprep.subr.mxu0 0.0
        %1458 = vmatpush1.msra.mxu0 0.0
        %1459 = vmatprep.mubr.f32.mxu0 0.0
        %1460 = vmatmul.mubr.f32.gmra.mrb[0].mxu0 %v1390
        %v1461 = vpop.f32.mrb[0].mxu0
        %v1462 = vadd.f32 0.0, %v1461
        %v1463 = vpop.f32.mrb[0].mxu0
        %1464 = vmatprep.mubr.f32.mxu0 0.0
        %1465 = vmatmul.mubr.f32.gmra.mrb[0].mxu0 %v1393
        %v1466 = vpop.f32.mrb[0].mxu0
        %v1467 = vadd.f32 0.0, %v1466
        %v1468 = vpop.f32.mrb[0].mxu0
        %1469 = vdwg.mxu0
        %v1471 = vsel %vm848, %v1462, 0
        %v1474 = vsel %vm848, %v1467, 0
        %1476 = vmatprep.subr.mxu0 0.0
        %1477 = vmatpush1.msra.mxu0 %v1385
        %1478 = vmatprep.subr.mxu0 0.0
        %1479 = vmatpush1.msra.mxu0 %v1386
        %1480 = vmatprep.subr.mxu0 0.0
        %1481 = vmatpush1.msra.mxu0 %v1387
        %1482 = vmatprep.subr.mxu0 0.0
        %1483 = vmatpush1.msra.mxu0 %v1388
        %1484 = vmatprep.subr.mxu0 0.0
        %1485 = vmatpush1.msra.mxu0 0.0
        %1486 = vmatprep.subr.mxu0 0.0
        %1487 = vmatpush1.msra.mxu0 0.0
        %1488 = vmatprep.subr.mxu0 0.0
        %1489 = vmatpush1.msra.mxu0 0.0
        %1490 = vmatprep.subr.mxu0 0.0
        %1491 = vmatpush1.msra.mxu0 0.0
        %1492 = vmatprep.subr.mxu0 0.0
        %1493 = vmatpush1.msra.mxu0 0.0
        %1494 = vmatprep.subr.mxu0 0.0
        %1495 = vmatpush1.msra.mxu0 0.0
        %1496 = vmatprep.subr.mxu0 0.0
        %1497 = vmatpush1.msra.mxu0 0.0
        %1498 = vmatprep.subr.mxu0 0.0
        %1499 = vmatpush1.msra.mxu0 0.0
        %1500 = vmatprep.subr.mxu0 0.0
        %1501 = vmatpush1.msra.mxu0 0.0
        %1502 = vmatprep.subr.mxu0 0.0
        %1503 = vmatpush1.msra.mxu0 0.0
        %1504 = vmatprep.subr.mxu0 0.0
        %1505 = vmatpush1.msra.mxu0 0.0
        %1506 = vmatprep.subr.mxu0 0.0
        %1507 = vmatpush1.msra.mxu0 0.0
        %1508 = vmatprep.subr.mxu0 0.0
        %1509 = vmatpush1.msra.mxu0 0.0
        %1510 = vmatprep.subr.mxu0 0.0
        %1511 = vmatpush1.msra.mxu0 0.0
        %1512 = vmatprep.subr.mxu0 0.0
        %1513 = vmatpush1.msra.mxu0 0.0
        %1514 = vmatprep.subr.mxu0 0.0
        %1515 = vmatpush1.msra.mxu0 0.0
        %1516 = vmatprep.subr.mxu0 0.0
        %1517 = vmatpush1.msra.mxu0 0.0
        %1518 = vmatprep.subr.mxu0 0.0
        %1519 = vmatpush1.msra.mxu0 0.0
        %1520 = vmatprep.subr.mxu0 0.0
        %1521 = vmatpush1.msra.mxu0 0.0
        %1522 = vmatprep.subr.mxu0 0.0
        %1523 = vmatpush1.msra.mxu0 0.0
        %1524 = vmatprep.subr.mxu0 0.0
        %1525 = vmatpush1.msra.mxu0 0.0
        %1526 = vmatprep.subr.mxu0 0.0
        %1527 = vmatpush1.msra.mxu0 0.0
        %1528 = vmatprep.subr.mxu0 0.0
        %1529 = vmatpush1.msra.mxu0 0.0
        %1530 = vmatprep.subr.mxu0 0.0
        %1531 = vmatpush1.msra.mxu0 0.0
        %1532 = vmatprep.subr.mxu0 0.0
        %1533 = vmatpush1.msra.mxu0 0.0
        %1534 = vmatprep.subr.mxu0 0.0
        %1535 = vmatpush1.msra.mxu0 0.0
        %1536 = vmatprep.subr.mxu0 0.0
        %1537 = vmatpush1.msra.mxu0 0.0
        %1538 = vmatprep.subr.mxu0 0.0
        %1539 = vmatpush1.msra.mxu0 0.0
        %1540 = vmatprep.mubr.f32.mxu0 0.0
        %1541 = vmatmul.mubr.f32.gmra.mrb[0].mxu0 %v1471
        %v1542 = vpop.f32.mrb[0].mxu0
        %v1543 = vadd.f32 0.0, %v1542
        %v1544 = vpop.f32.mrb[0].mxu0
        %1545 = vmatprep.mubr.f32.mxu0 0.0
        %1546 = vmatmul.mubr.f32.gmra.mrb[0].mxu0 %v1474
        %v1547 = vpop.f32.mrb[0].mxu0
        %v1548 = vadd.f32 0.0, %v1547
        %v1549 = vpop.f32.mrb[0].mxu0
        %1550 = vdwg.mxu0
        %v1551 = vmul.f32 %v1543, 5.0
        %v1552 = vmul.f32 %v1548, 5.0
        %v1553 = vadd.f32 %v1373, %v1551
        %v1554 = vadd.f32 %v1374, %v1552
        %s1555 = scalar_lea.vmem %s651, 64 [#allocation11]
        %1556 = vst.msk [vmem:[%s1555] sm:$0xff] %vm848, %v1543
        %1557 = vst.msk [vmem:[%s1555 + $0x8] sm:$0xff] %vm848, %v1548
        %v1558 = vmul.f32 %v1553, 0.06666667
        %v1559 = vmul.f32 %v1554, 0.06666667
        %1560 = vst.msk [vmem:[%s644] sm:$0xff] %vm848, %v1558
        %1561 = vst.msk [vmem:[%s644 + $0x8] sm:$0xff] %vm848, %v1559
        %s1562 = scalar_lea.vmem [#allocation2], 8
        %v1563 = vld [vmem:[%s1562] sm:$0xff]
        %v1564 = vld [vmem:[%s681] sm:$0xff]
        %v1565 = vld [vmem:[%s681 + $0x8] sm:$0xff]
        %v1566 = vld [vmem:[#allocation7] sm:$0xff]
        %v1568 = vsel %vm685, %v1564, 0
        %v1571 = vsel %vm685, %v1565, 0
        %1573 = vmatprep.subr.mxu0 0.0
        %1574 = vmatpush1.msra.mxu0 %v1563
        %1575 = vmatprep.subr.mxu0 0.0
        %1576 = vmatpush1.msra.mxu0 0.0
        %1577 = vmatprep.subr.mxu0 0.0
        %1578 = vmatpush1.msra.mxu0 0.0
        %1579 = vmatprep.subr.mxu0 0.0
        %1580 = vmatpush1.msra.mxu0 0.0
        %1581 = vmatprep.subr.mxu0 0.0
        %1582 = vmatpush1.msra.mxu0 0.0
        %1583 = vmatprep.subr.mxu0 0.0
        %1584 = vmatpush1.msra.mxu0 0.0
        %1585 = vmatprep.subr.mxu0 0.0
        %1586 = vmatpush1.msra.mxu0 0.0
        %1587 = vmatprep.subr.mxu0 0.0
        %1588 = vmatpush1.msra.mxu0 0.0
        %1589 = vmatprep.subr.mxu0 0.0
        %1590 = vmatpush1.msra.mxu0 0.0
        %1591 = vmatprep.subr.mxu0 0.0
        %1592 = vmatpush1.msra.mxu0 0.0
        %1593 = vmatprep.subr.mxu0 0.0
        %1594 = vmatpush1.msra.mxu0 0.0
        %1595 = vmatprep.subr.mxu0 0.0
        %1596 = vmatpush1.msra.mxu0 0.0
        %1597 = vmatprep.subr.mxu0 0.0
        %1598 = vmatpush1.msra.mxu0 0.0
        %1599 = vmatprep.subr.mxu0 0.0
        %1600 = vmatpush1.msra.mxu0 0.0
        %1601 = vmatprep.subr.mxu0 0.0
        %1602 = vmatpush1.msra.mxu0 0.0
        %1603 = vmatprep.subr.mxu0 0.0
        %1604 = vmatpush1.msra.mxu0 0.0
        %1605 = vmatprep.subr.mxu0 0.0
        %1606 = vmatpush1.msra.mxu0 0.0
        %1607 = vmatprep.subr.mxu0 0.0
        %1608 = vmatpush1.msra.mxu0 0.0
        %1609 = vmatprep.subr.mxu0 0.0
        %1610 = vmatpush1.msra.mxu0 0.0
        %1611 = vmatprep.subr.mxu0 0.0
        %1612 = vmatpush1.msra.mxu0 0.0
        %1613 = vmatprep.subr.mxu0 0.0
        %1614 = vmatpush1.msra.mxu0 0.0
        %1615 = vmatprep.subr.mxu0 0.0
        %1616 = vmatpush1.msra.mxu0 0.0
        %1617 = vmatprep.subr.mxu0 0.0
        %1618 = vmatpush1.msra.mxu0 0.0
        %1619 = vmatprep.subr.mxu0 0.0
        %1620 = vmatpush1.msra.mxu0 0.0
        %1621 = vmatprep.subr.mxu0 0.0
        %1622 = vmatpush1.msra.mxu0 0.0
        %1623 = vmatprep.subr.mxu0 0.0
        %1624 = vmatpush1.msra.mxu0 0.0
        %1625 = vmatprep.subr.mxu0 0.0
        %1626 = vmatpush1.msra.mxu0 0.0
        %1627 = vmatprep.subr.mxu0 0.0
        %1628 = vmatpush1.msra.mxu0 0.0
        %1629 = vmatprep.subr.mxu0 0.0
        %1630 = vmatpush1.msra.mxu0 0.0
        %1631 = vmatprep.subr.mxu0 0.0
        %1632 = vmatpush1.msra.mxu0 0.0
        %1633 = vmatprep.subr.mxu0 0.0
        %1634 = vmatpush1.msra.mxu0 0.0
        %1635 = vmatprep.subr.mxu0 0.0
        %1636 = vmatpush1.msra.mxu0 0.0
        %1637 = vmatprep.mubr.f32.mxu0 0.0
        %1638 = vmatmul.mubr.f32.gmra.mrb[0].mxu0 %v1568
        %v1639 = vpop.f32.mrb[0].mxu0
        %v1640 = vadd.f32 0.0, %v1639
        %v1641 = vpop.f32.mrb[0].mxu0
        %1642 = vmatprep.mubr.f32.mxu0 0.0
        %1643 = vmatmul.mubr.f32.gmra.mrb[0].mxu0 %v1571
        %v1644 = vpop.f32.mrb[0].mxu0
        %v1645 = vadd.f32 0.0, %v1644
        %v1646 = vpop.f32.mrb[0].mxu0
        %1647 = vdwg.mxu0
        %v1649 = vsel %vm685, %v1640, 0
        %v1652 = vsel %vm685, %v1645, 0
        %1654 = vmatprep.subr.mxu0 0.0
        %1655 = vmatpush1.msra.mxu0 %v1566
        %1656 = vmatprep.subr.mxu0 0.0
        %1657 = vmatpush1.msra.mxu0 0.0
        %1658 = vmatprep.subr.mxu0 0.0
        %1659 = vmatpush1.msra.mxu0 0.0
        %1660 = vmatprep.subr.mxu0 0.0
        %1661 = vmatpush1.msra.mxu0 0.0
        %1662 = vmatprep.subr.mxu0 0.0
        %1663 = vmatpush1.msra.mxu0 0.0
        %1664 = vmatprep.subr.mxu0 0.0
        %1665 = vmatpush1.msra.mxu0 0.0
        %1666 = vmatprep.subr.mxu0 0.0
        %1667 = vmatpush1.msra.mxu0 0.0
        %1668 = vmatprep.subr.mxu0 0.0
        %1669 = vmatpush1.msra.mxu0 0.0
        %1670 = vmatprep.subr.mxu0 0.0
        %1671 = vmatpush1.msra.mxu0 0.0
        %1672 = vmatprep.subr.mxu0 0.0
        %1673 = vmatpush1.msra.mxu0 0.0
        %1674 = vmatprep.subr.mxu0 0.0
        %1675 = vmatpush1.msra.mxu0 0.0
        %1676 = vmatprep.subr.mxu0 0.0
        %1677 = vmatpush1.msra.mxu0 0.0
        %1678 = vmatprep.subr.mxu0 0.0
        %1679 = vmatpush1.msra.mxu0 0.0
        %1680 = vmatprep.subr.mxu0 0.0
        %1681 = vmatpush1.msra.mxu0 0.0
        %1682 = vmatprep.subr.mxu0 0.0
        %1683 = vmatpush1.msra.mxu0 0.0
        %1684 = vmatprep.subr.mxu0 0.0
        %1685 = vmatpush1.msra.mxu0 0.0
        %1686 = vmatprep.subr.mxu0 0.0
        %1687 = vmatpush1.msra.mxu0 0.0
        %1688 = vmatprep.subr.mxu0 0.0
        %1689 = vmatpush1.msra.mxu0 0.0
        %1690 = vmatprep.subr.mxu0 0.0
        %1691 = vmatpush1.msra.mxu0 0.0
        %1692 = vmatprep.subr.mxu0 0.0
        %1693 = vmatpush1.msra.mxu0 0.0
        %1694 = vmatprep.subr.mxu0 0.0
        %1695 = vmatpush1.msra.mxu0 0.0
        %1696 = vmatprep.subr.mxu0 0.0
        %1697 = vmatpush1.msra.mxu0 0.0
        %1698 = vmatprep.subr.mxu0 0.0
        %1699 = vmatpush1.msra.mxu0 0.0
        %1700 = vmatprep.subr.mxu0 0.0
        %1701 = vmatpush1.msra.mxu0 0.0
        %1702 = vmatprep.subr.mxu0 0.0
        %1703 = vmatpush1.msra.mxu0 0.0
        %1704 = vmatprep.subr.mxu0 0.0
        %1705 = vmatpush1.msra.mxu0 0.0
        %1706 = vmatprep.subr.mxu0 0.0
        %1707 = vmatpush1.msra.mxu0 0.0
        %1708 = vmatprep.subr.mxu0 0.0
        %1709 = vmatpush1.msra.mxu0 0.0
        %1710 = vmatprep.subr.mxu0 0.0
        %1711 = vmatpush1.msra.mxu0 0.0
        %1712 = vmatprep.subr.mxu0 0.0
        %1713 = vmatpush1.msra.mxu0 0.0
        %1714 = vmatprep.subr.mxu0 0.0
        %1715 = vmatpush1.msra.mxu0 0.0
        %1716 = vmatprep.subr.mxu0 0.0
        %1717 = vmatpush1.msra.mxu0 0.0
        %1718 = vmatprep.mubr.f32.mxu0 0.0
        %1719 = vmatmul.mubr.f32.gmra.mrb[0].mxu0 %v1649
        %v1720 = vpop.f32.mrb[0].mxu0
        %v1721 = vadd.f32 0.0, %v1720
        %v1722 = vpop.f32.mrb[0].mxu0
        %1723 = vmatprep.mubr.f32.mxu0 0.0
        %1724 = vmatmul.mubr.f32.gmra.mrb[0].mxu0 %v1652
        %v1725 = vpop.f32.mrb[0].mxu0
        %v1726 = vadd.f32 0.0, %v1725
        %v1727 = vpop.f32.mrb[0].mxu0
        %1728 = vdwg.mxu0
        %s1729 = scalar_lea.vmem %s651, 80 [#allocation11]
        %1730 = vst.msk [vmem:[%s1729] sm:$0xff] %vm848, %v1721
        %1731 = vst.msk [vmem:[%s1729 + $0x8] sm:$0xff] %vm848, %v1726
        %s1732 = scalar_lea.vmem [#allocation5], 8
        %v1733 = vld [vmem:[%s1732] sm:$0xff]
        %v1734 = vld [vmem:[%s852] sm:$0xff]
        %v1735 = vld [vmem:[%s852 + $0x8] sm:$0xff]
        %v1736 = vld [vmem:[#allocation8] sm:$0xff]
        %v1738 = vsel %vm685, %v1734, 0
        %v1741 = vsel %vm685, %v1735, 0
        %1743 = vmatprep.subr.mxu0 0.0
        %1744 = vmatpush1.msra.mxu0 %v1733
        %1745 = vmatprep.subr.mxu0 0.0
        %1746 = vmatpush1.msra.mxu0 0.0
        %1747 = vmatprep.subr.mxu0 0.0
        %1748 = vmatpush1.msra.mxu0 0.0
        %1749 = vmatprep.subr.mxu0 0.0
        %1750 = vmatpush1.msra.mxu0 0.0
        %1751 = vmatprep.subr.mxu0 0.0
        %1752 = vmatpush1.msra.mxu0 0.0
        %1753 = vmatprep.subr.mxu0 0.0
        %1754 = vmatpush1.msra.mxu0 0.0
        %1755 = vmatprep.subr.mxu0 0.0
        %1756 = vmatpush1.msra.mxu0 0.0
        %1757 = vmatprep.subr.mxu0 0.0
        %1758 = vmatpush1.msra.mxu0 0.0
        %1759 = vmatprep.subr.mxu0 0.0
        %1760 = vmatpush1.msra.mxu0 0.0
        %1761 = vmatprep.subr.mxu0 0.0
        %1762 = vmatpush1.msra.mxu0 0.0
        %1763 = vmatprep.subr.mxu0 0.0
        %1764 = vmatpush1.msra.mxu0 0.0
        %1765 = vmatprep.subr.mxu0 0.0
        %1766 = vmatpush1.msra.mxu0 0.0
        %1767 = vmatprep.subr.mxu0 0.0
        %1768 = vmatpush1.msra.mxu0 0.0
        %1769 = vmatprep.subr.mxu0 0.0
        %1770 = vmatpush1.msra.mxu0 0.0
        %1771 = vmatprep.subr.mxu0 0.0
        %1772 = vmatpush1.msra.mxu0 0.0
        %1773 = vmatprep.subr.mxu0 0.0
        %1774 = vmatpush1.msra.mxu0 0.0
        %1775 = vmatprep.subr.mxu0 0.0
        %1776 = vmatpush1.msra.mxu0 0.0
        %1777 = vmatprep.subr.mxu0 0.0
        %1778 = vmatpush1.msra.mxu0 0.0
        %1779 = vmatprep.subr.mxu0 0.0
        %1780 = vmatpush1.msra.mxu0 0.0
        %1781 = vmatprep.subr.mxu0 0.0
        %1782 = vmatpush1.msra.mxu0 0.0
        %1783 = vmatprep.subr.mxu0 0.0
        %1784 = vmatpush1.msra.mxu0 0.0
        %1785 = vmatprep.subr.mxu0 0.0
        %1786 = vmatpush1.msra.mxu0 0.0
        %1787 = vmatprep.subr.mxu0 0.0
        %1788 = vmatpush1.msra.mxu0 0.0
        %1789 = vmatprep.subr.mxu0 0.0
        %1790 = vmatpush1.msra.mxu0 0.0
        %1791 = vmatprep.subr.mxu0 0.0
        %1792 = vmatpush1.msra.mxu0 0.0
        %1793 = vmatprep.subr.mxu0 0.0
        %1794 = vmatpush1.msra.mxu0 0.0
        %1795 = vmatprep.subr.mxu0 0.0
        %1796 = vmatpush1.msra.mxu0 0.0
        %1797 = vmatprep.subr.mxu0 0.0
        %1798 = vmatpush1.msra.mxu0 0.0
        %1799 = vmatprep.subr.mxu0 0.0
        %1800 = vmatpush1.msra.mxu0 0.0
        %1801 = vmatprep.subr.mxu0 0.0
        %1802 = vmatpush1.msra.mxu0 0.0
        %1803 = vmatprep.subr.mxu0 0.0
        %1804 = vmatpush1.msra.mxu0 0.0
        %1805 = vmatprep.subr.mxu0 0.0
        %1806 = vmatpush1.msra.mxu0 0.0
        %1807 = vmatprep.mubr.f32.mxu0 0.0
        %1808 = vmatmul.mubr.f32.gmra.mrb[0].mxu0 %v1738
        %v1809 = vpop.f32.mrb[0].mxu0
        %v1810 = vadd.f32 0.0, %v1809
        %v1811 = vpop.f32.mrb[0].mxu0
        %1812 = vmatprep.mubr.f32.mxu0 0.0
        %1813 = vmatmul.mubr.f32.gmra.mrb[0].mxu0 %v1741
        %v1814 = vpop.f32.mrb[0].mxu0
        %v1815 = vadd.f32 0.0, %v1814
        %v1816 = vpop.f32.mrb[0].mxu0
        %1817 = vdwg.mxu0
        %v1819 = vsel %vm685, %v1810, 0
        %v1822 = vsel %vm685, %v1815, 0
        %1824 = vmatprep.subr.mxu0 0.0
        %1825 = vmatpush1.msra.mxu0 %v1736
        %1826 = vmatprep.subr.mxu0 0.0
        %1827 = vmatpush1.msra.mxu0 0.0
        %1828 = vmatprep.subr.mxu0 0.0
        %1829 = vmatpush1.msra.mxu0 0.0
        %1830 = vmatprep.subr.mxu0 0.0
        %1831 = vmatpush1.msra.mxu0 0.0
        %1832 = vmatprep.subr.mxu0 0.0
        %1833 = vmatpush1.msra.mxu0 0.0
        %1834 = vmatprep.subr.mxu0 0.0
        %1835 = vmatpush1.msra.mxu0 0.0
        %1836 = vmatprep.subr.mxu0 0.0
        %1837 = vmatpush1.msra.mxu0 0.0
        %1838 = vmatprep.subr.mxu0 0.0
        %1839 = vmatpush1.msra.mxu0 0.0
        %1840 = vmatprep.subr.mxu0 0.0
        %1841 = vmatpush1.msra.mxu0 0.0
        %1842 = vmatprep.subr.mxu0 0.0
        %1843 = vmatpush1.msra.mxu0 0.0
        %1844 = vmatprep.subr.mxu0 0.0
        %1845 = vmatpush1.msra.mxu0 0.0
        %1846 = vmatprep.subr.mxu0 0.0
        %1847 = vmatpush1.msra.mxu0 0.0
        %1848 = vmatprep.subr.mxu0 0.0
        %1849 = vmatpush1.msra.mxu0 0.0
        %1850 = vmatprep.subr.mxu0 0.0
        %1851 = vmatpush1.msra.mxu0 0.0
        %1852 = vmatprep.subr.mxu0 0.0
        %1853 = vmatpush1.msra.mxu0 0.0
        %1854 = vmatprep.subr.mxu0 0.0
        %1855 = vmatpush1.msra.mxu0 0.0
        %1856 = vmatprep.subr.mxu0 0.0
        %1857 = vmatpush1.msra.mxu0 0.0
        %1858 = vmatprep.subr.mxu0 0.0
        %1859 = vmatpush1.msra.mxu0 0.0
        %1860 = vmatprep.subr.mxu0 0.0
        %1861 = vmatpush1.msra.mxu0 0.0
        %1862 = vmatprep.subr.mxu0 0.0
        %1863 = vmatpush1.msra.mxu0 0.0
        %1864 = vmatprep.subr.mxu0 0.0
        %1865 = vmatpush1.msra.mxu0 0.0
        %1866 = vmatprep.subr.mxu0 0.0
        %1867 = vmatpush1.msra.mxu0 0.0
        %1868 = vmatprep.subr.mxu0 0.0
        %1869 = vmatpush1.msra.mxu0 0.0
        %1870 = vmatprep.subr.mxu0 0.0
        %1871 = vmatpush1.msra.mxu0 0.0
        %1872 = vmatprep.subr.mxu0 0.0
        %1873 = vmatpush1.msra.mxu0 0.0
        %1874 = vmatprep.subr.mxu0 0.0
        %1875 = vmatpush1.msra.mxu0 0.0
        %1876 = vmatprep.subr.mxu0 0.0
        %1877 = vmatpush1.msra.mxu0 0.0
        %1878 = vmatprep.subr.mxu0 0.0
        %1879 = vmatpush1.msra.mxu0 0.0
        %1880 = vmatprep.subr.mxu0 0.0
        %1881 = vmatpush1.msra.mxu0 0.0
        %1882 = vmatprep.subr.mxu0 0.0
        %1883 = vmatpush1.msra.mxu0 0.0
        %1884 = vmatprep.subr.mxu0 0.0
        %1885 = vmatpush1.msra.mxu0 0.0
        %1886 = vmatprep.subr.mxu0 0.0
        %1887 = vmatpush1.msra.mxu0 0.0
        %1888 = vmatprep.mubr.f32.mxu0 0.0
        %1889 = vmatmul.mubr.f32.gmra.mrb[0].mxu0 %v1819
        %v1890 = vpop.f32.mrb[0].mxu0
        %v1891 = vadd.f32 0.0, %v1890
        %v1892 = vpop.f32.mrb[0].mxu0
        %1893 = vmatprep.mubr.f32.mxu0 0.0
        %1894 = vmatmul.mubr.f32.gmra.mrb[0].mxu0 %v1822
        %v1895 = vpop.f32.mrb[0].mxu0
        %v1896 = vadd.f32 0.0, %v1895
        %v1897 = vpop.f32.mrb[0].mxu0
        %1898 = vdwg.mxu0
        %v1899 = vmul.f32 %v1891, 2.0
        %v1900 = vmul.f32 %v1896, 2.0
        %v1901 = vadd.f32 %v1721, %v1899
        %v1902 = vadd.f32 %v1726, %v1900
        %s1903 = scalar_lea.vmem %s651, 96 [#allocation11]
        %1904 = vst.msk [vmem:[%s1903] sm:$0xff] %vm848, %v1891
        %1905 = vst.msk [vmem:[%s1903 + $0x8] sm:$0xff] %vm848, %v1896
        %s1906 = scalar_lea.vmem %s659, 16
        %v1907 = vld [vmem:[%s1906] sm:$0xff]
        %v1908 = vld [vmem:[%s1906 + $0x8] sm:$0xff]
        %v1909 = vld [vmem:[%s1027] sm:$0xff]
        %v1910 = vld [vmem:[%s1027 + $0x8] sm:$0xff]
        %v1911 = vld [vmem:[%s12] sm:$0xff]
        %v1912 = vld [vmem:[%s12 + $0x8] sm:$0xff]
        %v1914 = vsel %vm1032, %v1909, 0
        %v1917 = vsel %vm1032, %v1910, 0
        %1919 = vmatprep.subr.mxu0 0.0
        %1920 = vmatpush1.msra.mxu0 %v1907
        %1921 = vmatprep.subr.mxu0 0.0
        %1922 = vmatpush1.msra.mxu0 %v1908
        %1923 = vmatprep.subr.mxu0 0.0
        %1924 = vmatpush1.msra.mxu0 0.0
        %1925 = vmatprep.subr.mxu0 0.0
        %1926 = vmatpush1.msra.mxu0 0.0
        %1927 = vmatprep.subr.mxu0 0.0
        %1928 = vmatpush1.msra.mxu0 0.0
        %1929 = vmatprep.subr.mxu0 0.0
        %1930 = vmatpush1.msra.mxu0 0.0
        %1931 = vmatprep.subr.mxu0 0.0
        %1932 = vmatpush1.msra.mxu0 0.0
        %1933 = vmatprep.subr.mxu0 0.0
        %1934 = vmatpush1.msra.mxu0 0.0
        %1935 = vmatprep.subr.mxu0 0.0
        %1936 = vmatpush1.msra.mxu0 0.0
        %1937 = vmatprep.subr.mxu0 0.0
        %1938 = vmatpush1.msra.mxu0 0.0
        %1939 = vmatprep.subr.mxu0 0.0
        %1940 = vmatpush1.msra.mxu0 0.0
        %1941 = vmatprep.subr.mxu0 0.0
        %1942 = vmatpush1.msra.mxu0 0.0
        %1943 = vmatprep.subr.mxu0 0.0
        %1944 = vmatpush1.msra.mxu0 0.0
        %1945 = vmatprep.subr.mxu0 0.0
        %1946 = vmatpush1.msra.mxu0 0.0
        %1947 = vmatprep.subr.mxu0 0.0
        %1948 = vmatpush1.msra.mxu0 0.0
        %1949 = vmatprep.subr.mxu0 0.0
        %1950 = vmatpush1.msra.mxu0 0.0
        %1951 = vmatprep.subr.mxu0 0.0
        %1952 = vmatpush1.msra.mxu0 0.0
        %1953 = vmatprep.subr.mxu0 0.0
        %1954 = vmatpush1.msra.mxu0 0.0
        %1955 = vmatprep.subr.mxu0 0.0
        %1956 = vmatpush1.msra.mxu0 0.0
        %1957 = vmatprep.subr.mxu0 0.0
        %1958 = vmatpush1.msra.mxu0 0.0
        %1959 = vmatprep.subr.mxu0 0.0
        %1960 = vmatpush1.msra.mxu0 0.0
        %1961 = vmatprep.subr.mxu0 0.0
        %1962 = vmatpush1.msra.mxu0 0.0
        %1963 = vmatprep.subr.mxu0 0.0
        %1964 = vmatpush1.msra.mxu0 0.0
        %1965 = vmatprep.subr.mxu0 0.0
        %1966 = vmatpush1.msra.mxu0 0.0
        %1967 = vmatprep.subr.mxu0 0.0
        %1968 = vmatpush1.msra.mxu0 0.0
        %1969 = vmatprep.subr.mxu0 0.0
        %1970 = vmatpush1.msra.mxu0 0.0
        %1971 = vmatprep.subr.mxu0 0.0
        %1972 = vmatpush1.msra.mxu0 0.0
        %1973 = vmatprep.subr.mxu0 0.0
        %1974 = vmatpush1.msra.mxu0 0.0
        %1975 = vmatprep.subr.mxu0 0.0
        %1976 = vmatpush1.msra.mxu0 0.0
        %1977 = vmatprep.subr.mxu0 0.0
        %1978 = vmatpush1.msra.mxu0 0.0
        %1979 = vmatprep.subr.mxu0 0.0
        %1980 = vmatpush1.msra.mxu0 0.0
        %1981 = vmatprep.subr.mxu0 0.0
        %1982 = vmatpush1.msra.mxu0 0.0
        %1983 = vmatprep.mubr.f32.mxu0 0.0
        %1984 = vmatmul.mubr.f32.gmra.mrb[0].mxu0 %v1914
        %v1985 = vpop.f32.mrb[0].mxu0
        %v1986 = vadd.f32 0.0, %v1985
        %v1987 = vpop.f32.mrb[0].mxu0
        %1988 = vmatprep.mubr.f32.mxu0 0.0
        %1989 = vmatmul.mubr.f32.gmra.mrb[0].mxu0 %v1917
        %v1990 = vpop.f32.mrb[0].mxu0
        %v1991 = vadd.f32 0.0, %v1990
        %v1992 = vpop.f32.mrb[0].mxu0
        %1993 = vdwg.mxu0
        %v1995 = vsel %vm1032, %v1986, 0
        %v1998 = vsel %vm1032, %v1991, 0
        %2000 = vmatprep.subr.mxu0 0.0
        %2001 = vmatpush1.msra.mxu0 %v1911
        %2002 = vmatprep.subr.mxu0 0.0
        %2003 = vmatpush1.msra.mxu0 %v1912
        %2004 = vmatprep.subr.mxu0 0.0
        %2005 = vmatpush1.msra.mxu0 0.0
        %2006 = vmatprep.subr.mxu0 0.0
        %2007 = vmatpush1.msra.mxu0 0.0
        %2008 = vmatprep.subr.mxu0 0.0
        %2009 = vmatpush1.msra.mxu0 0.0
        %2010 = vmatprep.subr.mxu0 0.0
        %2011 = vmatpush1.msra.mxu0 0.0
        %2012 = vmatprep.subr.mxu0 0.0
        %2013 = vmatpush1.msra.mxu0 0.0
        %2014 = vmatprep.subr.mxu0 0.0
        %2015 = vmatpush1.msra.mxu0 0.0
        %2016 = vmatprep.subr.mxu0 0.0
        %2017 = vmatpush1.msra.mxu0 0.0
        %2018 = vmatprep.subr.mxu0 0.0
        %2019 = vmatpush1.msra.mxu0 0.0
        %2020 = vmatprep.subr.mxu0 0.0
        %2021 = vmatpush1.msra.mxu0 0.0
        %2022 = vmatprep.subr.mxu0 0.0
        %2023 = vmatpush1.msra.mxu0 0.0
        %2024 = vmatprep.subr.mxu0 0.0
        %2025 = vmatpush1.msra.mxu0 0.0
        %2026 = vmatprep.subr.mxu0 0.0
        %2027 = vmatpush1.msra.mxu0 0.0
        %2028 = vmatprep.subr.mxu0 0.0
        %2029 = vmatpush1.msra.mxu0 0.0
        %2030 = vmatprep.subr.mxu0 0.0
        %2031 = vmatpush1.msra.mxu0 0.0
        %2032 = vmatprep.subr.mxu0 0.0
        %2033 = vmatpush1.msra.mxu0 0.0
        %2034 = vmatprep.subr.mxu0 0.0
        %2035 = vmatpush1.msra.mxu0 0.0
        %2036 = vmatprep.subr.mxu0 0.0
        %2037 = vmatpush1.msra.mxu0 0.0
        %2038 = vmatprep.subr.mxu0 0.0
        %2039 = vmatpush1.msra.mxu0 0.0
        %2040 = vmatprep.subr.mxu0 0.0
        %2041 = vmatpush1.msra.mxu0 0.0
        %2042 = vmatprep.subr.mxu0 0.0
        %2043 = vmatpush1.msra.mxu0 0.0
        %2044 = vmatprep.subr.mxu0 0.0
        %2045 = vmatpush1.msra.mxu0 0.0
        %2046 = vmatprep.subr.mxu0 0.0
        %2047 = vmatpush1.msra.mxu0 0.0
        %2048 = vmatprep.subr.mxu0 0.0
        %2049 = vmatpush1.msra.mxu0 0.0
        %2050 = vmatprep.subr.mxu0 0.0
        %2051 = vmatpush1.msra.mxu0 0.0
        %2052 = vmatprep.subr.mxu0 0.0
        %2053 = vmatpush1.msra.mxu0 0.0
        %2054 = vmatprep.subr.mxu0 0.0
        %2055 = vmatpush1.msra.mxu0 0.0
        %2056 = vmatprep.subr.mxu0 0.0
        %2057 = vmatpush1.msra.mxu0 0.0
        %2058 = vmatprep.subr.mxu0 0.0
        %2059 = vmatpush1.msra.mxu0 0.0
        %2060 = vmatprep.subr.mxu0 0.0
        %2061 = vmatpush1.msra.mxu0 0.0
        %2062 = vmatprep.subr.mxu0 0.0
        %2063 = vmatpush1.msra.mxu0 0.0
        %2064 = vmatprep.mubr.f32.mxu0 0.0
        %2065 = vmatmul.mubr.f32.gmra.mrb[0].mxu0 %v1995
        %v2066 = vpop.f32.mrb[0].mxu0
        %v2067 = vadd.f32 0.0, %v2066
        %v2068 = vpop.f32.mrb[0].mxu0
        %2069 = vmatprep.mubr.f32.mxu0 0.0
        %2070 = vmatmul.mubr.f32.gmra.mrb[0].mxu0 %v1998
        %v2071 = vpop.f32.mrb[0].mxu0
        %v2072 = vadd.f32 0.0, %v2071
        %v2073 = vpop.f32.mrb[0].mxu0
        %2074 = vdwg.mxu0
        %v2075 = vmul.f32 %v2067, 3.0
        %v2076 = vmul.f32 %v2072, 3.0
        %v2077 = vadd.f32 %v1901, %v2075
        %v2078 = vadd.f32 %v1902, %v2076
        %s2079 = scalar_lea.vmem %s651, 112 [#allocation11]
        %2080 = vst.msk [vmem:[%s2079] sm:$0xff] %vm848, %v2067
        %2081 = vst.msk [vmem:[%s2079 + $0x8] sm:$0xff] %vm848, %v2072
        %s2082 = scalar_lea.vmem %s666, 16
        %v2083 = vld [vmem:[%s2082] sm:$0xff]
        %v2084 = vld [vmem:[%s2082 + $0x8] sm:$0xff]
        %v2085 = vld [vmem:[%s1204] sm:$0xff]
        %v2086 = vld [vmem:[%s1204 + $0x8] sm:$0xff]
        %v2087 = vld [vmem:[%s13] sm:$0xff]
        %v2088 = vld [vmem:[%s13 + $0x8] sm:$0xff]
        %v2090 = vsel %vm1032, %v2085, 0
        %v2093 = vsel %vm1032, %v2086, 0
        %2095 = vmatprep.subr.mxu0 0.0
        %2096 = vmatpush1.msra.mxu0 %v2083
        %2097 = vmatprep.subr.mxu0 0.0
        %2098 = vmatpush1.msra.mxu0 %v2084
        %2099 = vmatprep.subr.mxu0 0.0
        %2100 = vmatpush1.msra.mxu0 0.0
        %2101 = vmatprep.subr.mxu0 0.0
        %2102 = vmatpush1.msra.mxu0 0.0
        %2103 = vmatprep.subr.mxu0 0.0
        %2104 = vmatpush1.msra.mxu0 0.0
        %2105 = vmatprep.subr.mxu0 0.0
        %2106 = vmatpush1.msra.mxu0 0.0
        %2107 = vmatprep.subr.mxu0 0.0
        %2108 = vmatpush1.msra.mxu0 0.0
        %2109 = vmatprep.subr.mxu0 0.0
        %2110 = vmatpush1.msra.mxu0 0.0
        %2111 = vmatprep.subr.mxu0 0.0
        %2112 = vmatpush1.msra.mxu0 0.0
        %2113 = vmatprep.subr.mxu0 0.0
        %2114 = vmatpush1.msra.mxu0 0.0
        %2115 = vmatprep.subr.mxu0 0.0
        %2116 = vmatpush1.msra.mxu0 0.0
        %2117 = vmatprep.subr.mxu0 0.0
        %2118 = vmatpush1.msra.mxu0 0.0
        %2119 = vmatprep.subr.mxu0 0.0
        %2120 = vmatpush1.msra.mxu0 0.0
        %2121 = vmatprep.subr.mxu0 0.0
        %2122 = vmatpush1.msra.mxu0 0.0
        %2123 = vmatprep.subr.mxu0 0.0
        %2124 = vmatpush1.msra.mxu0 0.0
        %2125 = vmatprep.subr.mxu0 0.0
        %2126 = vmatpush1.msra.mxu0 0.0
        %2127 = vmatprep.subr.mxu0 0.0
        %2128 = vmatpush1.msra.mxu0 0.0
        %2129 = vmatprep.subr.mxu0 0.0
        %2130 = vmatpush1.msra.mxu0 0.0
        %2131 = vmatprep.subr.mxu0 0.0
        %2132 = vmatpush1.msra.mxu0 0.0
        %2133 = vmatprep.subr.mxu0 0.0
        %2134 = vmatpush1.msra.mxu0 0.0
        %2135 = vmatprep.subr.mxu0 0.0
        %2136 = vmatpush1.msra.mxu0 0.0
        %2137 = vmatprep.subr.mxu0 0.0
        %2138 = vmatpush1.msra.mxu0 0.0
        %2139 = vmatprep.subr.mxu0 0.0
        %2140 = vmatpush1.msra.mxu0 0.0
        %2141 = vmatprep.subr.mxu0 0.0
        %2142 = vmatpush1.msra.mxu0 0.0
        %2143 = vmatprep.subr.mxu0 0.0
        %2144 = vmatpush1.msra.mxu0 0.0
        %2145 = vmatprep.subr.mxu0 0.0
        %2146 = vmatpush1.msra.mxu0 0.0
        %2147 = vmatprep.subr.mxu0 0.0
        %2148 = vmatpush1.msra.mxu0 0.0
        %2149 = vmatprep.subr.mxu0 0.0
        %2150 = vmatpush1.msra.mxu0 0.0
        %2151 = vmatprep.subr.mxu0 0.0
        %2152 = vmatpush1.msra.mxu0 0.0
        %2153 = vmatprep.subr.mxu0 0.0
        %2154 = vmatpush1.msra.mxu0 0.0
        %2155 = vmatprep.subr.mxu0 0.0
        %2156 = vmatpush1.msra.mxu0 0.0
        %2157 = vmatprep.subr.mxu0 0.0
        %2158 = vmatpush1.msra.mxu0 0.0
        %2159 = vmatprep.mubr.f32.mxu0 0.0
        %2160 = vmatmul.mubr.f32.gmra.mrb[0].mxu0 %v2090
        %v2161 = vpop.f32.mrb[0].mxu0
        %v2162 = vadd.f32 0.0, %v2161
        %v2163 = vpop.f32.mrb[0].mxu0
        %2164 = vmatprep.mubr.f32.mxu0 0.0
        %2165 = vmatmul.mubr.f32.gmra.mrb[0].mxu0 %v2093
        %v2166 = vpop.f32.mrb[0].mxu0
        %v2167 = vadd.f32 0.0, %v2166
        %v2168 = vpop.f32.mrb[0].mxu0
        %2169 = vdwg.mxu0
        %v2171 = vsel %vm1032, %v2162, 0
        %v2174 = vsel %vm1032, %v2167, 0
        %2176 = vmatprep.subr.mxu0 0.0
        %2177 = vmatpush1.msra.mxu0 %v2087
        %2178 = vmatprep.subr.mxu0 0.0
        %2179 = vmatpush1.msra.mxu0 %v2088
        %2180 = vmatprep.subr.mxu0 0.0
        %2181 = vmatpush1.msra.mxu0 0.0
        %2182 = vmatprep.subr.mxu0 0.0
        %2183 = vmatpush1.msra.mxu0 0.0
        %2184 = vmatprep.subr.mxu0 0.0
        %2185 = vmatpush1.msra.mxu0 0.0
        %2186 = vmatprep.subr.mxu0 0.0
        %2187 = vmatpush1.msra.mxu0 0.0
        %2188 = vmatprep.subr.mxu0 0.0
        %2189 = vmatpush1.msra.mxu0 0.0
        %2190 = vmatprep.subr.mxu0 0.0
        %2191 = vmatpush1.msra.mxu0 0.0
        %2192 = vmatprep.subr.mxu0 0.0
        %2193 = vmatpush1.msra.mxu0 0.0
        %2194 = vmatprep.subr.mxu0 0.0
        %2195 = vmatpush1.msra.mxu0 0.0
        %2196 = vmatprep.subr.mxu0 0.0
        %2197 = vmatpush1.msra.mxu0 0.0
        %2198 = vmatprep.subr.mxu0 0.0
        %2199 = vmatpush1.msra.mxu0 0.0
        %2200 = vmatprep.subr.mxu0 0.0
        %2201 = vmatpush1.msra.mxu0 0.0
        %2202 = vmatprep.subr.mxu0 0.0
        %2203 = vmatpush1.msra.mxu0 0.0
        %2204 = vmatprep.subr.mxu0 0.0
        %2205 = vmatpush1.msra.mxu0 0.0
        %2206 = vmatprep.subr.mxu0 0.0
        %2207 = vmatpush1.msra.mxu0 0.0
        %2208 = vmatprep.subr.mxu0 0.0
        %2209 = vmatpush1.msra.mxu0 0.0
        %2210 = vmatprep.subr.mxu0 0.0
        %2211 = vmatpush1.msra.mxu0 0.0
        %2212 = vmatprep.subr.mxu0 0.0
        %2213 = vmatpush1.msra.mxu0 0.0
        %2214 = vmatprep.subr.mxu0 0.0
        %2215 = vmatpush1.msra.mxu0 0.0
        %2216 = vmatprep.subr.mxu0 0.0
        %2217 = vmatpush1.msra.mxu0 0.0
        %2218 = vmatprep.subr.mxu0 0.0
        %2219 = vmatpush1.msra.mxu0 0.0
        %2220 = vmatprep.subr.mxu0 0.0
        %2221 = vmatpush1.msra.mxu0 0.0
        %2222 = vmatprep.subr.mxu0 0.0
        %2223 = vmatpush1.msra.mxu0 0.0
        %2224 = vmatprep.subr.mxu0 0.0
        %2225 = vmatpush1.msra.mxu0 0.0
        %2226 = vmatprep.subr.mxu0 0.0
        %2227 = vmatpush1.msra.mxu0 0.0
        %2228 = vmatprep.subr.mxu0 0.0
        %2229 = vmatpush1.msra.mxu0 0.0
        %2230 = vmatprep.subr.mxu0 0.0
        %2231 = vmatpush1.msra.mxu0 0.0
        %2232 = vmatprep.subr.mxu0 0.0
        %2233 = vmatpush1.msra.mxu0 0.0
        %2234 = vmatprep.subr.mxu0 0.0
        %2235 = vmatpush1.msra.mxu0 0.0
        %2236 = vmatprep.subr.mxu0 0.0
        %2237 = vmatpush1.msra.mxu0 0.0
        %2238 = vmatprep.subr.mxu0 0.0
        %2239 = vmatpush1.msra.mxu0 0.0
        %2240 = vmatprep.mubr.f32.mxu0 0.0
        %2241 = vmatmul.mubr.f32.gmra.mrb[0].mxu0 %v2171
        %v2242 = vpop.f32.mrb[0].mxu0
        %v2243 = vadd.f32 0.0, %v2242
        %v2244 = vpop.f32.mrb[0].mxu0
        %2245 = vmatprep.mubr.f32.mxu0 0.0
        %2246 = vmatmul.mubr.f32.gmra.mrb[0].mxu0 %v2174
        %v2247 = vpop.f32.mrb[0].mxu0
        %v2248 = vadd.f32 0.0, %v2247
        %v2249 = vpop.f32.mrb[0].mxu0
        %2250 = vdwg.mxu0
        %v2251 = vmul.f32 %v2243, 4.0
        %v2252 = vmul.f32 %v2248, 4.0
        %v2253 = vadd.f32 %v2077, %v2251
        %v2254 = vadd.f32 %v2078, %v2252
        %s2255 = scalar_lea.vmem %s651, 128 [#allocation11]
        %2256 = vst.msk [vmem:[%s2255] sm:$0xff] %vm848, %v2243
        %2257 = vst.msk [vmem:[%s2255 + $0x8] sm:$0xff] %vm848, %v2248
        %s2258 = scalar_lea.vmem %s673, 32
        %v2259 = vld [vmem:[%s2258] sm:$0xff]
        %v2260 = vld [vmem:[%s2258 + $0x8] sm:$0xff]
        %v2261 = vld [vmem:[%s2258 + $0x10] sm:$0xff]
        %v2262 = vld [vmem:[%s2258 + $0x18] sm:$0xff]
        %v2263 = vld [vmem:[%s1382] sm:$0xff]
        %v2264 = vld [vmem:[%s1382 + $0x8] sm:$0xff]
        %v2265 = vld [vmem:[%s14] sm:$0xff]
        %v2266 = vld [vmem:[%s14 + $0x8] sm:$0xff]
        %v2267 = vld [vmem:[%s14 + $0x10] sm:$0xff]
        %v2268 = vld [vmem:[%s14 + $0x18] sm:$0xff]
        %v2270 = vsel %vm848, %v2263, 0
        %v2273 = vsel %vm848, %v2264, 0
        %2275 = vmatprep.subr.mxu0 0.0
        %2276 = vmatpush1.msra.mxu0 %v2259
        %2277 = vmatprep.subr.mxu0 0.0
        %2278 = vmatpush1.msra.mxu0 %v2260
        %2279 = vmatprep.subr.mxu0 0.0
        %2280 = vmatpush1.msra.mxu0 %v2261
        %2281 = vmatprep.subr.mxu0 0.0
        %2282 = vmatpush1.msra.mxu0 %v2262
        %2283 = vmatprep.subr.mxu0 0.0
        %2284 = vmatpush1.msra.mxu0 0.0
        %2285 = vmatprep.subr.mxu0 0.0
        %2286 = vmatpush1.msra.mxu0 0.0
        %2287 = vmatprep.subr.mxu0 0.0
        %2288 = vmatpush1.msra.mxu0 0.0
        %2289 = vmatprep.subr.mxu0 0.0
        %2290 = vmatpush1.msra.mxu0 0.0
        %2291 = vmatprep.subr.mxu0 0.0
        %2292 = vmatpush1.msra.mxu0 0.0
        %2293 = vmatprep.subr.mxu0 0.0
        %2294 = vmatpush1.msra.mxu0 0.0
        %2295 = vmatprep.subr.mxu0 0.0
        %2296 = vmatpush1.msra.mxu0 0.0
        %2297 = vmatprep.subr.mxu0 0.0
        %2298 = vmatpush1.msra.mxu0 0.0
        %2299 = vmatprep.subr.mxu0 0.0
        %2300 = vmatpush1.msra.mxu0 0.0
        %2301 = vmatprep.subr.mxu0 0.0
        %2302 = vmatpush1.msra.mxu0 0.0
        %2303 = vmatprep.subr.mxu0 0.0
        %2304 = vmatpush1.msra.mxu0 0.0
        %2305 = vmatprep.subr.mxu0 0.0
        %2306 = vmatpush1.msra.mxu0 0.0
        %2307 = vmatprep.subr.mxu0 0.0
        %2308 = vmatpush1.msra.mxu0 0.0
        %2309 = vmatprep.subr.mxu0 0.0
        %2310 = vmatpush1.msra.mxu0 0.0
        %2311 = vmatprep.subr.mxu0 0.0
        %2312 = vmatpush1.msra.mxu0 0.0
        %2313 = vmatprep.subr.mxu0 0.0
        %2314 = vmatpush1.msra.mxu0 0.0
        %2315 = vmatprep.subr.mxu0 0.0
        %2316 = vmatpush1.msra.mxu0 0.0
        %2317 = vmatprep.subr.mxu0 0.0
        %2318 = vmatpush1.msra.mxu0 0.0
        %2319 = vmatprep.subr.mxu0 0.0
        %2320 = vmatpush1.msra.mxu0 0.0
        %2321 = vmatprep.subr.mxu0 0.0
        %2322 = vmatpush1.msra.mxu0 0.0
        %2323 = vmatprep.subr.mxu0 0.0
        %2324 = vmatpush1.msra.mxu0 0.0
        %2325 = vmatprep.subr.mxu0 0.0
        %2326 = vmatpush1.msra.mxu0 0.0
        %2327 = vmatprep.subr.mxu0 0.0
        %2328 = vmatpush1.msra.mxu0 0.0
        %2329 = vmatprep.subr.mxu0 0.0
        %2330 = vmatpush1.msra.mxu0 0.0
        %2331 = vmatprep.subr.mxu0 0.0
        %2332 = vmatpush1.msra.mxu0 0.0
        %2333 = vmatprep.subr.mxu0 0.0
        %2334 = vmatpush1.msra.mxu0 0.0
        %2335 = vmatprep.subr.mxu0 0.0
        %2336 = vmatpush1.msra.mxu0 0.0
        %2337 = vmatprep.subr.mxu0 0.0
        %2338 = vmatpush1.msra.mxu0 0.0
        %2339 = vmatprep.mubr.f32.mxu0 0.0
        %2340 = vmatmul.mubr.f32.gmra.mrb[0].mxu0 %v2270
        %v2341 = vpop.f32.mrb[0].mxu0
        %v2342 = vadd.f32 0.0, %v2341
        %v2343 = vpop.f32.mrb[0].mxu0
        %2344 = vmatprep.mubr.f32.mxu0 0.0
        %2345 = vmatmul.mubr.f32.gmra.mrb[0].mxu0 %v2273
        %v2346 = vpop.f32.mrb[0].mxu0
        %v2347 = vadd.f32 0.0, %v2346
        %v2348 = vpop.f32.mrb[0].mxu0
        %2349 = vdwg.mxu0
        %v2351 = vsel %vm848, %v2342, 0
        %v2354 = vsel %vm848, %v2347, 0
        %2356 = vmatprep.subr.mxu0 0.0
        %2357 = vmatpush1.msra.mxu0 %v2265
        %2358 = vmatprep.subr.mxu0 0.0
        %2359 = vmatpush1.msra.mxu0 %v2266
        %2360 = vmatprep.subr.mxu0 0.0
        %2361 = vmatpush1.msra.mxu0 %v2267
        %2362 = vmatprep.subr.mxu0 0.0
        %2363 = vmatpush1.msra.mxu0 %v2268
        %2364 = vmatprep.subr.mxu0 0.0
        %2365 = vmatpush1.msra.mxu0 0.0
        %2366 = vmatprep.subr.mxu0 0.0
        %2367 = vmatpush1.msra.mxu0 0.0
        %2368 = vmatprep.subr.mxu0 0.0
        %2369 = vmatpush1.msra.mxu0 0.0
        %2370 = vmatprep.subr.mxu0 0.0
        %2371 = vmatpush1.msra.mxu0 0.0
        %2372 = vmatprep.subr.mxu0 0.0
        %2373 = vmatpush1.msra.mxu0 0.0
        %2374 = vmatprep.subr.mxu0 0.0
        %2375 = vmatpush1.msra.mxu0 0.0
        %2376 = vmatprep.subr.mxu0 0.0
        %2377 = vmatpush1.msra.mxu0 0.0
        %2378 = vmatprep.subr.mxu0 0.0
        %2379 = vmatpush1.msra.mxu0 0.0
        %2380 = vmatprep.subr.mxu0 0.0
        %2381 = vmatpush1.msra.mxu0 0.0
        %2382 = vmatprep.subr.mxu0 0.0
        %2383 = vmatpush1.msra.mxu0 0.0
        %2384 = vmatprep.subr.mxu0 0.0
        %2385 = vmatpush1.msra.mxu0 0.0
        %2386 = vmatprep.subr.mxu0 0.0
        %2387 = vmatpush1.msra.mxu0 0.0
        %2388 = vmatprep.subr.mxu0 0.0
        %2389 = vmatpush1.msra.mxu0 0.0
        %2390 = vmatprep.subr.mxu0 0.0
        %2391 = vmatpush1.msra.mxu0 0.0
        %2392 = vmatprep.subr.mxu0 0.0
        %2393 = vmatpush1.msra.mxu0 0.0
        %2394 = vmatprep.subr.mxu0 0.0
        %2395 = vmatpush1.msra.mxu0 0.0
        %2396 = vmatprep.subr.mxu0 0.0
        %2397 = vmatpush1.msra.mxu0 0.0
        %2398 = vmatprep.subr.mxu0 0.0
        %2399 = vmatpush1.msra.mxu0 0.0
        %2400 = vmatprep.subr.mxu0 0.0
        %2401 = vmatpush1.msra.mxu0 0.0
        %2402 = vmatprep.subr.mxu0 0.0
        %2403 = vmatpush1.msra.mxu0 0.0
        %2404 = vmatprep.subr.mxu0 0.0
        %2405 = vmatpush1.msra.mxu0 0.0
        %2406 = vmatprep.subr.mxu0 0.0
        %2407 = vmatpush1.msra.mxu0 0.0
        %2408 = vmatprep.subr.mxu0 0.0
        %2409 = vmatpush1.msra.mxu0 0.0
        %2410 = vmatprep.subr.mxu0 0.0
        %2411 = vmatpush1.msra.mxu0 0.0
        %2412 = vmatprep.subr.mxu0 0.0
        %2413 = vmatpush1.msra.mxu0 0.0
        %2414 = vmatprep.subr.mxu0 0.0
        %2415 = vmatpush1.msra.mxu0 0.0
        %2416 = vmatprep.subr.mxu0 0.0
        %2417 = vmatpush1.msra.mxu0 0.0
        %2418 = vmatprep.subr.mxu0 0.0
        %2419 = vmatpush1.msra.mxu0 0.0
        %2420 = vmatprep.mubr.f32.mxu0 0.0
        %2421 = vmatmul.mubr.f32.gmra.mrb[0].mxu0 %v2351
        %v2422 = vpop.f32.mrb[0].mxu0
        %v2423 = vadd.f32 0.0, %v2422
        %v2424 = vpop.f32.mrb[0].mxu0
        %2425 = vmatprep.mubr.f32.mxu0 0.0
        %2426 = vmatmul.mubr.f32.gmra.mrb[0].mxu0 %v2354
        %v2427 = vpop.f32.mrb[0].mxu0
        %v2428 = vadd.f32 0.0, %v2427
        %v2429 = vpop.f32.mrb[0].mxu0
        %2430 = vdwg.mxu0
        %v2431 = vmul.f32 %v2423, 5.0
        %v2432 = vmul.f32 %v2428, 5.0
        %v2433 = vadd.f32 %v2253, %v2431
        %v2434 = vadd.f32 %v2254, %v2432
        %s2435 = scalar_lea.vmem %s651, 144 [#allocation11]
        %2436 = vst.msk [vmem:[%s2435] sm:$0xff] %vm848, %v2423
        %2437 = vst.msk [vmem:[%s2435 + $0x8] sm:$0xff] %vm848, %v2428
        %v2438 = vmul.f32 %v2433, 0.06666667
        %v2439 = vmul.f32 %v2434, 0.06666667
        %s2440 = scalar_lea.vmem %s644, 16 [#allocation10]
        %2441 = vst.msk [vmem:[%s2440] sm:$0xff] %vm848, %v2438
        %2442 = vst.msk [vmem:[%s2440 + $0x8] sm:$0xff] %vm848, %v2439
        %s2443 = sand.u32 %s399, 1
        %s2444 = scalar_lea.sflag [#allocation4], %s2443
        %s2445 = sand.u32 %s399, 1
        %s2446 = smul.addr %s2445, 32
        %s2447 = scalar_lea.vmem [#allocation10], %s2446
        %s2448 = sand.u32 %s427, 1
        %s2449 = scalar_lea.sflag [#allocation12], %s2448
        %s2450 = sand.u32 %s427, 1
        %s2451 = smul.addr %s2450, 160
        %s2452 = scalar_lea.vmem [#allocation11], %s2451
        // Predicated region
        $region97: #{tpu_custom_call.1} parent=79 // pred_check
          %p2453 = pneg %p409
        $region98: #{tpu_custom_call.1} parent=79 // pred_check_branch
          %2455 = sbr.rel (%p2453) target = $region100
        $region99: #{tpu_custom_call.1} parent=79 // pred_region
          #allocation14 [shape = 'u32[6]{0}', space=smem, size = 0x18, scoped, tag = 'DMA stride descriptor']
          %s2456 = smul.u32 2, %s41
          %s2457 = smul.u32 2, %s42
          %s2459 = ssub.s32 512, 512
          %2460 = vsyncadd %s2444, %s2459
          %s2461 = smul.addr %s2456, 4
          %s2462 = sadd.s32 %s2457, %s2461
          %s2463 = smul.addr %s2462, 128
          %s2464 = scalar_lea.hbm %s15, %s2463
          %s2466 = sshll.u32 1, 14
          %s2467 = sxor.u32 4294967295, %s2466
          %s2470 = sshll.u32 7, 18
          %s2471 = sxor.u32 4294967295, %s2470
          %s2472 = sand.u32 0, %s2471
          %s2474 = sor.u32 %s2472, 0
          %s2476 = sshll.u32 3, 24
          %s2477 = sxor.u32 4294967295, %s2476
          %s2478 = sand.u32 %s2474, %s2477
          %s2480 = sor.u32 %s2478, 0
          %s2481 = sshll.u32 %s2447, 4
          %s2482 = int_to_ptr.vmem [resolvable:$true] %s2481
          %2488 = sst [smem:[#allocation14]] 256
          %s2489 = scalar_lea.smem [#allocation14], 1
          %2490 = sst [smem:[%s2489]] 512
          %s2491 = scalar_lea.smem [#allocation14], 2
          %2492 = sst [smem:[%s2491]] 2
          %s2493 = scalar_lea.smem [#allocation14], 3
          %2494 = sst [smem:[%s2493]] 128
          %s2495 = scalar_lea.smem [#allocation14], 4
          %2496 = sst [smem:[%s2495]] 128
          %s2497 = scalar_lea.smem [#allocation14], 5
          %2498 = sst [smem:[%s2497]] 8
          %2500 = dma.general %s2482, 512, %s2464, %s2444, [#allocation13], [#allocation14], %s2480, 0
        $region100: #{tpu_custom_call.1} parent=79 // pred_fallthru
          _
        // Predicated region
        $region101: #{tpu_custom_call.1} parent=79 // pred_check
          %p2501 = pneg %p437
        $region102: #{tpu_custom_call.1} parent=79 // pred_check_branch
          %2503 = sbr.rel (%p2501) target = $region104
        $region103: #{tpu_custom_call.1} parent=79 // pred_region
          #allocation16 [shape = 'u32[6]{0}', space=smem, size = 0x18, scoped, tag = 'DMA stride descriptor']
          %s2504 = smul.u32 2, %s41
          %s2505 = smul.u32 2, %s42
          %s2507 = ssub.s32 2560, 2560
          %2508 = vsyncadd %s2449, %s2507
          %s2509 = smul.addr %s2504, 20
          %s2510 = sadd.s32 %s2505, %s2509
          %s2511 = smul.addr %s2510, 128
          %s2512 = scalar_lea.hbm %s16, %s2511
          %s2514 = sshll.u32 1, 14
          %s2515 = sxor.u32 4294967295, %s2514
          %s2518 = sshll.u32 7, 18
          %s2519 = sxor.u32 4294967295, %s2518
          %s2520 = sand.u32 0, %s2519
          %s2522 = sor.u32 %s2520, 0
          %s2524 = sshll.u32 3, 24
          %s2525 = sxor.u32 4294967295, %s2524
          %s2526 = sand.u32 %s2522, %s2525
          %s2528 = sor.u32 %s2526, 0
          %s2529 = sshll.u32 %s2452, 4
          %s2530 = int_to_ptr.vmem [resolvable:$true] %s2529
          %2536 = sst [smem:[#allocation16]] 256
          %s2537 = scalar_lea.smem [#allocation16], 1
          %2538 = sst [smem:[%s2537]] 512
          %s2539 = scalar_lea.smem [#allocation16], 2
          %2540 = sst [smem:[%s2539]] 2
          %s2541 = scalar_lea.smem [#allocation16], 3
          %2542 = sst [smem:[%s2541]] 128
          %s2543 = scalar_lea.smem [#allocation16], 4
          %2544 = sst [smem:[%s2543]] 128
          %s2545 = scalar_lea.smem [#allocation16], 5
          %2546 = sst [smem:[%s2545]] 8
          %2548 = dma.general %s2530, 2560, %s2512, %s2449, [#allocation15], [#allocation16], %s2528, 0
        $region104: #{tpu_custom_call.1} parent=79 // pred_fallthru
          _
      $region80: #{tpu_custom_call.1} parent=5 // pred_fallthru
        _
      %p2549 = scmp.le.s32.totalorder 2, %s32
      // Predicated region
      $region105: #{tpu_custom_call.1} parent=5 // pred_check
        %p2550 = pneg %p2549
      $region106: #{tpu_custom_call.1} parent=5 // pred_check_branch
        %2552 = sbr.rel (%p2550) target = $region108
      $region107: #{tpu_custom_call.1} parent=5 // pred_region
        %s2553 = ssub.s32 %s32, 2
        // Predicated region
        $region109: #{tpu_custom_call.1} parent=107 // pred_check
          %p2554 = pneg %p415
        $region110: #{tpu_custom_call.1} parent=107 // pred_check_branch
          %2556 = sbr.rel (%p2554) target = $region112
        $region111: #{tpu_custom_call.1} parent=107 // pred_region
          %s2557 = sand.u32 %s400, 1
          %s2558 = scalar_lea.sflag [#allocation4], %s2557
          %s2559 = sand.u32 %s400, 1
          %s2560 = smul.addr %s2559, 32
          %s2561 = scalar_lea.vmem [#allocation10], %s2560
          %2562 = dma.done %s2558, 512
        $region112: #{tpu_custom_call.1} parent=107 // pred_fallthru
          _
        // Predicated region
        $region113: #{tpu_custom_call.1} parent=107 // pred_check
          %p2563 = pneg %p443
        $region114: #{tpu_custom_call.1} parent=107 // pred_check_branch
          %2565 = sbr.rel (%p2563) target = $region116
        $region115: #{tpu_custom_call.1} parent=107 // pred_region
          %s2566 = sand.u32 %s428, 1
          %s2567 = scalar_lea.sflag [#allocation12], %s2566
          %s2568 = sand.u32 %s428, 1
          %s2569 = smul.addr %s2568, 160
          %s2570 = scalar_lea.vmem [#allocation11], %s2569
          %2571 = dma.done %s2567, 2560
        $region116: #{tpu_custom_call.1} parent=107 // pred_fallthru
          _
      $region108: #{tpu_custom_call.1} parent=5 // pred_fallthru
        _
    $region6: #{tpu_custom_call.1} parent=1 // loop_footer
      %s36 = sadd.s32 1, %s32
    $region7: #{tpu_custom_call.1} parent=1 // loop_footer_branch
      %31 = sbr.rel target = $region3
    $region8: #{tpu_custom_call.1} parent=1 // loop_exit
      _
    %2572 = vsyncpa [#allocation3], 1
    %s2573 = scalar_lea.sflag [#allocation3], 1
    %2574 = vsyncpa %s2573, 1
    %2575 = vsyncpa [#allocation6], 1
    %2576 = vsyncpa [#allocation9], 1
    %2577 = vsyncpa [#allocation4], 1
    %s2578 = scalar_lea.sflag [#allocation4], 1
    %2579 = vsyncpa %s2578, 1
    %2580 = vsyncpa [#allocation12], 1
    %s2581 = scalar_lea.sflag [#allocation12], 1
    %2582 = vsyncpa %s2581, 1

</llo_original>
